<compile_context>
chip_gen: v7x
topology: tpu7x:2x2x1
jax: 0.10.0
libtpu: 0.0.40
codegen_flags: <defaults>
</compile_context>

<pallas_src>
import jax
import jax.numpy as jnp
from jax import lax
from jax.experimental import pallas as pl
from jax.experimental.pallas import tpu as pltpu

# Logical (PyTorch) dims.
D_IN, D_H1, D_H2, D_OUT = 875, 527, 330, 206
# Lane-padded dims (multiples of 128).
P_IN, P_H1, P_H2, P_OUT = 896, 640, 384, 256
BN_EPS = 1e-5


def _mlp_kernel(x_ref,
                w1_ref, b1_ref, g1_ref, be1_ref,
                w2_ref, b2_ref, g2_ref, be2_ref,
                w3_ref, b3_ref,
                out_ref):
    x = x_ref[...]                                   # (B, P_IN) f32
    inv_b = jnp.float32(1.0 / x.shape[0])            # static batch size

    # ---- Linear 1 + ReLU (bf16 MXU, f32 accumulate) ----
    h1 = jnp.dot(x.astype(jnp.bfloat16), w1_ref[...],
                 preferred_element_type=jnp.float32) + b1_ref[...]
    h1 = jnp.maximum(h1, 0.0)

    # ---- BatchNorm1d(527), training-mode batch stats, fused variance ----
    s1 = jnp.sum(h1, axis=0, keepdims=True)
    q1 = jnp.sum(h1 * h1, axis=0, keepdims=True)
    m1 = s1 * inv_b
    v1 = jnp.maximum(q1 * inv_b - m1 * m1, 0.0)
    h1 = g1_ref[...] * (h1 - m1) * lax.rsqrt(v1 + BN_EPS) + be1_ref[...]

    # ---- Linear 2 + ReLU ----
    h2 = jnp.dot(h1.astype(jnp.bfloat16), w2_ref[...],
                 preferred_element_type=jnp.float32) + b2_ref[...]
    h2 = jnp.maximum(h2, 0.0)

    # ---- BatchNorm1d(330), training-mode batch stats, fused variance ----
    s2 = jnp.sum(h2, axis=0, keepdims=True)
    q2 = jnp.sum(h2 * h2, axis=0, keepdims=True)
    m2 = s2 * inv_b
    v2 = jnp.maximum(q2 * inv_b - m2 * m2, 0.0)
    h2 = g2_ref[...] * (h2 - m2) * lax.rsqrt(v2 + BN_EPS) + be2_ref[...]

    # ---- Linear 3 + Softmax over the real 206 lanes ----
    logits = jnp.dot(h2.astype(jnp.bfloat16), w3_ref[...],
                     preferred_element_type=jnp.float32) + b3_ref[...]
    col = lax.broadcasted_iota(jnp.int32, logits.shape, 1)
    logits = jnp.where(col < D_OUT, logits, jnp.float32(-1e30))
    logits = logits - jnp.max(logits, axis=1, keepdims=True)
    e = jnp.exp(logits)
    denom = jnp.sum(e, axis=1, keepdims=True)
    out_ref[...] = e * pl.reciprocal(denom, approx=True)


def mlp_forward(x, padded_params):
    """x: (B, 875) f32. padded_params: lane-padded, bf16 weights. Returns (B, 206)."""
    (w1, b1, g1, be1, w2, b2, g2, be2, w3, b3) = padded_params
    B = x.shape[0]
    x_p = jnp.pad(x.astype(jnp.float32), ((0, 0), (0, P_IN - D_IN)))

    n_in = 11
    vmem_spec = pl.BlockSpec(memory_space=pltpu.MemorySpace.VMEM)

    flops = 2 * B * (D_IN * D_H1 + D_H1 * D_H2 + D_H2 * D_OUT)
    bytes_accessed = (
        x_p.size * 4
        + (w1.size + w2.size + w3.size) * 2            # bf16 weights
        + (b1.size + g1.size + be1.size + b2.size + g2.size + be2.size + b3.size) * 4
        + B * P_OUT * 4
    )
    transcendentals = B * (D_H1 + D_H2 + P_OUT + 1)     # rsqrt + exp + recip

    out_p = pl.pallas_call(
        _mlp_kernel,
        out_shape=jax.ShapeDtypeStruct((B, P_OUT), jnp.float32),
        in_specs=[vmem_spec] * n_in,
        out_specs=vmem_spec,
        compiler_params=pltpu.CompilerParams(vmem_limit_bytes=32 * 1024 * 1024),
        cost_estimate=pl.CostEstimate(
            flops=flops,
            transcendentals=transcendentals,
            bytes_accessed=bytes_accessed,
        ),
    )(x_p, w1, b1, g1, be1, w2, b2, g2, be2, w3, b3)

    return out_p[:, :D_OUT]


def init_params(key):
    """Parameter init mirroring the PyTorch __init__ (logical, unpadded, f32).

    Linear weights: kaiming_normal_ (std = sqrt(2 / fan_in)), stored transposed
    as (in, out). Linear biases: U(-1/sqrt(fan_in), 1/sqrt(fan_in)) (PyTorch
    default). BatchNorm: gamma=1, beta=0. Vectors stored as (1, N).
    """
    keys = jax.random.split(key, 6)

    def kaiming(k, fan_in, fan_out):
        std = (2.0 / fan_in) ** 0.5
        return jax.random.normal(k, (fan_in, fan_out), jnp.float32) * std

    def bias(k, fan_in, fan_out):
        bound = 1.0 / (fan_in ** 0.5)
        return jax.random.uniform(k, (1, fan_out), jnp.float32, -bound, bound)

    w1 = kaiming(keys[0], D_IN, D_H1)
    b1 = bias(keys[1], D_IN, D_H1)
    w2 = kaiming(keys[2], D_H1, D_H2)
    b2 = bias(keys[3], D_H1, D_H2)
    w3 = kaiming(keys[4], D_H2, D_OUT)
    b3 = bias(keys[5], D_H2, D_OUT)

    g1 = jnp.ones((1, D_H1), jnp.float32)
    be1 = jnp.zeros((1, D_H1), jnp.float32)
    g2 = jnp.ones((1, D_H2), jnp.float32)
    be2 = jnp.zeros((1, D_H2), jnp.float32)

    return (w1, b1, g1, be1, w2, b2, g2, be2, w3, b3)


def prepare_params(params):
    """Zero-pad every param to lane-aligned shapes; cast matmul weights to bf16."""
    (w1, b1, g1, be1, w2, b2, g2, be2, w3, b3) = params

    def pad2(a, rows, cols):
        return jnp.pad(a, ((0, rows - a.shape[0]), (0, cols - a.shape[1])))

    w1p = pad2(w1, P_IN, P_H1).astype(jnp.bfloat16)
    w2p = pad2(w2, P_H1, P_H2).astype(jnp.bfloat16)
    w3p = pad2(w3, P_H2, P_OUT).astype(jnp.bfloat16)

    b1p = pad2(b1, 1, P_H1)
    g1p = pad2(g1, 1, P_H1)      # padded gamma lanes = 0 -> padded channels stay 0
    be1p = pad2(be1, 1, P_H1)
    b2p = pad2(b2, 1, P_H2)
    g2p = pad2(g2, 1, P_H2)
    be2p = pad2(be2, 1, P_H2)
    b3p = pad2(b3, 1, P_OUT)

    return (w1p, b1p, g1p, be1p, w2p, b2p, g2p, be2p, w3p, b3p)


if __name__ == "__main__":
    key = jax.random.PRNGKey(0)
    k_x, k_p = jax.random.split(key)

    B = 8  # batch size (>1 required for training-mode BatchNorm)
    x = jax.random.normal(k_x, (B, D_IN), jnp.float32)
    params = init_params(k_p)
    padded_params = prepare_params(params)

    out = mlp_forward(x, padded_params)
    out = jax.block_until_ready(out)

    assert out.shape == (B, D_OUT)
    # Softmax rows sum to ~1 (approx-reciprocal + bf16 matmuls -> relaxed tol).
    assert bool(jnp.all(jnp.abs(jnp.sum(out, axis=1) - 1.0) < 5e-3))
    # No probability leaked into padded lanes.
    assert bool(jnp.all(out >= 0.0))

    print("KERNEL_OK")
</pallas_src>

<mosaic_0001>
module attributes {stable_mosaic.version = 11 : i64} {
  func.func @_mlp_kernel(%arg0: memref<8x896xf32, #tpu.memory_space<vmem>>, %arg1: memref<896x640xbf16, #tpu.memory_space<vmem>>, %arg2: memref<1x640xf32, #tpu.memory_space<vmem>>, %arg3: memref<1x640xf32, #tpu.memory_space<vmem>>, %arg4: memref<1x640xf32, #tpu.memory_space<vmem>>, %arg5: memref<640x384xbf16, #tpu.memory_space<vmem>>, %arg6: memref<1x384xf32, #tpu.memory_space<vmem>>, %arg7: memref<1x384xf32, #tpu.memory_space<vmem>>, %arg8: memref<1x384xf32, #tpu.memory_space<vmem>>, %arg9: memref<384x256xbf16, #tpu.memory_space<vmem>>, %arg10: memref<1x256xf32, #tpu.memory_space<vmem>>, %arg11: memref<8x256xf32, #tpu.memory_space<vmem>>) attributes {dimension_semantics = [], scalar_prefetch = 0 : i64, scratch_operands = 0 : i64, tpu.core_type = #tpu.core_type<tc>} {
    %c0 = arith.constant 0 : index
    %c0_0 = arith.constant 0 : index
    %0 = vector.load %arg0[%c0, %c0_0] : memref<8x896xf32, #tpu.memory_space<vmem>>, vector<8x896xf32>
    %1 = arith.truncf %0 : vector<8x896xf32> to vector<8x896xbf16>
    %c0_1 = arith.constant 0 : index
    %c0_2 = arith.constant 0 : index
    %2 = vector.load %arg1[%c0_1, %c0_2] : memref<896x640xbf16, #tpu.memory_space<vmem>>, vector<896x640xbf16>
    %cst = arith.constant dense<0.000000e+00> : vector<8x640xf32>
    %3 = tpu.matmul %1, %2, %cst {dimension_numbers = #tpu.dot_dimension_numbers<[1], [0], [0], [1], [0, 0, 1, 1], [], []>} : vector<8x896xbf16>, vector<896x640xbf16>, vector<8x640xf32> -> vector<8x640xf32>
    %c0_3 = arith.constant 0 : index
    %c0_4 = arith.constant 0 : index
    %4 = vector.load %arg2[%c0_3, %c0_4] : memref<1x640xf32, #tpu.memory_space<vmem>>, vector<1x640xf32>
    %5 = vector.broadcast %4 : vector<1x640xf32> to vector<8x640xf32>
    %6 = arith.addf %3, %5 : vector<8x640xf32>
    %cst_5 = arith.constant 0.000000e+00 : f32
    %7 = vector.broadcast %cst_5 : f32 to vector<8x640xf32>
    %8 = arith.maximumf %6, %7 : vector<8x640xf32>
    %cst_6 = arith.constant dense<0.000000e+00> : vector<640xf32>
    %9 = vector.multi_reduction <add>, %8, %cst_6 [0] : vector<8x640xf32> to vector<640xf32>
    %10 = vector.shape_cast %9 : vector<640xf32> to vector<1x640xf32>
    %11 = arith.mulf %8, %8 : vector<8x640xf32>
    %cst_7 = arith.constant dense<0.000000e+00> : vector<640xf32>
    %12 = vector.multi_reduction <add>, %11, %cst_7 [0] : vector<8x640xf32> to vector<640xf32>
    %13 = vector.shape_cast %12 : vector<640xf32> to vector<1x640xf32>
    %cst_8 = arith.constant 1.250000e-01 : f32
    %14 = vector.broadcast %cst_8 : f32 to vector<1x640xf32>
    %15 = arith.mulf %10, %14 : vector<1x640xf32>
    %cst_9 = arith.constant 1.250000e-01 : f32
    %16 = vector.broadcast %cst_9 : f32 to vector<1x640xf32>
    %17 = arith.mulf %13, %16 : vector<1x640xf32>
    %18 = arith.mulf %15, %15 : vector<1x640xf32>
    %19 = arith.subf %17, %18 : vector<1x640xf32>
    %cst_10 = arith.constant 0.000000e+00 : f32
    %20 = vector.broadcast %cst_10 : f32 to vector<1x640xf32>
    %21 = arith.maximumf %19, %20 : vector<1x640xf32>
    %c0_11 = arith.constant 0 : index
    %c0_12 = arith.constant 0 : index
    %22 = vector.load %arg3[%c0_11, %c0_12] : memref<1x640xf32, #tpu.memory_space<vmem>>, vector<1x640xf32>
    %23 = vector.broadcast %15 : vector<1x640xf32> to vector<8x640xf32>
    %24 = arith.subf %8, %23 : vector<8x640xf32>
    %25 = vector.broadcast %22 : vector<1x640xf32> to vector<8x640xf32>
    %26 = arith.mulf %25, %24 : vector<8x640xf32>
    %cst_13 = arith.constant 9.99999974E-6 : f32
    %27 = vector.broadcast %cst_13 : f32 to vector<1x640xf32>
    %28 = arith.addf %21, %27 : vector<1x640xf32>
    %29 = math.rsqrt %28 : vector<1x640xf32>
    %30 = vector.broadcast %29 : vector<1x640xf32> to vector<8x640xf32>
    %31 = arith.mulf %26, %30 : vector<8x640xf32>
    %c0_14 = arith.constant 0 : index
    %c0_15 = arith.constant 0 : index
    %32 = vector.load %arg4[%c0_14, %c0_15] : memref<1x640xf32, #tpu.memory_space<vmem>>, vector<1x640xf32>
    %33 = vector.broadcast %32 : vector<1x640xf32> to vector<8x640xf32>
    %34 = arith.addf %31, %33 : vector<8x640xf32>
    %35 = arith.truncf %34 : vector<8x640xf32> to vector<8x640xbf16>
    %c0_16 = arith.constant 0 : index
    %c0_17 = arith.constant 0 : index
    %36 = vector.load %arg5[%c0_16, %c0_17] : memref<640x384xbf16, #tpu.memory_space<vmem>>, vector<640x384xbf16>
    %cst_18 = arith.constant dense<0.000000e+00> : vector<8x384xf32>
    %37 = tpu.matmul %35, %36, %cst_18 {dimension_numbers = #tpu.dot_dimension_numbers<[1], [0], [0], [1], [0, 0, 1, 1], [], []>} : vector<8x640xbf16>, vector<640x384xbf16>, vector<8x384xf32> -> vector<8x384xf32>
    %c0_19 = arith.constant 0 : index
    %c0_20 = arith.constant 0 : index
    %38 = vector.load %arg6[%c0_19, %c0_20] : memref<1x384xf32, #tpu.memory_space<vmem>>, vector<1x384xf32>
    %39 = vector.broadcast %38 : vector<1x384xf32> to vector<8x384xf32>
    %40 = arith.addf %37, %39 : vector<8x384xf32>
    %cst_21 = arith.constant 0.000000e+00 : f32
    %41 = vector.broadcast %cst_21 : f32 to vector<8x384xf32>
    %42 = arith.maximumf %40, %41 : vector<8x384xf32>
    %cst_22 = arith.constant dense<0.000000e+00> : vector<384xf32>
    %43 = vector.multi_reduction <add>, %42, %cst_22 [0] : vector<8x384xf32> to vector<384xf32>
    %44 = vector.shape_cast %43 : vector<384xf32> to vector<1x384xf32>
    %45 = arith.mulf %42, %42 : vector<8x384xf32>
    %cst_23 = arith.constant dense<0.000000e+00> : vector<384xf32>
    %46 = vector.multi_reduction <add>, %45, %cst_23 [0] : vector<8x384xf32> to vector<384xf32>
    %47 = vector.shape_cast %46 : vector<384xf32> to vector<1x384xf32>
    %cst_24 = arith.constant 1.250000e-01 : f32
    %48 = vector.broadcast %cst_24 : f32 to vector<1x384xf32>
    %49 = arith.mulf %44, %48 : vector<1x384xf32>
    %cst_25 = arith.constant 1.250000e-01 : f32
    %50 = vector.broadcast %cst_25 : f32 to vector<1x384xf32>
    %51 = arith.mulf %47, %50 : vector<1x384xf32>
    %52 = arith.mulf %49, %49 : vector<1x384xf32>
    %53 = arith.subf %51, %52 : vector<1x384xf32>
    %cst_26 = arith.constant 0.000000e+00 : f32
    %54 = vector.broadcast %cst_26 : f32 to vector<1x384xf32>
    %55 = arith.maximumf %53, %54 : vector<1x384xf32>
    %c0_27 = arith.constant 0 : index
    %c0_28 = arith.constant 0 : index
    %56 = vector.load %arg7[%c0_27, %c0_28] : memref<1x384xf32, #tpu.memory_space<vmem>>, vector<1x384xf32>
    %57 = vector.broadcast %49 : vector<1x384xf32> to vector<8x384xf32>
    %58 = arith.subf %42, %57 : vector<8x384xf32>
    %59 = vector.broadcast %56 : vector<1x384xf32> to vector<8x384xf32>
    %60 = arith.mulf %59, %58 : vector<8x384xf32>
    %cst_29 = arith.constant 9.99999974E-6 : f32
    %61 = vector.broadcast %cst_29 : f32 to vector<1x384xf32>
    %62 = arith.addf %55, %61 : vector<1x384xf32>
    %63 = math.rsqrt %62 : vector<1x384xf32>
    %64 = vector.broadcast %63 : vector<1x384xf32> to vector<8x384xf32>
    %65 = arith.mulf %60, %64 : vector<8x384xf32>
    %c0_30 = arith.constant 0 : index
    %c0_31 = arith.constant 0 : index
    %66 = vector.load %arg8[%c0_30, %c0_31] : memref<1x384xf32, #tpu.memory_space<vmem>>, vector<1x384xf32>
    %67 = vector.broadcast %66 : vector<1x384xf32> to vector<8x384xf32>
    %68 = arith.addf %65, %67 : vector<8x384xf32>
    %69 = arith.truncf %68 : vector<8x384xf32> to vector<8x384xbf16>
    %c0_32 = arith.constant 0 : index
    %c0_33 = arith.constant 0 : index
    %70 = vector.load %arg9[%c0_32, %c0_33] : memref<384x256xbf16, #tpu.memory_space<vmem>>, vector<384x256xbf16>
    %cst_34 = arith.constant dense<0.000000e+00> : vector<8x256xf32>
    %71 = tpu.matmul %69, %70, %cst_34 {dimension_numbers = #tpu.dot_dimension_numbers<[1], [0], [0], [1], [0, 0, 1, 1], [], []>} : vector<8x384xbf16>, vector<384x256xbf16>, vector<8x256xf32> -> vector<8x256xf32>
    %c0_35 = arith.constant 0 : index
    %c0_36 = arith.constant 0 : index
    %72 = vector.load %arg10[%c0_35, %c0_36] : memref<1x256xf32, #tpu.memory_space<vmem>>, vector<1x256xf32>
    %73 = vector.broadcast %72 : vector<1x256xf32> to vector<8x256xf32>
    %74 = arith.addf %71, %73 : vector<8x256xf32>
    %75 = tpu.iota {dimensions = array<i32: 1>} : vector<8x256xi32>
    %c206_i32 = arith.constant 206 : i32
    %76 = vector.broadcast %c206_i32 : i32 to vector<8x256xi32>
    %77 = arith.cmpi slt, %75, %76 : vector<8x256xi32>
    %cst_37 = arith.constant -1.000000e+30 : f32
    %78 = vector.broadcast %cst_37 : f32 to vector<8x256xf32>
    %79 = arith.select %77, %74, %78 : vector<8x256xi1>, vector<8x256xf32>
    %cst_38 = arith.constant dense<0xFF800000> : vector<8xf32>
    %80 = vector.multi_reduction <maximumf>, %79, %cst_38 [1] : vector<8x256xf32> to vector<8xf32>
    %81 = vector.shape_cast %80 : vector<8xf32> to vector<8x1xf32>
    %82 = vector.broadcast %81 : vector<8x1xf32> to vector<8x256xf32>
    %83 = arith.subf %79, %82 : vector<8x256xf32>
    %84 = math.exp %83 : vector<8x256xf32>
    %cst_39 = arith.constant dense<0.000000e+00> : vector<8xf32>
    %85 = vector.multi_reduction <add>, %84, %cst_39 [1] : vector<8x256xf32> to vector<8xf32>
    %86 = vector.shape_cast %85 : vector<8xf32> to vector<8x1xf32>
    %87 = tpu.reciprocal %86 {approx = true} : vector<8x1xf32> -> vector<8x1xf32>
    %88 = vector.broadcast %87 : vector<8x1xf32> to vector<8x256xf32>
    %89 = arith.mulf %84, %88 : vector<8x256xf32>
    %c0_40 = arith.constant 0 : index
    %c0_41 = arith.constant 0 : index
    %90 = vector.load %arg11[%c0_40, %c0_41] : memref<8x256xf32, #tpu.memory_space<vmem>>, vector<8x256xf32>
    tpu.vector_store %arg11[%c0_40, %c0_41], %89 {strides = array<i32>} : memref<8x256xf32, #tpu.memory_space<vmem>>, vector<8x256xf32>,
    return
  }
}

</mosaic_0001>

<llo_original>
// kernel: tpu_custom_call.1
$region0: #{tpu_custom_call.1}
  #allocation0 [shape = 'u32[]', space=smem, size = 0x4, offset = 0x4, fixed_abs, tag = 'smem constant byte address 0x4 - core index']
  #allocation1 [shape = 'u32[144,128]{1,0:T(1,128)}', space=vmem, size = 0x12000, scoped, tag = 'internal scratch']
  %s0 = inlined_call_operand.hbm [shape: f32[8,896], index: 0, kind: input, shape index: {}]
  %s1 = inlined_call_operand.hbm [shape: bf16[896,640], index: 1, kind: input, shape index: {}]
  %s2 = inlined_call_operand.hbm [shape: f32[1,640], index: 2, kind: input, shape index: {}]
  %s3 = inlined_call_operand.hbm [shape: f32[1,640], index: 3, kind: input, shape index: {}]
  %s4 = inlined_call_operand.hbm [shape: f32[1,640], index: 4, kind: input, shape index: {}]
  %s5 = inlined_call_operand.hbm [shape: bf16[640,384], index: 5, kind: input, shape index: {}]
  %s6 = inlined_call_operand.hbm [shape: f32[1,384], index: 6, kind: input, shape index: {}]
  %s7 = inlined_call_operand.hbm [shape: f32[1,384], index: 7, kind: input, shape index: {}]
  %s8 = inlined_call_operand.hbm [shape: f32[1,384], index: 8, kind: input, shape index: {}]
  %s9 = inlined_call_operand.hbm [shape: bf16[384,256], index: 9, kind: input, shape index: {}]
  %s10 = inlined_call_operand.hbm [shape: f32[1,256], index: 10, kind: input, shape index: {}]
  %s11 = inlined_call_operand.hbm [shape: f32[8,256], index: 11, kind: output, shape index: {}]
  %s12 = sld [smem:[#allocation0]]
  $region98: #{tpu_custom_call.1} parent=0
    _
  %s14 = ssub.s32 1, %s12
  %s15 = scalar_select 0, %s14, %s12
  $region1: #{tpu_custom_call.1} parent=0
    #allocation2 [shape = 'u8[28672]{0}', space=vmem, size = 0x7000, scoped, tag = 'input window, operand 0, single buffered']
    #allocation3 [shape = 's32[1]{0}', space=sflag, size = 0x4, scoped, tag = 'scoped memory for tpu_custom_call.1']
    #allocation4 [shape = 's32[1]{0}', space=sflag, size = 0x4, scoped, tag = 'scoped memory for tpu_custom_call.1']
    #allocation5 [shape = 'u8[1146880]{0}', space=vmem, size = 0x118000, scoped, tag = 'input window, operand 1, single buffered']
    #allocation6 [shape = 's32[1]{0}', space=sflag, size = 0x4, scoped, tag = 'scoped memory for tpu_custom_call.1']
    #allocation7 [shape = 'u8[2560]{0}', space=vmem, size = 0xc00, scoped, tag = 'input window, operand 2, single buffered']
    #allocation8 [shape = 'u8[2560]{0}', space=vmem, size = 0xc00, scoped, tag = 'input window, operand 3, single buffered']
    #allocation9 [shape = 's32[1]{0}', space=sflag, size = 0x4, scoped, tag = 'scoped memory for tpu_custom_call.1']
    #allocation10 [shape = 'u8[2560]{0}', space=vmem, size = 0xc00, scoped, tag = 'input window, operand 4, single buffered']
    #allocation11 [shape = 'u8[491520]{0}', space=vmem, size = 0x78000, scoped, tag = 'input window, operand 5, single buffered']
    #allocation12 [shape = 's32[1]{0}', space=sflag, size = 0x4, scoped, tag = 'scoped memory for tpu_custom_call.1']
    #allocation13 [shape = 'u8[1536]{0}', space=vmem, size = 0x800, scoped, tag = 'input window, operand 6, single buffered']
    #allocation14 [shape = 'u8[1536]{0}', space=vmem, size = 0x800, scoped, tag = 'input window, operand 7, single buffered']
    #allocation15 [shape = 's32[1]{0}', space=sflag, size = 0x4, scoped, tag = 'scoped memory for tpu_custom_call.1']
    #allocation16 [shape = 'u8[1536]{0}', space=vmem, size = 0x800, scoped, tag = 'input window, operand 8, single buffered']
    #allocation17 [shape = 'u8[196608]{0}', space=vmem, size = 0x30000, scoped, tag = 'input window, operand 9, single buffered']
    #allocation18 [shape = 's32[1]{0}', space=sflag, size = 0x4, scoped, tag = 'scoped memory for tpu_custom_call.1']
    #allocation19 [shape = 'u8[1024]{0}', space=vmem, size = 0x400, scoped, tag = 'input window, operand 10, single buffered']
    #allocation20 [shape = 'u8[8192]{0}', space=vmem, size = 0x2000, scoped, tag = 'output window, operand 0, single buffered']
    %16 = vsyncpa [#allocation3], 0
    %17 = vsyncpa [#allocation6], 0
    %18 = vsyncpa [#allocation9], 0
    %19 = vsyncpa [#allocation12], 0
    %20 = vsyncpa [#allocation15], 0
    %21 = vsyncpa [#allocation18], 0
    %22 = vsyncpa [#allocation4], 0
    // Predicated region
    $region2: #{tpu_custom_call.1} parent=1 // pred_check
      _
    $region3: #{tpu_custom_call.1} parent=1 // pred_check_branch
      %24 = sbr.rel (0) target = $region5
    $region4: #{tpu_custom_call.1} parent=1 // pred_region
      %s26 = ssub.s32 896, 896
      %27 = vsyncadd [#allocation3], %s26
      %s29 = sshll.u32 [#allocation2], 4
      %s30 = int_to_ptr.vmem [resolvable:$true] %s29
      %32 = dma.hbm_to_vmem [thread:$0]  %s0, 896, %s30, [#allocation3]
    $region5: #{tpu_custom_call.1} parent=1 // pred_fallthru
      _
    // Predicated region
    $region6: #{tpu_custom_call.1} parent=1 // pred_check
      _
    $region7: #{tpu_custom_call.1} parent=1 // pred_check_branch
      %34 = sbr.rel (0) target = $region9
    $region8: #{tpu_custom_call.1} parent=1 // pred_region
      %s36 = ssub.s32 35840, 35840
      %37 = vsyncadd [#allocation6], %s36
      %s38 = sshll.u32 [#allocation5], 4
      %s39 = int_to_ptr.vmem [resolvable:$true] %s38
      %44 = dma.hbm_to_vmem [thread:$0]  %s1, 35840, %s39, [#allocation6], 320, 320, 20
    $region9: #{tpu_custom_call.1} parent=1 // pred_fallthru
      _
    // Predicated region
    $region10: #{tpu_custom_call.1} parent=1 // pred_check
      _
    $region11: #{tpu_custom_call.1} parent=1 // pred_check_branch
      %46 = sbr.rel (0) target = $region13
    $region12: #{tpu_custom_call.1} parent=1 // pred_region
      %s48 = ssub.s32 80, 80
      %49 = vsyncadd [#allocation6], %s48
      %s51 = sshll.u32 [#allocation7], 4
      %s52 = int_to_ptr.vmem [resolvable:$true] %s51
      %54 = dma.hbm_to_vmem [thread:$0]  %s2, 80, %s52, [#allocation6]
    $region13: #{tpu_custom_call.1} parent=1 // pred_fallthru
      _
    // Predicated region
    $region14: #{tpu_custom_call.1} parent=1 // pred_check
      _
    $region15: #{tpu_custom_call.1} parent=1 // pred_check_branch
      %56 = sbr.rel (0) target = $region17
    $region16: #{tpu_custom_call.1} parent=1 // pred_region
      %s58 = ssub.s32 80, 80
      %59 = vsyncadd [#allocation9], %s58
      %s61 = sshll.u32 [#allocation8], 4
      %s62 = int_to_ptr.vmem [resolvable:$true] %s61
      %64 = dma.hbm_to_vmem [thread:$0]  %s3, 80, %s62, [#allocation9]
    $region17: #{tpu_custom_call.1} parent=1 // pred_fallthru
      _
    // Predicated region
    $region18: #{tpu_custom_call.1} parent=1 // pred_check
      _
    $region19: #{tpu_custom_call.1} parent=1 // pred_check_branch
      %66 = sbr.rel (0) target = $region21
    $region20: #{tpu_custom_call.1} parent=1 // pred_region
      %s68 = ssub.s32 80, 80
      %69 = vsyncadd [#allocation9], %s68
      %s71 = sshll.u32 [#allocation10], 4
      %s72 = int_to_ptr.vmem [resolvable:$true] %s71
      %74 = dma.hbm_to_vmem [thread:$0]  %s4, 80, %s72, [#allocation9]
    $region21: #{tpu_custom_call.1} parent=1 // pred_fallthru
      _
    // Predicated region
    $region22: #{tpu_custom_call.1} parent=1 // pred_check
      _
    $region23: #{tpu_custom_call.1} parent=1 // pred_check_branch
      %76 = sbr.rel (0) target = $region25
    $region24: #{tpu_custom_call.1} parent=1 // pred_region
      %s78 = ssub.s32 15360, 15360
      %79 = vsyncadd [#allocation12], %s78
      %s80 = sshll.u32 [#allocation11], 4
      %s81 = int_to_ptr.vmem [resolvable:$true] %s80
      %86 = dma.hbm_to_vmem [thread:$0]  %s5, 15360, %s81, [#allocation12], 192, 192, 12
    $region25: #{tpu_custom_call.1} parent=1 // pred_fallthru
      _
    // Predicated region
    $region26: #{tpu_custom_call.1} parent=1 // pred_check
      _
    $region27: #{tpu_custom_call.1} parent=1 // pred_check_branch
      %88 = sbr.rel (0) target = $region29
    $region28: #{tpu_custom_call.1} parent=1 // pred_region
      %s90 = ssub.s32 48, 48
      %91 = vsyncadd [#allocation12], %s90
      %s93 = sshll.u32 [#allocation13], 4
      %s94 = int_to_ptr.vmem [resolvable:$true] %s93
      %96 = dma.hbm_to_vmem [thread:$0]  %s6, 48, %s94, [#allocation12]
    $region29: #{tpu_custom_call.1} parent=1 // pred_fallthru
      _
    // Predicated region
    $region30: #{tpu_custom_call.1} parent=1 // pred_check
      _
    $region31: #{tpu_custom_call.1} parent=1 // pred_check_branch
      %98 = sbr.rel (0) target = $region33
    $region32: #{tpu_custom_call.1} parent=1 // pred_region
      %s100 = ssub.s32 48, 48
      %101 = vsyncadd [#allocation15], %s100
      %s103 = sshll.u32 [#allocation14], 4
      %s104 = int_to_ptr.vmem [resolvable:$true] %s103
      %106 = dma.hbm_to_vmem [thread:$0]  %s7, 48, %s104, [#allocation15]
    $region33: #{tpu_custom_call.1} parent=1 // pred_fallthru
      _
    // Predicated region
    $region34: #{tpu_custom_call.1} parent=1 // pred_check
      _
    $region35: #{tpu_custom_call.1} parent=1 // pred_check_branch
      %108 = sbr.rel (0) target = $region37
    $region36: #{tpu_custom_call.1} parent=1 // pred_region
      %s110 = ssub.s32 48, 48
      %111 = vsyncadd [#allocation15], %s110
      %s113 = sshll.u32 [#allocation16], 4
      %s114 = int_to_ptr.vmem [resolvable:$true] %s113
      %116 = dma.hbm_to_vmem [thread:$0]  %s8, 48, %s114, [#allocation15]
    $region37: #{tpu_custom_call.1} parent=1 // pred_fallthru
      _
    // Predicated region
    $region38: #{tpu_custom_call.1} parent=1 // pred_check
      _
    $region39: #{tpu_custom_call.1} parent=1 // pred_check_branch
      %118 = sbr.rel (0) target = $region41
    $region40: #{tpu_custom_call.1} parent=1 // pred_region
      %s120 = ssub.s32 6144, 6144
      %121 = vsyncadd [#allocation18], %s120
      %s122 = sshll.u32 [#allocation17], 4
      %s123 = int_to_ptr.vmem [resolvable:$true] %s122
      %128 = dma.hbm_to_vmem [thread:$0]  %s9, 6144, %s123, [#allocation18], 128, 128, 8
    $region41: #{tpu_custom_call.1} parent=1 // pred_fallthru
      _
    // Predicated region
    $region42: #{tpu_custom_call.1} parent=1 // pred_check
      _
    $region43: #{tpu_custom_call.1} parent=1 // pred_check_branch
      %130 = sbr.rel (0) target = $region45
    $region44: #{tpu_custom_call.1} parent=1 // pred_region
      %s132 = ssub.s32 32, 32
      %133 = vsyncadd [#allocation18], %s132
      %s135 = sshll.u32 [#allocation19], 4
      %s136 = int_to_ptr.vmem [resolvable:$true] %s135
      %138 = dma.hbm_to_vmem [thread:$0]  %s10, 32, %s136, [#allocation18]
    $region45: #{tpu_custom_call.1} parent=1 // pred_fallthru
      _
    // Predicated region
    $region46: #{tpu_custom_call.1} parent=1 // pred_check
      _
    $region47: #{tpu_custom_call.1} parent=1 // pred_check_branch
      %140 = sbr.rel (0) target = $region49
    $region48: #{tpu_custom_call.1} parent=1 // pred_region
      %141 = dma.done [#allocation3], 896
    $region49: #{tpu_custom_call.1} parent=1 // pred_fallthru
      _
    // Predicated region
    $region50: #{tpu_custom_call.1} parent=1 // pred_check
      _
    $region51: #{tpu_custom_call.1} parent=1 // pred_check_branch
      %143 = sbr.rel (0) target = $region53
    $region52: #{tpu_custom_call.1} parent=1 // pred_region
      %144 = dma.done [#allocation6], 35840
    $region53: #{tpu_custom_call.1} parent=1 // pred_fallthru
      _
    // Predicated region
    $region54: #{tpu_custom_call.1} parent=1 // pred_check
      _
    $region55: #{tpu_custom_call.1} parent=1 // pred_check_branch
      %146 = sbr.rel (0) target = $region57
    $region56: #{tpu_custom_call.1} parent=1 // pred_region
      %147 = dma.done [#allocation6], 80
    $region57: #{tpu_custom_call.1} parent=1 // pred_fallthru
      _
    // Predicated region
    $region58: #{tpu_custom_call.1} parent=1 // pred_check
      _
    $region59: #{tpu_custom_call.1} parent=1 // pred_check_branch
      %149 = sbr.rel (0) target = $region61
    $region60: #{tpu_custom_call.1} parent=1 // pred_region
      %150 = dma.done [#allocation9], 80
    $region61: #{tpu_custom_call.1} parent=1 // pred_fallthru
      _
    // Predicated region
    $region62: #{tpu_custom_call.1} parent=1 // pred_check
      _
    $region63: #{tpu_custom_call.1} parent=1 // pred_check_branch
      %152 = sbr.rel (0) target = $region65
    $region64: #{tpu_custom_call.1} parent=1 // pred_region
      %153 = dma.done [#allocation9], 80
    $region65: #{tpu_custom_call.1} parent=1 // pred_fallthru
      _
    // Predicated region
    $region66: #{tpu_custom_call.1} parent=1 // pred_check
      _
    $region67: #{tpu_custom_call.1} parent=1 // pred_check_branch
      %155 = sbr.rel (0) target = $region69
    $region68: #{tpu_custom_call.1} parent=1 // pred_region
      %156 = dma.done [#allocation12], 15360
    $region69: #{tpu_custom_call.1} parent=1 // pred_fallthru
      _
    // Predicated region
    $region70: #{tpu_custom_call.1} parent=1 // pred_check
      _
    $region71: #{tpu_custom_call.1} parent=1 // pred_check_branch
      %158 = sbr.rel (0) target = $region73
    $region72: #{tpu_custom_call.1} parent=1 // pred_region
      %159 = dma.done [#allocation12], 48
    $region73: #{tpu_custom_call.1} parent=1 // pred_fallthru
      _
    // Predicated region
    $region74: #{tpu_custom_call.1} parent=1 // pred_check
      _
    $region75: #{tpu_custom_call.1} parent=1 // pred_check_branch
      %161 = sbr.rel (0) target = $region77
    $region76: #{tpu_custom_call.1} parent=1 // pred_region
      %162 = dma.done [#allocation15], 48
    $region77: #{tpu_custom_call.1} parent=1 // pred_fallthru
      _
    // Predicated region
    $region78: #{tpu_custom_call.1} parent=1 // pred_check
      _
    $region79: #{tpu_custom_call.1} parent=1 // pred_check_branch
      %164 = sbr.rel (0) target = $region81
    $region80: #{tpu_custom_call.1} parent=1 // pred_region
      %165 = dma.done [#allocation15], 48
    $region81: #{tpu_custom_call.1} parent=1 // pred_fallthru
      _
    // Predicated region
    $region82: #{tpu_custom_call.1} parent=1 // pred_check
      _
    $region83: #{tpu_custom_call.1} parent=1 // pred_check_branch
      %167 = sbr.rel (0) target = $region85
    $region84: #{tpu_custom_call.1} parent=1 // pred_region
      %168 = dma.done [#allocation18], 6144
    $region85: #{tpu_custom_call.1} parent=1 // pred_fallthru
      _
    // Predicated region
    $region86: #{tpu_custom_call.1} parent=1 // pred_check
      _
    $region87: #{tpu_custom_call.1} parent=1 // pred_check_branch
      %170 = sbr.rel (0) target = $region89
    $region88: #{tpu_custom_call.1} parent=1 // pred_region
      %171 = dma.done [#allocation18], 32
    $region89: #{tpu_custom_call.1} parent=1 // pred_fallthru
      _
    %v173 = vld [vmem:[#allocation2] sm:$0xff]
    %v174 = vld [vmem:[#allocation2 + $0x8] sm:$0xff]
    %v175 = vld [vmem:[#allocation2 + $0x10] sm:$0xff]
    %v176 = vld [vmem:[#allocation2 + $0x18] sm:$0xff]
    %v177 = vld [vmem:[#allocation2 + $0x20] sm:$0xff]
    %v178 = vld [vmem:[#allocation2 + $0x28] sm:$0xff]
    %v179 = vld [vmem:[#allocation2 + $0x30] sm:$0xff]
    %v180 = vpack.c.bf16 %v173, %v173
    %v181 = vpack.c.bf16 %v174, %v174
    %v182 = vpack.c.bf16 %v175, %v175
    %v183 = vpack.c.bf16 %v176, %v176
    %v184 = vpack.c.bf16 %v177, %v177
    %v185 = vpack.c.bf16 %v178, %v178
    %v186 = vpack.c.bf16 %v179, %v179
    %v187 = vld [vmem:[#allocation5] sm:$0xff]
    %v188 = vld [vmem:[#allocation5 + $0x8] sm:$0xff]
    %v189 = vld [vmem:[#allocation5 + $0x10] sm:$0xf]
    %v190 = vld [vmem:[#allocation5 + $0x14] sm:$0xff]
    %v191 = vld [vmem:[#allocation5 + $0x1c] sm:$0xff]
    %v192 = vld [vmem:[#allocation5 + $0x24] sm:$0xf]
    %v193 = vld [vmem:[#allocation5 + $0x28] sm:$0xff]
    %v194 = vld [vmem:[#allocation5 + $0x30] sm:$0xff]
    %v195 = vld [vmem:[#allocation5 + $0x38] sm:$0xf]
    %v196 = vld [vmem:[#allocation5 + $0x3c] sm:$0xff]
    %v197 = vld [vmem:[#allocation5 + $0x44] sm:$0xff]
    %v198 = vld [vmem:[#allocation5 + $0x4c] sm:$0xf]
    %v199 = vld [vmem:[#allocation5 + $0x50] sm:$0xff]
    %v200 = vld [vmem:[#allocation5 + $0x58] sm:$0xff]
    %v201 = vld [vmem:[#allocation5 + $0x60] sm:$0xf]
    %v202 = vld [vmem:[#allocation5 + $0x64] sm:$0xff]
    %v203 = vld [vmem:[#allocation5 + $0x6c] sm:$0xff]
    %v204 = vld [vmem:[#allocation5 + $0x74] sm:$0xf]
    %v205 = vld [vmem:[#allocation5 + $0x78] sm:$0xff]
    %v206 = vld [vmem:[#allocation5 + $0x80] sm:$0xff]
    %v207 = vld [vmem:[#allocation5 + $0x88] sm:$0xf]
    %v208 = vld [vmem:[#allocation5 + $0x8c] sm:$0xff]
    %v209 = vld [vmem:[#allocation5 + $0x94] sm:$0xff]
    %v210 = vld [vmem:[#allocation5 + $0x9c] sm:$0xf]
    %v211 = vld [vmem:[#allocation5 + $0xa0] sm:$0xff]
    %v212 = vld [vmem:[#allocation5 + $0xa8] sm:$0xff]
    %v213 = vld [vmem:[#allocation5 + $0xb0] sm:$0xf]
    %v214 = vld [vmem:[#allocation5 + $0xb4] sm:$0xff]
    %v215 = vld [vmem:[#allocation5 + $0xbc] sm:$0xff]
    %v216 = vld [vmem:[#allocation5 + $0xc4] sm:$0xf]
    %v217 = vld [vmem:[#allocation5 + $0xc8] sm:$0xff]
    %v218 = vld [vmem:[#allocation5 + $0xd0] sm:$0xff]
    %v219 = vld [vmem:[#allocation5 + $0xd8] sm:$0xf]
    %v220 = vld [vmem:[#allocation5 + $0xdc] sm:$0xff]
    %v221 = vld [vmem:[#allocation5 + $0xe4] sm:$0xff]
    %v222 = vld [vmem:[#allocation5 + $0xec] sm:$0xf]
    %v223 = vld [vmem:[#allocation5 + $0xf0] sm:$0xff]
    %v224 = vld [vmem:[#allocation5 + $0xf8] sm:$0xff]
    %v225 = vld [vmem:[#allocation5 + $0x100] sm:$0xf]
    %v226 = vld [vmem:[#allocation5 + $0x104] sm:$0xff]
    %v227 = vld [vmem:[#allocation5 + $0x10c] sm:$0xff]
    %v228 = vld [vmem:[#allocation5 + $0x114] sm:$0xf]
    %v229 = vld [vmem:[#allocation5 + $0x118] sm:$0xff]
    %v230 = vld [vmem:[#allocation5 + $0x120] sm:$0xff]
    %v231 = vld [vmem:[#allocation5 + $0x128] sm:$0xf]
    %v232 = vld [vmem:[#allocation5 + $0x12c] sm:$0xff]
    %v233 = vld [vmem:[#allocation5 + $0x134] sm:$0xff]
    %v234 = vld [vmem:[#allocation5 + $0x13c] sm:$0xf]
    %v235 = vld [vmem:[#allocation5 + $0x140] sm:$0xff]
    %v236 = vld [vmem:[#allocation5 + $0x148] sm:$0xff]
    %v237 = vld [vmem:[#allocation5 + $0x150] sm:$0xf]
    %v238 = vld [vmem:[#allocation5 + $0x154] sm:$0xff]
    %v239 = vld [vmem:[#allocation5 + $0x15c] sm:$0xff]
    %v240 = vld [vmem:[#allocation5 + $0x164] sm:$0xf]
    %v241 = vld [vmem:[#allocation5 + $0x168] sm:$0xff]
    %v242 = vld [vmem:[#allocation5 + $0x170] sm:$0xff]
    %v243 = vld [vmem:[#allocation5 + $0x178] sm:$0xf]
    %v244 = vld [vmem:[#allocation5 + $0x17c] sm:$0xff]
    %v245 = vld [vmem:[#allocation5 + $0x184] sm:$0xff]
    %v246 = vld [vmem:[#allocation5 + $0x18c] sm:$0xf]
    %v247 = vld [vmem:[#allocation5 + $0x190] sm:$0xff]
    %v248 = vld [vmem:[#allocation5 + $0x198] sm:$0xff]
    %v249 = vld [vmem:[#allocation5 + $0x1a0] sm:$0xf]
    %v250 = vld [vmem:[#allocation5 + $0x1a4] sm:$0xff]
    %v251 = vld [vmem:[#allocation5 + $0x1ac] sm:$0xff]
    %v252 = vld [vmem:[#allocation5 + $0x1b4] sm:$0xf]
    %v253 = vld [vmem:[#allocation5 + $0x1b8] sm:$0xff]
    %v254 = vld [vmem:[#allocation5 + $0x1c0] sm:$0xff]
    %v255 = vld [vmem:[#allocation5 + $0x1c8] sm:$0xf]
    %v256 = vld [vmem:[#allocation5 + $0x1cc] sm:$0xff]
    %v257 = vld [vmem:[#allocation5 + $0x1d4] sm:$0xff]
    %v258 = vld [vmem:[#allocation5 + $0x1dc] sm:$0xf]
    %v259 = vld [vmem:[#allocation5 + $0x1e0] sm:$0xff]
    %v260 = vld [vmem:[#allocation5 + $0x1e8] sm:$0xff]
    %v261 = vld [vmem:[#allocation5 + $0x1f0] sm:$0xf]
    %v262 = vld [vmem:[#allocation5 + $0x1f4] sm:$0xff]
    %v263 = vld [vmem:[#allocation5 + $0x1fc] sm:$0xff]
    %v264 = vld [vmem:[#allocation5 + $0x204] sm:$0xf]
    %v265 = vld [vmem:[#allocation5 + $0x208] sm:$0xff]
    %v266 = vld [vmem:[#allocation5 + $0x210] sm:$0xff]
    %v267 = vld [vmem:[#allocation5 + $0x218] sm:$0xf]
    %v268 = vld [vmem:[#allocation5 + $0x21c] sm:$0xff]
    %v269 = vld [vmem:[#allocation5 + $0x224] sm:$0xff]
    %v270 = vld [vmem:[#allocation5 + $0x22c] sm:$0xf]
    %v271 = vld [vmem:[#allocation5 + $0x230] sm:$0xff]
    %v272 = vld [vmem:[#allocation5 + $0x238] sm:$0xff]
    %v273 = vld [vmem:[#allocation5 + $0x240] sm:$0xf]
    %v274 = vld [vmem:[#allocation5 + $0x244] sm:$0xff]
    %v275 = vld [vmem:[#allocation5 + $0x24c] sm:$0xff]
    %v276 = vld [vmem:[#allocation5 + $0x254] sm:$0xf]
    %v277 = vld [vmem:[#allocation5 + $0x258] sm:$0xff]
    %v278 = vld [vmem:[#allocation5 + $0x260] sm:$0xff]
    %v279 = vld [vmem:[#allocation5 + $0x268] sm:$0xf]
    %v280 = vld [vmem:[#allocation5 + $0x26c] sm:$0xff]
    %v281 = vld [vmem:[#allocation5 + $0x274] sm:$0xff]
    %v282 = vld [vmem:[#allocation5 + $0x27c] sm:$0xf]
    %v283 = vld [vmem:[#allocation5 + $0x280] sm:$0xff]
    %v284 = vld [vmem:[#allocation5 + $0x288] sm:$0xff]
    %v285 = vld [vmem:[#allocation5 + $0x290] sm:$0xf]
    %v286 = vld [vmem:[#allocation5 + $0x294] sm:$0xff]
    %v287 = vld [vmem:[#allocation5 + $0x29c] sm:$0xff]
    %v288 = vld [vmem:[#allocation5 + $0x2a4] sm:$0xf]
    %v289 = vld [vmem:[#allocation5 + $0x2a8] sm:$0xff]
    %v290 = vld [vmem:[#allocation5 + $0x2b0] sm:$0xff]
    %v291 = vld [vmem:[#allocation5 + $0x2b8] sm:$0xf]
    %v292 = vld [vmem:[#allocation5 + $0x2bc] sm:$0xff]
    %v293 = vld [vmem:[#allocation5 + $0x2c4] sm:$0xff]
    %v294 = vld [vmem:[#allocation5 + $0x2cc] sm:$0xf]
    %v295 = vld [vmem:[#allocation5 + $0x2d0] sm:$0xff]
    %v296 = vld [vmem:[#allocation5 + $0x2d8] sm:$0xff]
    %v297 = vld [vmem:[#allocation5 + $0x2e0] sm:$0xf]
    %v298 = vld [vmem:[#allocation5 + $0x2e4] sm:$0xff]
    %v299 = vld [vmem:[#allocation5 + $0x2ec] sm:$0xff]
    %v300 = vld [vmem:[#allocation5 + $0x2f4] sm:$0xf]
    %v301 = vld [vmem:[#allocation5 + $0x2f8] sm:$0xff]
    %v302 = vld [vmem:[#allocation5 + $0x300] sm:$0xff]
    %v303 = vld [vmem:[#allocation5 + $0x308] sm:$0xf]
    %v304 = vld [vmem:[#allocation5 + $0x30c] sm:$0xff]
    %v305 = vld [vmem:[#allocation5 + $0x314] sm:$0xff]
    %v306 = vld [vmem:[#allocation5 + $0x31c] sm:$0xf]
    %v307 = vld [vmem:[#allocation5 + $0x320] sm:$0xff]
    %v308 = vld [vmem:[#allocation5 + $0x328] sm:$0xff]
    %v309 = vld [vmem:[#allocation5 + $0x330] sm:$0xf]
    %v310 = vld [vmem:[#allocation5 + $0x334] sm:$0xff]
    %v311 = vld [vmem:[#allocation5 + $0x33c] sm:$0xff]
    %v312 = vld [vmem:[#allocation5 + $0x344] sm:$0xf]
    %v313 = vld [vmem:[#allocation5 + $0x348] sm:$0xff]
    %v314 = vld [vmem:[#allocation5 + $0x350] sm:$0xff]
    %v315 = vld [vmem:[#allocation5 + $0x358] sm:$0xf]
    %v316 = vld [vmem:[#allocation5 + $0x35c] sm:$0xff]
    %v317 = vld [vmem:[#allocation5 + $0x364] sm:$0xff]
    %v318 = vld [vmem:[#allocation5 + $0x36c] sm:$0xf]
    %v319 = vld [vmem:[#allocation5 + $0x370] sm:$0xff]
    %v320 = vld [vmem:[#allocation5 + $0x378] sm:$0xff]
    %v321 = vld [vmem:[#allocation5 + $0x380] sm:$0xf]
    %v322 = vld [vmem:[#allocation5 + $0x384] sm:$0xff]
    %v323 = vld [vmem:[#allocation5 + $0x38c] sm:$0xff]
    %v324 = vld [vmem:[#allocation5 + $0x394] sm:$0xf]
    %v325 = vld [vmem:[#allocation5 + $0x398] sm:$0xff]
    %v326 = vld [vmem:[#allocation5 + $0x3a0] sm:$0xff]
    %v327 = vld [vmem:[#allocation5 + $0x3a8] sm:$0xf]
    %v328 = vld [vmem:[#allocation5 + $0x3ac] sm:$0xff]
    %v329 = vld [vmem:[#allocation5 + $0x3b4] sm:$0xff]
    %v330 = vld [vmem:[#allocation5 + $0x3bc] sm:$0xf]
    %v331 = vld [vmem:[#allocation5 + $0x3c0] sm:$0xff]
    %v332 = vld [vmem:[#allocation5 + $0x3c8] sm:$0xff]
    %v333 = vld [vmem:[#allocation5 + $0x3d0] sm:$0xf]
    %v334 = vld [vmem:[#allocation5 + $0x3d4] sm:$0xff]
    %v335 = vld [vmem:[#allocation5 + $0x3dc] sm:$0xff]
    %v336 = vld [vmem:[#allocation5 + $0x3e4] sm:$0xf]
    %v337 = vld [vmem:[#allocation5 + $0x3e8] sm:$0xff]
    %v338 = vld [vmem:[#allocation5 + $0x3f0] sm:$0xff]
    %v339 = vld [vmem:[#allocation5 + $0x3f8] sm:$0xf]
    %v340 = vld [vmem:[#allocation5 + $0x3fc] sm:$0xff]
    %v341 = vld [vmem:[#allocation5 + $0x404] sm:$0xff]
    %v342 = vld [vmem:[#allocation5 + $0x40c] sm:$0xf]
    %v343 = vld [vmem:[#allocation5 + $0x410] sm:$0xff]
    %v344 = vld [vmem:[#allocation5 + $0x418] sm:$0xff]
    %v345 = vld [vmem:[#allocation5 + $0x420] sm:$0xf]
    %v346 = vld [vmem:[#allocation5 + $0x424] sm:$0xff]
    %v347 = vld [vmem:[#allocation5 + $0x42c] sm:$0xff]
    %v348 = vld [vmem:[#allocation5 + $0x434] sm:$0xf]
    %v349 = vld [vmem:[#allocation5 + $0x438] sm:$0xff]
    %v350 = vld [vmem:[#allocation5 + $0x440] sm:$0xff]
    %v351 = vld [vmem:[#allocation5 + $0x448] sm:$0xf]
    %v352 = vld [vmem:[#allocation5 + $0x44c] sm:$0xff]
    %v353 = vld [vmem:[#allocation5 + $0x454] sm:$0xff]
    %v354 = vld [vmem:[#allocation5 + $0x45c] sm:$0xf]
    %v355 = vld [vmem:[#allocation5 + $0x460] sm:$0xff]
    %v356 = vld [vmem:[#allocation5 + $0x468] sm:$0xff]
    %v357 = vld [vmem:[#allocation5 + $0x470] sm:$0xf]
    %v358 = vld [vmem:[#allocation5 + $0x474] sm:$0xff]
    %v359 = vld [vmem:[#allocation5 + $0x47c] sm:$0xff]
    %v360 = vld [vmem:[#allocation5 + $0x484] sm:$0xf]
    %v361 = vld [vmem:[#allocation5 + $0x488] sm:$0xff]
    %v362 = vld [vmem:[#allocation5 + $0x490] sm:$0xff]
    %v363 = vld [vmem:[#allocation5 + $0x498] sm:$0xf]
    %v364 = vld [vmem:[#allocation5 + $0x49c] sm:$0xff]
    %v365 = vld [vmem:[#allocation5 + $0x4a4] sm:$0xff]
    %v366 = vld [vmem:[#allocation5 + $0x4ac] sm:$0xf]
    %v367 = vld [vmem:[#allocation5 + $0x4b0] sm:$0xff]
    %v368 = vld [vmem:[#allocation5 + $0x4b8] sm:$0xff]
    %v369 = vld [vmem:[#allocation5 + $0x4c0] sm:$0xf]
    %v370 = vld [vmem:[#allocation5 + $0x4c4] sm:$0xff]
    %v371 = vld [vmem:[#allocation5 + $0x4cc] sm:$0xff]
    %v372 = vld [vmem:[#allocation5 + $0x4d4] sm:$0xf]
    %v373 = vld [vmem:[#allocation5 + $0x4d8] sm:$0xff]
    %v374 = vld [vmem:[#allocation5 + $0x4e0] sm:$0xff]
    %v375 = vld [vmem:[#allocation5 + $0x4e8] sm:$0xf]
    %v376 = vld [vmem:[#allocation5 + $0x4ec] sm:$0xff]
    %v377 = vld [vmem:[#allocation5 + $0x4f4] sm:$0xff]
    %v378 = vld [vmem:[#allocation5 + $0x4fc] sm:$0xf]
    %v379 = vld [vmem:[#allocation5 + $0x500] sm:$0xff]
    %v380 = vld [vmem:[#allocation5 + $0x508] sm:$0xff]
    %v381 = vld [vmem:[#allocation5 + $0x510] sm:$0xf]
    %v382 = vld [vmem:[#allocation5 + $0x514] sm:$0xff]
    %v383 = vld [vmem:[#allocation5 + $0x51c] sm:$0xff]
    %v384 = vld [vmem:[#allocation5 + $0x524] sm:$0xf]
    %v385 = vld [vmem:[#allocation5 + $0x528] sm:$0xff]
    %v386 = vld [vmem:[#allocation5 + $0x530] sm:$0xff]
    %v387 = vld [vmem:[#allocation5 + $0x538] sm:$0xf]
    %v388 = vld [vmem:[#allocation5 + $0x53c] sm:$0xff]
    %v389 = vld [vmem:[#allocation5 + $0x544] sm:$0xff]
    %v390 = vld [vmem:[#allocation5 + $0x54c] sm:$0xf]
    %v391 = vld [vmem:[#allocation5 + $0x550] sm:$0xff]
    %v392 = vld [vmem:[#allocation5 + $0x558] sm:$0xff]
    %v393 = vld [vmem:[#allocation5 + $0x560] sm:$0xf]
    %v394 = vld [vmem:[#allocation5 + $0x564] sm:$0xff]
    %v395 = vld [vmem:[#allocation5 + $0x56c] sm:$0xff]
    %v396 = vld [vmem:[#allocation5 + $0x574] sm:$0xf]
    %v397 = vld [vmem:[#allocation5 + $0x578] sm:$0xff]
    %v398 = vld [vmem:[#allocation5 + $0x580] sm:$0xff]
    %v399 = vld [vmem:[#allocation5 + $0x588] sm:$0xf]
    %v400 = vld [vmem:[#allocation5 + $0x58c] sm:$0xff]
    %v401 = vld [vmem:[#allocation5 + $0x594] sm:$0xff]
    %v402 = vld [vmem:[#allocation5 + $0x59c] sm:$0xf]
    %v403 = vld [vmem:[#allocation5 + $0x5a0] sm:$0xff]
    %v404 = vld [vmem:[#allocation5 + $0x5a8] sm:$0xff]
    %v405 = vld [vmem:[#allocation5 + $0x5b0] sm:$0xf]
    %v406 = vld [vmem:[#allocation5 + $0x5b4] sm:$0xff]
    %v407 = vld [vmem:[#allocation5 + $0x5bc] sm:$0xff]
    %v408 = vld [vmem:[#allocation5 + $0x5c4] sm:$0xf]
    %v409 = vld [vmem:[#allocation5 + $0x5c8] sm:$0xff]
    %v410 = vld [vmem:[#allocation5 + $0x5d0] sm:$0xff]
    %v411 = vld [vmem:[#allocation5 + $0x5d8] sm:$0xf]
    %v412 = vld [vmem:[#allocation5 + $0x5dc] sm:$0xff]
    %v413 = vld [vmem:[#allocation5 + $0x5e4] sm:$0xff]
    %v414 = vld [vmem:[#allocation5 + $0x5ec] sm:$0xf]
    %v415 = vld [vmem:[#allocation5 + $0x5f0] sm:$0xff]
    %v416 = vld [vmem:[#allocation5 + $0x5f8] sm:$0xff]
    %v417 = vld [vmem:[#allocation5 + $0x600] sm:$0xf]
    %v418 = vld [vmem:[#allocation5 + $0x604] sm:$0xff]
    %v419 = vld [vmem:[#allocation5 + $0x60c] sm:$0xff]
    %v420 = vld [vmem:[#allocation5 + $0x614] sm:$0xf]
    %v421 = vld [vmem:[#allocation5 + $0x618] sm:$0xff]
    %v422 = vld [vmem:[#allocation5 + $0x620] sm:$0xff]
    %v423 = vld [vmem:[#allocation5 + $0x628] sm:$0xf]
    %v424 = vld [vmem:[#allocation5 + $0x62c] sm:$0xff]
    %v425 = vld [vmem:[#allocation5 + $0x634] sm:$0xff]
    %v426 = vld [vmem:[#allocation5 + $0x63c] sm:$0xf]
    %v427 = vld [vmem:[#allocation5 + $0x640] sm:$0xff]
    %v428 = vld [vmem:[#allocation5 + $0x648] sm:$0xff]
    %v429 = vld [vmem:[#allocation5 + $0x650] sm:$0xf]
    %v430 = vld [vmem:[#allocation5 + $0x654] sm:$0xff]
    %v431 = vld [vmem:[#allocation5 + $0x65c] sm:$0xff]
    %v432 = vld [vmem:[#allocation5 + $0x664] sm:$0xf]
    %v433 = vld [vmem:[#allocation5 + $0x668] sm:$0xff]
    %v434 = vld [vmem:[#allocation5 + $0x670] sm:$0xff]
    %v435 = vld [vmem:[#allocation5 + $0x678] sm:$0xf]
    %v436 = vld [vmem:[#allocation5 + $0x67c] sm:$0xff]
    %v437 = vld [vmem:[#allocation5 + $0x684] sm:$0xff]
    %v438 = vld [vmem:[#allocation5 + $0x68c] sm:$0xf]
    %v439 = vld [vmem:[#allocation5 + $0x690] sm:$0xff]
    %v440 = vld [vmem:[#allocation5 + $0x698] sm:$0xff]
    %v441 = vld [vmem:[#allocation5 + $0x6a0] sm:$0xf]
    %v442 = vld [vmem:[#allocation5 + $0x6a4] sm:$0xff]
    %v443 = vld [vmem:[#allocation5 + $0x6ac] sm:$0xff]
    %v444 = vld [vmem:[#allocation5 + $0x6b4] sm:$0xf]
    %v445 = vld [vmem:[#allocation5 + $0x6b8] sm:$0xff]
    %v446 = vld [vmem:[#allocation5 + $0x6c0] sm:$0xff]
    %v447 = vld [vmem:[#allocation5 + $0x6c8] sm:$0xf]
    %v448 = vld [vmem:[#allocation5 + $0x6cc] sm:$0xff]
    %v449 = vld [vmem:[#allocation5 + $0x6d4] sm:$0xff]
    %v450 = vld [vmem:[#allocation5 + $0x6dc] sm:$0xf]
    %v451 = vld [vmem:[#allocation5 + $0x6e0] sm:$0xff]
    %v452 = vld [vmem:[#allocation5 + $0x6e8] sm:$0xff]
    %v453 = vld [vmem:[#allocation5 + $0x6f0] sm:$0xf]
    %v454 = vld [vmem:[#allocation5 + $0x6f4] sm:$0xff]
    %v455 = vld [vmem:[#allocation5 + $0x6fc] sm:$0xff]
    %v456 = vld [vmem:[#allocation5 + $0x704] sm:$0xf]
    %v457 = vld [vmem:[#allocation5 + $0x708] sm:$0xff]
    %v458 = vld [vmem:[#allocation5 + $0x710] sm:$0xff]
    %v459 = vld [vmem:[#allocation5 + $0x718] sm:$0xf]
    %v460 = vld [vmem:[#allocation5 + $0x71c] sm:$0xff]
    %v461 = vld [vmem:[#allocation5 + $0x724] sm:$0xff]
    %v462 = vld [vmem:[#allocation5 + $0x72c] sm:$0xf]
    %v463 = vld [vmem:[#allocation5 + $0x730] sm:$0xff]
    %v464 = vld [vmem:[#allocation5 + $0x738] sm:$0xff]
    %v465 = vld [vmem:[#allocation5 + $0x740] sm:$0xf]
    %v466 = vld [vmem:[#allocation5 + $0x744] sm:$0xff]
    %v467 = vld [vmem:[#allocation5 + $0x74c] sm:$0xff]
    %v468 = vld [vmem:[#allocation5 + $0x754] sm:$0xf]
    %v469 = vld [vmem:[#allocation5 + $0x758] sm:$0xff]
    %v470 = vld [vmem:[#allocation5 + $0x760] sm:$0xff]
    %v471 = vld [vmem:[#allocation5 + $0x768] sm:$0xf]
    %v472 = vld [vmem:[#allocation5 + $0x76c] sm:$0xff]
    %v473 = vld [vmem:[#allocation5 + $0x774] sm:$0xff]
    %v474 = vld [vmem:[#allocation5 + $0x77c] sm:$0xf]
    %v475 = vld [vmem:[#allocation5 + $0x780] sm:$0xff]
    %v476 = vld [vmem:[#allocation5 + $0x788] sm:$0xff]
    %v477 = vld [vmem:[#allocation5 + $0x790] sm:$0xf]
    %v478 = vld [vmem:[#allocation5 + $0x794] sm:$0xff]
    %v479 = vld [vmem:[#allocation5 + $0x79c] sm:$0xff]
    %v480 = vld [vmem:[#allocation5 + $0x7a4] sm:$0xf]
    %v481 = vld [vmem:[#allocation5 + $0x7a8] sm:$0xff]
    %v482 = vld [vmem:[#allocation5 + $0x7b0] sm:$0xff]
    %v483 = vld [vmem:[#allocation5 + $0x7b8] sm:$0xf]
    %v484 = vld [vmem:[#allocation5 + $0x7bc] sm:$0xff]
    %v485 = vld [vmem:[#allocation5 + $0x7c4] sm:$0xff]
    %v486 = vld [vmem:[#allocation5 + $0x7cc] sm:$0xf]
    %v487 = vld [vmem:[#allocation5 + $0x7d0] sm:$0xff]
    %v488 = vld [vmem:[#allocation5 + $0x7d8] sm:$0xff]
    %v489 = vld [vmem:[#allocation5 + $0x7e0] sm:$0xf]
    %v490 = vld [vmem:[#allocation5 + $0x7e4] sm:$0xff]
    %v491 = vld [vmem:[#allocation5 + $0x7ec] sm:$0xff]
    %v492 = vld [vmem:[#allocation5 + $0x7f4] sm:$0xf]
    %v493 = vld [vmem:[#allocation5 + $0x7f8] sm:$0xff]
    %v494 = vld [vmem:[#allocation5 + $0x800] sm:$0xff]
    %v495 = vld [vmem:[#allocation5 + $0x808] sm:$0xf]
    %v496 = vld [vmem:[#allocation5 + $0x80c] sm:$0xff]
    %v497 = vld [vmem:[#allocation5 + $0x814] sm:$0xff]
    %v498 = vld [vmem:[#allocation5 + $0x81c] sm:$0xf]
    %v499 = vld [vmem:[#allocation5 + $0x820] sm:$0xff]
    %v500 = vld [vmem:[#allocation5 + $0x828] sm:$0xff]
    %v501 = vld [vmem:[#allocation5 + $0x830] sm:$0xf]
    %v502 = vld [vmem:[#allocation5 + $0x834] sm:$0xff]
    %v503 = vld [vmem:[#allocation5 + $0x83c] sm:$0xff]
    %v504 = vld [vmem:[#allocation5 + $0x844] sm:$0xf]
    %v505 = vld [vmem:[#allocation5 + $0x848] sm:$0xff]
    %v506 = vld [vmem:[#allocation5 + $0x850] sm:$0xff]
    %v507 = vld [vmem:[#allocation5 + $0x858] sm:$0xf]
    %v508 = vld [vmem:[#allocation5 + $0x85c] sm:$0xff]
    %v509 = vld [vmem:[#allocation5 + $0x864] sm:$0xff]
    %v510 = vld [vmem:[#allocation5 + $0x86c] sm:$0xf]
    %v511 = vld [vmem:[#allocation5 + $0x870] sm:$0xff]
    %v512 = vld [vmem:[#allocation5 + $0x878] sm:$0xff]
    %v513 = vld [vmem:[#allocation5 + $0x880] sm:$0xf]
    %v514 = vld [vmem:[#allocation5 + $0x884] sm:$0xff]
    %v515 = vld [vmem:[#allocation5 + $0x88c] sm:$0xff]
    %v516 = vld [vmem:[#allocation5 + $0x894] sm:$0xf]
    %v517 = vld [vmem:[#allocation5 + $0x898] sm:$0xff]
    %v518 = vld [vmem:[#allocation5 + $0x8a0] sm:$0xff]
    %v519 = vld [vmem:[#allocation5 + $0x8a8] sm:$0xf]
    %v520 = vld [vmem:[#allocation5 + $0x8ac] sm:$0xff]
    %v521 = vld [vmem:[#allocation5 + $0x8b4] sm:$0xff]
    %v522 = vld [vmem:[#allocation5 + $0x8bc] sm:$0xf]
    %v523 = vld [vmem:[#allocation7] sm:$0x1f]
    %v525 = vlaneseq
    %v526 = vshrl.u32 %v525, 7
    %v527 = vsub.s32 0, %v526
    %v528 = vrot.slane %v523, %v527
    %v529 = vlaneseq
    %v530 = vshrl.u32 %v529, 7
    %v531 = vsub.s32 1, %v530
    %v532 = vrot.slane %v523, %v531
    %v533 = vlaneseq
    %v534 = vshrl.u32 %v533, 7
    %v535 = vsub.s32 2, %v534
    %v536 = vrot.slane %v523, %v535
    %v537 = vlaneseq
    %v538 = vshrl.u32 %v537, 7
    %v539 = vsub.s32 3, %v538
    %v540 = vrot.slane %v523, %v539
    %v541 = vlaneseq
    %v542 = vshrl.u32 %v541, 7
    %v543 = vsub.s32 4, %v542
    %v544 = vrot.slane %v523, %v543
    %v886 = vunpack.c.l.b16 %v187
    %v887 = vunpack.c.h.b16 %v187
    %v888 = vunpack.c.l.b16 %v188
    %v889 = vunpack.c.h.b16 %v188
    %v890 = vunpack.c.l.b16 %v189
    %v891 = vunpack.c.l.b16 %v190
    %v892 = vunpack.c.h.b16 %v190
    %v893 = vunpack.c.l.b16 %v191
    %v894 = vunpack.c.h.b16 %v191
    %v895 = vunpack.c.l.b16 %v192
    %v896 = vunpack.c.l.b16 %v193
    %v897 = vunpack.c.h.b16 %v193
    %v898 = vunpack.c.l.b16 %v194
    %v899 = vunpack.c.h.b16 %v194
    %v900 = vunpack.c.l.b16 %v195
    %v901 = vunpack.c.l.b16 %v196
    %v902 = vunpack.c.h.b16 %v196
    %v903 = vunpack.c.l.b16 %v197
    %v904 = vunpack.c.h.b16 %v197
    %v905 = vunpack.c.l.b16 %v198
    %v906 = vunpack.c.l.b16 %v199
    %v907 = vunpack.c.h.b16 %v199
    %v908 = vunpack.c.l.b16 %v200
    %v909 = vunpack.c.h.b16 %v200
    %v910 = vunpack.c.l.b16 %v201
    %v911 = vunpack.c.l.b16 %v202
    %v912 = vunpack.c.h.b16 %v202
    %v913 = vunpack.c.l.b16 %v203
    %v914 = vunpack.c.h.b16 %v203
    %v915 = vunpack.c.l.b16 %v204
    %v916 = vunpack.c.l.b16 %v205
    %v917 = vunpack.c.h.b16 %v205
    %v918 = vunpack.c.l.b16 %v206
    %v919 = vunpack.c.h.b16 %v206
    %v920 = vunpack.c.l.b16 %v207
    %v921 = vunpack.c.l.b16 %v208
    %v922 = vunpack.c.h.b16 %v208
    %v923 = vunpack.c.l.b16 %v209
    %v924 = vunpack.c.h.b16 %v209
    %v925 = vunpack.c.l.b16 %v210
    %v926 = vunpack.c.l.b16 %v211
    %v927 = vunpack.c.h.b16 %v211
    %v928 = vunpack.c.l.b16 %v212
    %v929 = vunpack.c.h.b16 %v212
    %v930 = vunpack.c.l.b16 %v213
    %v931 = vunpack.c.l.b16 %v214
    %v932 = vunpack.c.h.b16 %v214
    %v933 = vunpack.c.l.b16 %v215
    %v934 = vunpack.c.h.b16 %v215
    %v935 = vunpack.c.l.b16 %v216
    %v936 = vunpack.c.l.b16 %v217
    %v937 = vunpack.c.h.b16 %v217
    %v938 = vunpack.c.l.b16 %v218
    %v939 = vunpack.c.h.b16 %v218
    %v940 = vunpack.c.l.b16 %v219
    %v941 = vunpack.c.l.b16 %v220
    %v942 = vunpack.c.h.b16 %v220
    %v943 = vunpack.c.l.b16 %v221
    %v944 = vunpack.c.h.b16 %v221
    %v945 = vunpack.c.l.b16 %v222
    %v946 = vunpack.c.l.b16 %v223
    %v947 = vunpack.c.h.b16 %v223
    %v948 = vunpack.c.l.b16 %v224
    %v949 = vunpack.c.h.b16 %v224
    %v950 = vunpack.c.l.b16 %v225
    %v951 = vunpack.c.l.b16 %v226
    %v952 = vunpack.c.h.b16 %v226
    %v953 = vunpack.c.l.b16 %v227
    %v954 = vunpack.c.h.b16 %v227
    %v955 = vunpack.c.l.b16 %v228
    %v956 = vunpack.c.l.b16 %v229
    %v957 = vunpack.c.h.b16 %v229
    %v958 = vunpack.c.l.b16 %v230
    %v959 = vunpack.c.h.b16 %v230
    %v960 = vunpack.c.l.b16 %v231
    %v961 = vunpack.c.l.b16 %v232
    %v962 = vunpack.c.h.b16 %v232
    %v963 = vunpack.c.l.b16 %v233
    %v964 = vunpack.c.h.b16 %v233
    %v965 = vunpack.c.l.b16 %v234
    %v966 = vunpack.c.l.b16 %v235
    %v967 = vunpack.c.h.b16 %v235
    %v968 = vunpack.c.l.b16 %v236
    %v969 = vunpack.c.h.b16 %v236
    %v970 = vunpack.c.l.b16 %v237
    %v971 = vunpack.c.l.b16 %v238
    %v972 = vunpack.c.h.b16 %v238
    %v973 = vunpack.c.l.b16 %v239
    %v974 = vunpack.c.h.b16 %v239
    %v975 = vunpack.c.l.b16 %v240
    %v976 = vunpack.c.l.b16 %v241
    %v977 = vunpack.c.h.b16 %v241
    %v978 = vunpack.c.l.b16 %v242
    %v979 = vunpack.c.h.b16 %v242
    %v980 = vunpack.c.l.b16 %v243
    %v981 = vunpack.c.l.b16 %v244
    %v982 = vunpack.c.h.b16 %v244
    %v983 = vunpack.c.l.b16 %v245
    %v984 = vunpack.c.h.b16 %v245
    %v985 = vunpack.c.l.b16 %v246
    %v986 = vunpack.c.l.b16 %v247
    %v987 = vunpack.c.h.b16 %v247
    %v988 = vunpack.c.l.b16 %v248
    %v989 = vunpack.c.h.b16 %v248
    %v990 = vunpack.c.l.b16 %v249
    %v991 = vunpack.c.l.b16 %v250
    %v992 = vunpack.c.h.b16 %v250
    %v993 = vunpack.c.l.b16 %v251
    %v994 = vunpack.c.h.b16 %v251
    %v995 = vunpack.c.l.b16 %v252
    %v996 = vunpack.c.l.b16 %v253
    %v997 = vunpack.c.h.b16 %v253
    %v998 = vunpack.c.l.b16 %v254
    %v999 = vunpack.c.h.b16 %v254
    %v1000 = vunpack.c.l.b16 %v255
    %v1001 = vunpack.c.l.b16 %v256
    %v1002 = vunpack.c.h.b16 %v256
    %v1003 = vunpack.c.l.b16 %v257
    %v1004 = vunpack.c.h.b16 %v257
    %v1005 = vunpack.c.l.b16 %v258
    %v1006 = vunpack.c.l.b16 %v259
    %v1007 = vunpack.c.h.b16 %v259
    %v1008 = vunpack.c.l.b16 %v260
    %v1009 = vunpack.c.h.b16 %v260
    %v1010 = vunpack.c.l.b16 %v261
    %v1011 = vunpack.c.l.b16 %v262
    %v1012 = vunpack.c.h.b16 %v262
    %v1013 = vunpack.c.l.b16 %v263
    %v1014 = vunpack.c.h.b16 %v263
    %v1015 = vunpack.c.l.b16 %v264
    %v1016 = vunpack.c.l.b16 %v265
    %v1017 = vunpack.c.h.b16 %v265
    %v1018 = vunpack.c.l.b16 %v266
    %v1019 = vunpack.c.h.b16 %v266
    %v1020 = vunpack.c.l.b16 %v267
    %v1021 = vunpack.c.l.b16 %v268
    %v1022 = vunpack.c.h.b16 %v268
    %v1023 = vunpack.c.l.b16 %v269
    %v1024 = vunpack.c.h.b16 %v269
    %v1025 = vunpack.c.l.b16 %v270
    %v1026 = vunpack.c.l.b16 %v271
    %v1027 = vunpack.c.h.b16 %v271
    %v1028 = vunpack.c.l.b16 %v272
    %v1029 = vunpack.c.h.b16 %v272
    %v1030 = vunpack.c.l.b16 %v273
    %v1031 = vunpack.c.l.b16 %v274
    %v1032 = vunpack.c.h.b16 %v274
    %v1033 = vunpack.c.l.b16 %v275
    %v1034 = vunpack.c.h.b16 %v275
    %v1035 = vunpack.c.l.b16 %v276
    %v1036 = vunpack.c.l.b16 %v277
    %v1037 = vunpack.c.h.b16 %v277
    %v1038 = vunpack.c.l.b16 %v278
    %v1039 = vunpack.c.h.b16 %v278
    %v1040 = vunpack.c.l.b16 %v279
    %v1041 = vunpack.c.l.b16 %v280
    %v1042 = vunpack.c.h.b16 %v280
    %v1043 = vunpack.c.l.b16 %v281
    %v1044 = vunpack.c.h.b16 %v281
    %v1045 = vunpack.c.l.b16 %v282
    %v1046 = vunpack.c.l.b16 %v283
    %v1047 = vunpack.c.h.b16 %v283
    %v1048 = vunpack.c.l.b16 %v284
    %v1049 = vunpack.c.h.b16 %v284
    %v1050 = vunpack.c.l.b16 %v285
    %v1051 = vunpack.c.l.b16 %v286
    %v1052 = vunpack.c.h.b16 %v286
    %v1053 = vunpack.c.l.b16 %v287
    %v1054 = vunpack.c.h.b16 %v287
    %v1055 = vunpack.c.l.b16 %v288
    %v1056 = vunpack.c.l.b16 %v289
    %v1057 = vunpack.c.h.b16 %v289
    %v1058 = vunpack.c.l.b16 %v290
    %v1059 = vunpack.c.h.b16 %v290
    %v1060 = vunpack.c.l.b16 %v291
    %v1061 = vunpack.c.l.b16 %v292
    %v1062 = vunpack.c.h.b16 %v292
    %v1063 = vunpack.c.l.b16 %v293
    %v1064 = vunpack.c.h.b16 %v293
    %v1065 = vunpack.c.l.b16 %v294
    %v1066 = vunpack.c.l.b16 %v295
    %v1067 = vunpack.c.h.b16 %v295
    %v1068 = vunpack.c.l.b16 %v296
    %v1069 = vunpack.c.h.b16 %v296
    %v1070 = vunpack.c.l.b16 %v297
    %v1071 = vunpack.c.l.b16 %v298
    %v1072 = vunpack.c.h.b16 %v298
    %v1073 = vunpack.c.l.b16 %v299
    %v1074 = vunpack.c.h.b16 %v299
    %v1075 = vunpack.c.l.b16 %v300
    %v1076 = vunpack.c.l.b16 %v301
    %v1077 = vunpack.c.h.b16 %v301
    %v1078 = vunpack.c.l.b16 %v302
    %v1079 = vunpack.c.h.b16 %v302
    %v1080 = vunpack.c.l.b16 %v303
    %v1081 = vunpack.c.l.b16 %v304
    %v1082 = vunpack.c.h.b16 %v304
    %v1083 = vunpack.c.l.b16 %v305
    %v1084 = vunpack.c.h.b16 %v305
    %v1085 = vunpack.c.l.b16 %v306
    %v1086 = vunpack.c.l.b16 %v307
    %v1087 = vunpack.c.h.b16 %v307
    %v1088 = vunpack.c.l.b16 %v308
    %v1089 = vunpack.c.h.b16 %v308
    %v1090 = vunpack.c.l.b16 %v309
    %v1091 = vunpack.c.l.b16 %v310
    %v1092 = vunpack.c.h.b16 %v310
    %v1093 = vunpack.c.l.b16 %v311
    %v1094 = vunpack.c.h.b16 %v311
    %v1095 = vunpack.c.l.b16 %v312
    %v1096 = vunpack.c.l.b16 %v313
    %v1097 = vunpack.c.h.b16 %v313
    %v1098 = vunpack.c.l.b16 %v314
    %v1099 = vunpack.c.h.b16 %v314
    %v1100 = vunpack.c.l.b16 %v315
    %v1101 = vunpack.c.l.b16 %v316
    %v1102 = vunpack.c.h.b16 %v316
    %v1103 = vunpack.c.l.b16 %v317
    %v1104 = vunpack.c.h.b16 %v317
    %v1105 = vunpack.c.l.b16 %v318
    %v1106 = vunpack.c.l.b16 %v319
    %v1107 = vunpack.c.h.b16 %v319
    %v1108 = vunpack.c.l.b16 %v320
    %v1109 = vunpack.c.h.b16 %v320
    %v1110 = vunpack.c.l.b16 %v321
    %v1111 = vunpack.c.l.b16 %v322
    %v1112 = vunpack.c.h.b16 %v322
    %v1113 = vunpack.c.l.b16 %v323
    %v1114 = vunpack.c.h.b16 %v323
    %v1115 = vunpack.c.l.b16 %v324
    %v1116 = vunpack.c.l.b16 %v325
    %v1117 = vunpack.c.h.b16 %v325
    %v1118 = vunpack.c.l.b16 %v326
    %v1119 = vunpack.c.h.b16 %v326
    %v1120 = vunpack.c.l.b16 %v327
    %v1121 = vunpack.c.l.b16 %v328
    %v1122 = vunpack.c.h.b16 %v328
    %v1123 = vunpack.c.l.b16 %v329
    %v1124 = vunpack.c.h.b16 %v329
    %v1125 = vunpack.c.l.b16 %v330
    %v1126 = vunpack.c.l.b16 %v331
    %v1127 = vunpack.c.h.b16 %v331
    %v1128 = vunpack.c.l.b16 %v332
    %v1129 = vunpack.c.h.b16 %v332
    %v1130 = vunpack.c.l.b16 %v333
    %v1131 = vunpack.c.l.b16 %v334
    %v1132 = vunpack.c.h.b16 %v334
    %v1133 = vunpack.c.l.b16 %v335
    %v1134 = vunpack.c.h.b16 %v335
    %v1135 = vunpack.c.l.b16 %v336
    %v1136 = vunpack.c.l.b16 %v337
    %v1137 = vunpack.c.h.b16 %v337
    %v1138 = vunpack.c.l.b16 %v338
    %v1139 = vunpack.c.h.b16 %v338
    %v1140 = vunpack.c.l.b16 %v339
    %v1141 = vunpack.c.l.b16 %v340
    %v1142 = vunpack.c.h.b16 %v340
    %v1143 = vunpack.c.l.b16 %v341
    %v1144 = vunpack.c.h.b16 %v341
    %v1145 = vunpack.c.l.b16 %v342
    %v1146 = vunpack.c.l.b16 %v343
    %v1147 = vunpack.c.h.b16 %v343
    %v1148 = vunpack.c.l.b16 %v344
    %v1149 = vunpack.c.h.b16 %v344
    %v1150 = vunpack.c.l.b16 %v345
    %v1151 = vunpack.c.l.b16 %v346
    %v1152 = vunpack.c.h.b16 %v346
    %v1153 = vunpack.c.l.b16 %v347
    %v1154 = vunpack.c.h.b16 %v347
    %v1155 = vunpack.c.l.b16 %v348
    %v1156 = vunpack.c.l.b16 %v349
    %v1157 = vunpack.c.h.b16 %v349
    %v1158 = vunpack.c.l.b16 %v350
    %v1159 = vunpack.c.h.b16 %v350
    %v1160 = vunpack.c.l.b16 %v351
    %v1161 = vunpack.c.l.b16 %v352
    %v1162 = vunpack.c.h.b16 %v352
    %v1163 = vunpack.c.l.b16 %v353
    %v1164 = vunpack.c.h.b16 %v353
    %v1165 = vunpack.c.l.b16 %v354
    %v1166 = vunpack.c.l.b16 %v355
    %v1167 = vunpack.c.h.b16 %v355
    %v1168 = vunpack.c.l.b16 %v356
    %v1169 = vunpack.c.h.b16 %v356
    %v1170 = vunpack.c.l.b16 %v357
    %v1171 = vunpack.c.l.b16 %v358
    %v1172 = vunpack.c.h.b16 %v358
    %v1173 = vunpack.c.l.b16 %v359
    %v1174 = vunpack.c.h.b16 %v359
    %v1175 = vunpack.c.l.b16 %v360
    %v1176 = vunpack.c.l.b16 %v361
    %v1177 = vunpack.c.h.b16 %v361
    %v1178 = vunpack.c.l.b16 %v362
    %v1179 = vunpack.c.h.b16 %v362
    %v1180 = vunpack.c.l.b16 %v363
    %v1181 = vunpack.c.l.b16 %v364
    %v1182 = vunpack.c.h.b16 %v364
    %v1183 = vunpack.c.l.b16 %v365
    %v1184 = vunpack.c.h.b16 %v365
    %v1185 = vunpack.c.l.b16 %v366
    %v1186 = vunpack.c.l.b16 %v367
    %v1187 = vunpack.c.h.b16 %v367
    %v1188 = vunpack.c.l.b16 %v368
    %v1189 = vunpack.c.h.b16 %v368
    %v1190 = vunpack.c.l.b16 %v369
    %v1191 = vunpack.c.l.b16 %v370
    %v1192 = vunpack.c.h.b16 %v370
    %v1193 = vunpack.c.l.b16 %v371
    %v1194 = vunpack.c.h.b16 %v371
    %v1195 = vunpack.c.l.b16 %v372
    %v1196 = vunpack.c.l.b16 %v373
    %v1197 = vunpack.c.h.b16 %v373
    %v1198 = vunpack.c.l.b16 %v374
    %v1199 = vunpack.c.h.b16 %v374
    %v1200 = vunpack.c.l.b16 %v375
    %v1201 = vunpack.c.l.b16 %v376
    %v1202 = vunpack.c.h.b16 %v376
    %v1203 = vunpack.c.l.b16 %v377
    %v1204 = vunpack.c.h.b16 %v377
    %v1205 = vunpack.c.l.b16 %v378
    %v1206 = vunpack.c.l.b16 %v379
    %v1207 = vunpack.c.h.b16 %v379
    %v1208 = vunpack.c.l.b16 %v380
    %v1209 = vunpack.c.h.b16 %v380
    %v1210 = vunpack.c.l.b16 %v381
    %v1211 = vunpack.c.l.b16 %v382
    %v1212 = vunpack.c.h.b16 %v382
    %v1213 = vunpack.c.l.b16 %v383
    %v1214 = vunpack.c.h.b16 %v383
    %v1215 = vunpack.c.l.b16 %v384
    %v1216 = vunpack.c.l.b16 %v385
    %v1217 = vunpack.c.h.b16 %v385
    %v1218 = vunpack.c.l.b16 %v386
    %v1219 = vunpack.c.h.b16 %v386
    %v1220 = vunpack.c.l.b16 %v387
    %v1221 = vunpack.c.l.b16 %v388
    %v1222 = vunpack.c.h.b16 %v388
    %v1223 = vunpack.c.l.b16 %v389
    %v1224 = vunpack.c.h.b16 %v389
    %v1225 = vunpack.c.l.b16 %v390
    %v1226 = vunpack.c.l.b16 %v391
    %v1227 = vunpack.c.h.b16 %v391
    %v1228 = vunpack.c.l.b16 %v392
    %v1229 = vunpack.c.h.b16 %v392
    %v1230 = vunpack.c.l.b16 %v393
    %v1231 = vunpack.c.l.b16 %v394
    %v1232 = vunpack.c.h.b16 %v394
    %v1233 = vunpack.c.l.b16 %v395
    %v1234 = vunpack.c.h.b16 %v395
    %v1235 = vunpack.c.l.b16 %v396
    %v1236 = vunpack.c.l.b16 %v397
    %v1237 = vunpack.c.h.b16 %v397
    %v1238 = vunpack.c.l.b16 %v398
    %v1239 = vunpack.c.h.b16 %v398
    %v1240 = vunpack.c.l.b16 %v399
    %v1241 = vunpack.c.l.b16 %v400
    %v1242 = vunpack.c.h.b16 %v400
    %v1243 = vunpack.c.l.b16 %v401
    %v1244 = vunpack.c.h.b16 %v401
    %v1245 = vunpack.c.l.b16 %v402
    %v1246 = vunpack.c.l.b16 %v403
    %v1247 = vunpack.c.h.b16 %v403
    %v1248 = vunpack.c.l.b16 %v404
    %v1249 = vunpack.c.h.b16 %v404
    %v1250 = vunpack.c.l.b16 %v405
    %v1251 = vunpack.c.l.b16 %v406
    %v1252 = vunpack.c.h.b16 %v406
    %v1253 = vunpack.c.l.b16 %v407
    %v1254 = vunpack.c.h.b16 %v407
    %v1255 = vunpack.c.l.b16 %v408
    %v1256 = vunpack.c.l.b16 %v409
    %v1257 = vunpack.c.h.b16 %v409
    %v1258 = vunpack.c.l.b16 %v410
    %v1259 = vunpack.c.h.b16 %v410
    %v1260 = vunpack.c.l.b16 %v411
    %v1261 = vunpack.c.l.b16 %v412
    %v1262 = vunpack.c.h.b16 %v412
    %v1263 = vunpack.c.l.b16 %v413
    %v1264 = vunpack.c.h.b16 %v413
    %v1265 = vunpack.c.l.b16 %v414
    %v1266 = vunpack.c.l.b16 %v415
    %v1267 = vunpack.c.h.b16 %v415
    %v1268 = vunpack.c.l.b16 %v416
    %v1269 = vunpack.c.h.b16 %v416
    %v1270 = vunpack.c.l.b16 %v417
    %v1271 = vunpack.c.l.b16 %v418
    %v1272 = vunpack.c.h.b16 %v418
    %v1273 = vunpack.c.l.b16 %v419
    %v1274 = vunpack.c.h.b16 %v419
    %v1275 = vunpack.c.l.b16 %v420
    %v1276 = vunpack.c.l.b16 %v421
    %v1277 = vunpack.c.h.b16 %v421
    %v1278 = vunpack.c.l.b16 %v422
    %v1279 = vunpack.c.h.b16 %v422
    %v1280 = vunpack.c.l.b16 %v423
    %v1281 = vunpack.c.l.b16 %v424
    %v1282 = vunpack.c.h.b16 %v424
    %v1283 = vunpack.c.l.b16 %v425
    %v1284 = vunpack.c.h.b16 %v425
    %v1285 = vunpack.c.l.b16 %v426
    %v1286 = vunpack.c.l.b16 %v427
    %v1287 = vunpack.c.h.b16 %v427
    %v1288 = vunpack.c.l.b16 %v428
    %v1289 = vunpack.c.h.b16 %v428
    %v1290 = vunpack.c.l.b16 %v429
    %v1291 = vunpack.c.l.b16 %v430
    %v1292 = vunpack.c.h.b16 %v430
    %v1293 = vunpack.c.l.b16 %v431
    %v1294 = vunpack.c.h.b16 %v431
    %v1295 = vunpack.c.l.b16 %v432
    %v1296 = vunpack.c.l.b16 %v433
    %v1297 = vunpack.c.h.b16 %v433
    %v1298 = vunpack.c.l.b16 %v434
    %v1299 = vunpack.c.h.b16 %v434
    %v1300 = vunpack.c.l.b16 %v435
    %v1301 = vunpack.c.l.b16 %v436
    %v1302 = vunpack.c.h.b16 %v436
    %v1303 = vunpack.c.l.b16 %v437
    %v1304 = vunpack.c.h.b16 %v437
    %v1305 = vunpack.c.l.b16 %v438
    %v1306 = vunpack.c.l.b16 %v439
    %v1307 = vunpack.c.h.b16 %v439
    %v1308 = vunpack.c.l.b16 %v440
    %v1309 = vunpack.c.h.b16 %v440
    %v1310 = vunpack.c.l.b16 %v441
    %v1311 = vunpack.c.l.b16 %v442
    %v1312 = vunpack.c.h.b16 %v442
    %v1313 = vunpack.c.l.b16 %v443
    %v1314 = vunpack.c.h.b16 %v443
    %v1315 = vunpack.c.l.b16 %v444
    %v1316 = vunpack.c.l.b16 %v445
    %v1317 = vunpack.c.h.b16 %v445
    %v1318 = vunpack.c.l.b16 %v446
    %v1319 = vunpack.c.h.b16 %v446
    %v1320 = vunpack.c.l.b16 %v447
    %v1321 = vunpack.c.l.b16 %v448
    %v1322 = vunpack.c.h.b16 %v448
    %v1323 = vunpack.c.l.b16 %v449
    %v1324 = vunpack.c.h.b16 %v449
    %v1325 = vunpack.c.l.b16 %v450
    %v1326 = vunpack.c.l.b16 %v451
    %v1327 = vunpack.c.h.b16 %v451
    %v1328 = vunpack.c.l.b16 %v452
    %v1329 = vunpack.c.h.b16 %v452
    %v1330 = vunpack.c.l.b16 %v453
    %v1331 = vunpack.c.l.b16 %v454
    %v1332 = vunpack.c.h.b16 %v454
    %v1333 = vunpack.c.l.b16 %v455
    %v1334 = vunpack.c.h.b16 %v455
    %v1335 = vunpack.c.l.b16 %v456
    %v1336 = vunpack.c.l.b16 %v457
    %v1337 = vunpack.c.h.b16 %v457
    %v1338 = vunpack.c.l.b16 %v458
    %v1339 = vunpack.c.h.b16 %v458
    %v1340 = vunpack.c.l.b16 %v459
    %v1341 = vunpack.c.l.b16 %v460
    %v1342 = vunpack.c.h.b16 %v460
    %v1343 = vunpack.c.l.b16 %v461
    %v1344 = vunpack.c.h.b16 %v461
    %v1345 = vunpack.c.l.b16 %v462
    %v1346 = vunpack.c.l.b16 %v463
    %v1347 = vunpack.c.h.b16 %v463
    %v1348 = vunpack.c.l.b16 %v464
    %v1349 = vunpack.c.h.b16 %v464
    %v1350 = vunpack.c.l.b16 %v465
    %v1351 = vunpack.c.l.b16 %v466
    %v1352 = vunpack.c.h.b16 %v466
    %v1353 = vunpack.c.l.b16 %v467
    %v1354 = vunpack.c.h.b16 %v467
    %v1355 = vunpack.c.l.b16 %v468
    %v1356 = vunpack.c.l.b16 %v469
    %v1357 = vunpack.c.h.b16 %v469
    %v1358 = vunpack.c.l.b16 %v470
    %v1359 = vunpack.c.h.b16 %v470
    %v1360 = vunpack.c.l.b16 %v471
    %v1361 = vunpack.c.l.b16 %v472
    %v1362 = vunpack.c.h.b16 %v472
    %v1363 = vunpack.c.l.b16 %v473
    %v1364 = vunpack.c.h.b16 %v473
    %v1365 = vunpack.c.l.b16 %v474
    %v1366 = vunpack.c.l.b16 %v475
    %v1367 = vunpack.c.h.b16 %v475
    %v1368 = vunpack.c.l.b16 %v476
    %v1369 = vunpack.c.h.b16 %v476
    %v1370 = vunpack.c.l.b16 %v477
    %v1371 = vunpack.c.l.b16 %v478
    %v1372 = vunpack.c.h.b16 %v478
    %v1373 = vunpack.c.l.b16 %v479
    %v1374 = vunpack.c.h.b16 %v479
    %v1375 = vunpack.c.l.b16 %v480
    %v1376 = vunpack.c.l.b16 %v481
    %v1377 = vunpack.c.h.b16 %v481
    %v1378 = vunpack.c.l.b16 %v482
    %v1379 = vunpack.c.h.b16 %v482
    %v1380 = vunpack.c.l.b16 %v483
    %v1381 = vunpack.c.l.b16 %v484
    %v1382 = vunpack.c.h.b16 %v484
    %v1383 = vunpack.c.l.b16 %v485
    %v1384 = vunpack.c.h.b16 %v485
    %v1385 = vunpack.c.l.b16 %v486
    %v1386 = vunpack.c.l.b16 %v487
    %v1387 = vunpack.c.h.b16 %v487
    %v1388 = vunpack.c.l.b16 %v488
    %v1389 = vunpack.c.h.b16 %v488
    %v1390 = vunpack.c.l.b16 %v489
    %v1391 = vunpack.c.l.b16 %v490
    %v1392 = vunpack.c.h.b16 %v490
    %v1393 = vunpack.c.l.b16 %v491
    %v1394 = vunpack.c.h.b16 %v491
    %v1395 = vunpack.c.l.b16 %v492
    %v1396 = vunpack.c.l.b16 %v493
    %v1397 = vunpack.c.h.b16 %v493
    %v1398 = vunpack.c.l.b16 %v494
    %v1399 = vunpack.c.h.b16 %v494
    %v1400 = vunpack.c.l.b16 %v495
    %v1401 = vunpack.c.l.b16 %v496
    %v1402 = vunpack.c.h.b16 %v496
    %v1403 = vunpack.c.l.b16 %v497
    %v1404 = vunpack.c.h.b16 %v497
    %v1405 = vunpack.c.l.b16 %v498
    %v1406 = vunpack.c.l.b16 %v499
    %v1407 = vunpack.c.h.b16 %v499
    %v1408 = vunpack.c.l.b16 %v500
    %v1409 = vunpack.c.h.b16 %v500
    %v1410 = vunpack.c.l.b16 %v501
    %v1411 = vunpack.c.l.b16 %v502
    %v1412 = vunpack.c.h.b16 %v502
    %v1413 = vunpack.c.l.b16 %v503
    %v1414 = vunpack.c.h.b16 %v503
    %v1415 = vunpack.c.l.b16 %v504
    %v1416 = vunpack.c.l.b16 %v505
    %v1417 = vunpack.c.h.b16 %v505
    %v1418 = vunpack.c.l.b16 %v506
    %v1419 = vunpack.c.h.b16 %v506
    %v1420 = vunpack.c.l.b16 %v507
    %v1421 = vunpack.c.l.b16 %v508
    %v1422 = vunpack.c.h.b16 %v508
    %v1423 = vunpack.c.l.b16 %v509
    %v1424 = vunpack.c.h.b16 %v509
    %v1425 = vunpack.c.l.b16 %v510
    %v1426 = vunpack.c.l.b16 %v511
    %v1427 = vunpack.c.h.b16 %v511
    %v1428 = vunpack.c.l.b16 %v512
    %v1429 = vunpack.c.h.b16 %v512
    %v1430 = vunpack.c.l.b16 %v513
    %v1431 = vunpack.c.l.b16 %v514
    %v1432 = vunpack.c.h.b16 %v514
    %v1433 = vunpack.c.l.b16 %v515
    %v1434 = vunpack.c.h.b16 %v515
    %v1435 = vunpack.c.l.b16 %v516
    %v1436 = vunpack.c.l.b16 %v517
    %v1437 = vunpack.c.h.b16 %v517
    %v1438 = vunpack.c.l.b16 %v518
    %v1439 = vunpack.c.h.b16 %v518
    %v1440 = vunpack.c.l.b16 %v519
    %v1441 = vunpack.c.l.b16 %v520
    %v1442 = vunpack.c.h.b16 %v520
    %v1443 = vunpack.c.l.b16 %v521
    %v1444 = vunpack.c.h.b16 %v521
    %v1445 = vunpack.c.l.b16 %v522
    %v1446 = vpack.c.b16 %v891, %v886
    %v1447 = vpack.c.b16 %v892, %v887
    %v1448 = vpack.c.b16 %v893, %v888
    %v1449 = vpack.c.b16 %v894, %v889
    %v1450 = vpack.c.b16 %v895, %v890
    %v1451 = vpack.c.b16 %v901, %v896
    %v1452 = vpack.c.b16 %v902, %v897
    %v1453 = vpack.c.b16 %v903, %v898
    %v1454 = vpack.c.b16 %v904, %v899
    %v1455 = vpack.c.b16 %v905, %v900
    %v1456 = vpack.c.b16 %v911, %v906
    %v1457 = vpack.c.b16 %v912, %v907
    %v1458 = vpack.c.b16 %v913, %v908
    %v1459 = vpack.c.b16 %v914, %v909
    %v1460 = vpack.c.b16 %v915, %v910
    %v1461 = vpack.c.b16 %v921, %v916
    %v1462 = vpack.c.b16 %v922, %v917
    %v1463 = vpack.c.b16 %v923, %v918
    %v1464 = vpack.c.b16 %v924, %v919
    %v1465 = vpack.c.b16 %v925, %v920
    %v1466 = vpack.c.b16 %v931, %v926
    %v1467 = vpack.c.b16 %v932, %v927
    %v1468 = vpack.c.b16 %v933, %v928
    %v1469 = vpack.c.b16 %v934, %v929
    %v1470 = vpack.c.b16 %v935, %v930
    %v1471 = vpack.c.b16 %v941, %v936
    %v1472 = vpack.c.b16 %v942, %v937
    %v1473 = vpack.c.b16 %v943, %v938
    %v1474 = vpack.c.b16 %v944, %v939
    %v1475 = vpack.c.b16 %v945, %v940
    %v1476 = vpack.c.b16 %v951, %v946
    %v1477 = vpack.c.b16 %v952, %v947
    %v1478 = vpack.c.b16 %v953, %v948
    %v1479 = vpack.c.b16 %v954, %v949
    %v1480 = vpack.c.b16 %v955, %v950
    %v1481 = vpack.c.b16 %v961, %v956
    %v1482 = vpack.c.b16 %v962, %v957
    %v1483 = vpack.c.b16 %v963, %v958
    %v1484 = vpack.c.b16 %v964, %v959
    %v1485 = vpack.c.b16 %v965, %v960
    %v1486 = vpack.c.b16 %v971, %v966
    %v1487 = vpack.c.b16 %v972, %v967
    %v1488 = vpack.c.b16 %v973, %v968
    %v1489 = vpack.c.b16 %v974, %v969
    %v1490 = vpack.c.b16 %v975, %v970
    %v1491 = vpack.c.b16 %v981, %v976
    %v1492 = vpack.c.b16 %v982, %v977
    %v1493 = vpack.c.b16 %v983, %v978
    %v1494 = vpack.c.b16 %v984, %v979
    %v1495 = vpack.c.b16 %v985, %v980
    %v1496 = vpack.c.b16 %v991, %v986
    %v1497 = vpack.c.b16 %v992, %v987
    %v1498 = vpack.c.b16 %v993, %v988
    %v1499 = vpack.c.b16 %v994, %v989
    %v1500 = vpack.c.b16 %v995, %v990
    %v1501 = vpack.c.b16 %v1001, %v996
    %v1502 = vpack.c.b16 %v1002, %v997
    %v1503 = vpack.c.b16 %v1003, %v998
    %v1504 = vpack.c.b16 %v1004, %v999
    %v1505 = vpack.c.b16 %v1005, %v1000
    %v1506 = vpack.c.b16 %v1011, %v1006
    %v1507 = vpack.c.b16 %v1012, %v1007
    %v1508 = vpack.c.b16 %v1013, %v1008
    %v1509 = vpack.c.b16 %v1014, %v1009
    %v1510 = vpack.c.b16 %v1015, %v1010
    %v1511 = vpack.c.b16 %v1021, %v1016
    %v1512 = vpack.c.b16 %v1022, %v1017
    %v1513 = vpack.c.b16 %v1023, %v1018
    %v1514 = vpack.c.b16 %v1024, %v1019
    %v1515 = vpack.c.b16 %v1025, %v1020
    %v1516 = vpack.c.b16 %v1031, %v1026
    %v1517 = vpack.c.b16 %v1032, %v1027
    %v1518 = vpack.c.b16 %v1033, %v1028
    %v1519 = vpack.c.b16 %v1034, %v1029
    %v1520 = vpack.c.b16 %v1035, %v1030
    %v1521 = vpack.c.b16 %v1041, %v1036
    %v1522 = vpack.c.b16 %v1042, %v1037
    %v1523 = vpack.c.b16 %v1043, %v1038
    %v1524 = vpack.c.b16 %v1044, %v1039
    %v1525 = vpack.c.b16 %v1045, %v1040
    %v1526 = vpack.c.b16 %v1051, %v1046
    %v1527 = vpack.c.b16 %v1052, %v1047
    %v1528 = vpack.c.b16 %v1053, %v1048
    %v1529 = vpack.c.b16 %v1054, %v1049
    %v1530 = vpack.c.b16 %v1055, %v1050
    %v1531 = vpack.c.b16 %v1061, %v1056
    %v1532 = vpack.c.b16 %v1062, %v1057
    %v1533 = vpack.c.b16 %v1063, %v1058
    %v1534 = vpack.c.b16 %v1064, %v1059
    %v1535 = vpack.c.b16 %v1065, %v1060
    %v1536 = vpack.c.b16 %v1071, %v1066
    %v1537 = vpack.c.b16 %v1072, %v1067
    %v1538 = vpack.c.b16 %v1073, %v1068
    %v1539 = vpack.c.b16 %v1074, %v1069
    %v1540 = vpack.c.b16 %v1075, %v1070
    %v1541 = vpack.c.b16 %v1081, %v1076
    %v1542 = vpack.c.b16 %v1082, %v1077
    %v1543 = vpack.c.b16 %v1083, %v1078
    %v1544 = vpack.c.b16 %v1084, %v1079
    %v1545 = vpack.c.b16 %v1085, %v1080
    %v1546 = vpack.c.b16 %v1091, %v1086
    %v1547 = vpack.c.b16 %v1092, %v1087
    %v1548 = vpack.c.b16 %v1093, %v1088
    %v1549 = vpack.c.b16 %v1094, %v1089
    %v1550 = vpack.c.b16 %v1095, %v1090
    %v1551 = vpack.c.b16 %v1101, %v1096
    %v1552 = vpack.c.b16 %v1102, %v1097
    %v1553 = vpack.c.b16 %v1103, %v1098
    %v1554 = vpack.c.b16 %v1104, %v1099
    %v1555 = vpack.c.b16 %v1105, %v1100
    %v1556 = vpack.c.b16 %v1111, %v1106
    %v1557 = vpack.c.b16 %v1112, %v1107
    %v1558 = vpack.c.b16 %v1113, %v1108
    %v1559 = vpack.c.b16 %v1114, %v1109
    %v1560 = vpack.c.b16 %v1115, %v1110
    %v1561 = vpack.c.b16 %v1121, %v1116
    %v1562 = vpack.c.b16 %v1122, %v1117
    %v1563 = vpack.c.b16 %v1123, %v1118
    %v1564 = vpack.c.b16 %v1124, %v1119
    %v1565 = vpack.c.b16 %v1125, %v1120
    %v1566 = vpack.c.b16 %v1131, %v1126
    %v1567 = vpack.c.b16 %v1132, %v1127
    %v1568 = vpack.c.b16 %v1133, %v1128
    %v1569 = vpack.c.b16 %v1134, %v1129
    %v1570 = vpack.c.b16 %v1135, %v1130
    %v1571 = vpack.c.b16 %v1141, %v1136
    %v1572 = vpack.c.b16 %v1142, %v1137
    %v1573 = vpack.c.b16 %v1143, %v1138
    %v1574 = vpack.c.b16 %v1144, %v1139
    %v1575 = vpack.c.b16 %v1145, %v1140
    %v1576 = vpack.c.b16 %v1151, %v1146
    %v1577 = vpack.c.b16 %v1152, %v1147
    %v1578 = vpack.c.b16 %v1153, %v1148
    %v1579 = vpack.c.b16 %v1154, %v1149
    %v1580 = vpack.c.b16 %v1155, %v1150
    %v1581 = vpack.c.b16 %v1161, %v1156
    %v1582 = vpack.c.b16 %v1162, %v1157
    %v1583 = vpack.c.b16 %v1163, %v1158
    %v1584 = vpack.c.b16 %v1164, %v1159
    %v1585 = vpack.c.b16 %v1165, %v1160
    %v1586 = vpack.c.b16 %v1171, %v1166
    %v1587 = vpack.c.b16 %v1172, %v1167
    %v1588 = vpack.c.b16 %v1173, %v1168
    %v1589 = vpack.c.b16 %v1174, %v1169
    %v1590 = vpack.c.b16 %v1175, %v1170
    %v1591 = vpack.c.b16 %v1181, %v1176
    %v1592 = vpack.c.b16 %v1182, %v1177
    %v1593 = vpack.c.b16 %v1183, %v1178
    %v1594 = vpack.c.b16 %v1184, %v1179
    %v1595 = vpack.c.b16 %v1185, %v1180
    %v1596 = vpack.c.b16 %v1191, %v1186
    %v1597 = vpack.c.b16 %v1192, %v1187
    %v1598 = vpack.c.b16 %v1193, %v1188
    %v1599 = vpack.c.b16 %v1194, %v1189
    %v1600 = vpack.c.b16 %v1195, %v1190
    %v1601 = vpack.c.b16 %v1201, %v1196
    %v1602 = vpack.c.b16 %v1202, %v1197
    %v1603 = vpack.c.b16 %v1203, %v1198
    %v1604 = vpack.c.b16 %v1204, %v1199
    %v1605 = vpack.c.b16 %v1205, %v1200
    %v1606 = vpack.c.b16 %v1211, %v1206
    %v1607 = vpack.c.b16 %v1212, %v1207
    %v1608 = vpack.c.b16 %v1213, %v1208
    %v1609 = vpack.c.b16 %v1214, %v1209
    %v1610 = vpack.c.b16 %v1215, %v1210
    %v1611 = vpack.c.b16 %v1221, %v1216
    %v1612 = vpack.c.b16 %v1222, %v1217
    %v1613 = vpack.c.b16 %v1223, %v1218
    %v1614 = vpack.c.b16 %v1224, %v1219
    %v1615 = vpack.c.b16 %v1225, %v1220
    %v1616 = vpack.c.b16 %v1231, %v1226
    %v1617 = vpack.c.b16 %v1232, %v1227
    %v1618 = vpack.c.b16 %v1233, %v1228
    %v1619 = vpack.c.b16 %v1234, %v1229
    %v1620 = vpack.c.b16 %v1235, %v1230
    %v1621 = vpack.c.b16 %v1241, %v1236
    %v1622 = vpack.c.b16 %v1242, %v1237
    %v1623 = vpack.c.b16 %v1243, %v1238
    %v1624 = vpack.c.b16 %v1244, %v1239
    %v1625 = vpack.c.b16 %v1245, %v1240
    %v1626 = vpack.c.b16 %v1251, %v1246
    %v1627 = vpack.c.b16 %v1252, %v1247
    %v1628 = vpack.c.b16 %v1253, %v1248
    %v1629 = vpack.c.b16 %v1254, %v1249
    %v1630 = vpack.c.b16 %v1255, %v1250
    %v1631 = vpack.c.b16 %v1261, %v1256
    %v1632 = vpack.c.b16 %v1262, %v1257
    %v1633 = vpack.c.b16 %v1263, %v1258
    %v1634 = vpack.c.b16 %v1264, %v1259
    %v1635 = vpack.c.b16 %v1265, %v1260
    %v1636 = vpack.c.b16 %v1271, %v1266
    %v1637 = vpack.c.b16 %v1272, %v1267
    %v1638 = vpack.c.b16 %v1273, %v1268
    %v1639 = vpack.c.b16 %v1274, %v1269
    %v1640 = vpack.c.b16 %v1275, %v1270
    %v1641 = vpack.c.b16 %v1281, %v1276
    %v1642 = vpack.c.b16 %v1282, %v1277
    %v1643 = vpack.c.b16 %v1283, %v1278
    %v1644 = vpack.c.b16 %v1284, %v1279
    %v1645 = vpack.c.b16 %v1285, %v1280
    %v1646 = vpack.c.b16 %v1291, %v1286
    %v1647 = vpack.c.b16 %v1292, %v1287
    %v1648 = vpack.c.b16 %v1293, %v1288
    %v1649 = vpack.c.b16 %v1294, %v1289
    %v1650 = vpack.c.b16 %v1295, %v1290
    %v1651 = vpack.c.b16 %v1301, %v1296
    %v1652 = vpack.c.b16 %v1302, %v1297
    %v1653 = vpack.c.b16 %v1303, %v1298
    %v1654 = vpack.c.b16 %v1304, %v1299
    %v1655 = vpack.c.b16 %v1305, %v1300
    %v1656 = vpack.c.b16 %v1311, %v1306
    %v1657 = vpack.c.b16 %v1312, %v1307
    %v1658 = vpack.c.b16 %v1313, %v1308
    %v1659 = vpack.c.b16 %v1314, %v1309
    %v1660 = vpack.c.b16 %v1315, %v1310
    %v1661 = vpack.c.b16 %v1321, %v1316
    %v1662 = vpack.c.b16 %v1322, %v1317
    %v1663 = vpack.c.b16 %v1323, %v1318
    %v1664 = vpack.c.b16 %v1324, %v1319
    %v1665 = vpack.c.b16 %v1325, %v1320
    %v1666 = vpack.c.b16 %v1331, %v1326
    %v1667 = vpack.c.b16 %v1332, %v1327
    %v1668 = vpack.c.b16 %v1333, %v1328
    %v1669 = vpack.c.b16 %v1334, %v1329
    %v1670 = vpack.c.b16 %v1335, %v1330
    %v1671 = vpack.c.b16 %v1341, %v1336
    %v1672 = vpack.c.b16 %v1342, %v1337
    %v1673 = vpack.c.b16 %v1343, %v1338
    %v1674 = vpack.c.b16 %v1344, %v1339
    %v1675 = vpack.c.b16 %v1345, %v1340
    %v1676 = vpack.c.b16 %v1351, %v1346
    %v1677 = vpack.c.b16 %v1352, %v1347
    %v1678 = vpack.c.b16 %v1353, %v1348
    %v1679 = vpack.c.b16 %v1354, %v1349
    %v1680 = vpack.c.b16 %v1355, %v1350
    %v1681 = vpack.c.b16 %v1361, %v1356
    %v1682 = vpack.c.b16 %v1362, %v1357
    %v1683 = vpack.c.b16 %v1363, %v1358
    %v1684 = vpack.c.b16 %v1364, %v1359
    %v1685 = vpack.c.b16 %v1365, %v1360
    %v1686 = vpack.c.b16 %v1371, %v1366
    %v1687 = vpack.c.b16 %v1372, %v1367
    %v1688 = vpack.c.b16 %v1373, %v1368
    %v1689 = vpack.c.b16 %v1374, %v1369
    %v1690 = vpack.c.b16 %v1375, %v1370
    %v1691 = vpack.c.b16 %v1381, %v1376
    %v1692 = vpack.c.b16 %v1382, %v1377
    %v1693 = vpack.c.b16 %v1383, %v1378
    %v1694 = vpack.c.b16 %v1384, %v1379
    %v1695 = vpack.c.b16 %v1385, %v1380
    %v1696 = vpack.c.b16 %v1391, %v1386
    %v1697 = vpack.c.b16 %v1392, %v1387
    %v1698 = vpack.c.b16 %v1393, %v1388
    %v1699 = vpack.c.b16 %v1394, %v1389
    %v1700 = vpack.c.b16 %v1395, %v1390
    %v1701 = vpack.c.b16 %v1401, %v1396
    %v1702 = vpack.c.b16 %v1402, %v1397
    %v1703 = vpack.c.b16 %v1403, %v1398
    %v1704 = vpack.c.b16 %v1404, %v1399
    %v1705 = vpack.c.b16 %v1405, %v1400
    %v1706 = vpack.c.b16 %v1411, %v1406
    %v1707 = vpack.c.b16 %v1412, %v1407
    %v1708 = vpack.c.b16 %v1413, %v1408
    %v1709 = vpack.c.b16 %v1414, %v1409
    %v1710 = vpack.c.b16 %v1415, %v1410
    %v1711 = vpack.c.b16 %v1421, %v1416
    %v1712 = vpack.c.b16 %v1422, %v1417
    %v1713 = vpack.c.b16 %v1423, %v1418
    %v1714 = vpack.c.b16 %v1424, %v1419
    %v1715 = vpack.c.b16 %v1425, %v1420
    %v1716 = vpack.c.b16 %v1431, %v1426
    %v1717 = vpack.c.b16 %v1432, %v1427
    %v1718 = vpack.c.b16 %v1433, %v1428
    %v1719 = vpack.c.b16 %v1434, %v1429
    %v1720 = vpack.c.b16 %v1435, %v1430
    %v1721 = vpack.c.b16 %v1441, %v1436
    %v1722 = vpack.c.b16 %v1442, %v1437
    %v1723 = vpack.c.b16 %v1443, %v1438
    %v1724 = vpack.c.b16 %v1444, %v1439
    %v1725 = vpack.c.b16 %v1445, %v1440
    %2006 = vmatprep.subr.bf16.mxu0 %v1447
    %2007 = vmatpush1.bf16.msra.mxu0 %v1446
    %2008 = vmatprep.subr.bf16.mxu0 %v1452
    %2009 = vmatpush1.bf16.msra.mxu0 %v1451
    %2010 = vmatprep.subr.bf16.mxu0 %v1457
    %2011 = vmatpush1.bf16.msra.mxu0 %v1456
    %2012 = vmatprep.subr.bf16.mxu0 %v1462
    %2013 = vmatpush1.bf16.msra.mxu0 %v1461
    %2014 = vmatprep.subr.bf16.mxu0 %v1467
    %2015 = vmatpush1.bf16.msra.mxu0 %v1466
    %2016 = vmatprep.subr.bf16.mxu0 %v1472
    %2017 = vmatpush1.bf16.msra.mxu0 %v1471
    %2018 = vmatprep.subr.bf16.mxu0 %v1477
    %2019 = vmatpush1.bf16.msra.mxu0 %v1476
    %2020 = vmatprep.subr.bf16.mxu0 %v1482
    %2021 = vmatpush1.bf16.msra.mxu0 %v1481
    %2022 = vmatprep.subr.bf16.mxu0 %v1487
    %2023 = vmatpush1.bf16.msra.mxu0 %v1486
    %2024 = vmatprep.subr.bf16.mxu0 %v1492
    %2025 = vmatpush1.bf16.msra.mxu0 %v1491
    %2026 = vmatprep.subr.bf16.mxu0 %v1497
    %2027 = vmatpush1.bf16.msra.mxu0 %v1496
    %2028 = vmatprep.subr.bf16.mxu0 %v1502
    %2029 = vmatpush1.bf16.msra.mxu0 %v1501
    %2030 = vmatprep.subr.bf16.mxu0 %v1507
    %2031 = vmatpush1.bf16.msra.mxu0 %v1506
    %2032 = vmatprep.subr.bf16.mxu0 %v1512
    %2033 = vmatpush1.bf16.msra.mxu0 %v1511
    %2034 = vmatprep.subr.bf16.mxu0 %v1517
    %2035 = vmatpush1.bf16.msra.mxu0 %v1516
    %2036 = vmatprep.subr.bf16.mxu0 %v1522
    %2037 = vmatpush1.bf16.msra.mxu0 %v1521
    %2038 = vmatprep.mubr.bf16.mxu0 %v181
    %2039 = vmatmul.mubr.bf16.gmra.mrb[0].mxu0 %v180
    %v2040 = vpop.f32.mrb[0].mxu0
    %v2041 = vadd.f32 %v528, %v2040
    %v2042 = vpop.f32.mrb[0].mxu0
    %v2043 = vadd.f32 %v532, %v2042
    %v2044 = vpop.f32.mrb[0].mxu0
    %v2045 = vpop.f32.mrb[0].mxu0
    %2046 = vdwg.mxu0
    %2047 = vmatprep.subr.bf16.mxu0 %v1527
    %2048 = vmatpush1.bf16.msra.mxu0 %v1526
    %2049 = vmatprep.subr.bf16.mxu0 %v1532
    %2050 = vmatpush1.bf16.msra.mxu0 %v1531
    %2051 = vmatprep.subr.bf16.mxu0 %v1537
    %2052 = vmatpush1.bf16.msra.mxu0 %v1536
    %2053 = vmatprep.subr.bf16.mxu0 %v1542
    %2054 = vmatpush1.bf16.msra.mxu0 %v1541
    %2055 = vmatprep.subr.bf16.mxu0 %v1547
    %2056 = vmatpush1.bf16.msra.mxu0 %v1546
    %2057 = vmatprep.subr.bf16.mxu0 %v1552
    %2058 = vmatpush1.bf16.msra.mxu0 %v1551
    %2059 = vmatprep.subr.bf16.mxu0 %v1557
    %2060 = vmatpush1.bf16.msra.mxu0 %v1556
    %2061 = vmatprep.subr.bf16.mxu0 %v1562
    %2062 = vmatpush1.bf16.msra.mxu0 %v1561
    %2063 = vmatprep.subr.bf16.mxu0 %v1567
    %2064 = vmatpush1.bf16.msra.mxu0 %v1566
    %2065 = vmatprep.subr.bf16.mxu0 %v1572
    %2066 = vmatpush1.bf16.msra.mxu0 %v1571
    %2067 = vmatprep.subr.bf16.mxu0 %v1577
    %2068 = vmatpush1.bf16.msra.mxu0 %v1576
    %2069 = vmatprep.subr.bf16.mxu0 %v1582
    %2070 = vmatpush1.bf16.msra.mxu0 %v1581
    %2071 = vmatprep.subr.bf16.mxu0 %v1587
    %2072 = vmatpush1.bf16.msra.mxu0 %v1586
    %2073 = vmatprep.subr.bf16.mxu0 %v1592
    %2074 = vmatpush1.bf16.msra.mxu0 %v1591
    %2075 = vmatprep.subr.bf16.mxu0 %v1597
    %2076 = vmatpush1.bf16.msra.mxu0 %v1596
    %2077 = vmatprep.subr.bf16.mxu0 %v1602
    %2078 = vmatpush1.bf16.msra.mxu0 %v1601
    %2079 = vmatprep.mubr.bf16.mxu0 %v183
    %2080 = vmatmul.mubr.bf16.gmra.mrb[0].mxu0 %v182
    %v2081 = vpop.f32.mrb[0].mxu0
    %v2082 = vadd.f32 %v2041, %v2081
    %v2083 = vpop.f32.mrb[0].mxu0
    %v2084 = vadd.f32 %v2043, %v2083
    %v2085 = vpop.f32.mrb[0].mxu0
    %v2086 = vpop.f32.mrb[0].mxu0
    %2087 = vdwg.mxu0
    %2088 = vmatprep.subr.bf16.mxu0 %v1607
    %2089 = vmatpush1.bf16.msra.mxu0 %v1606
    %2090 = vmatprep.subr.bf16.mxu0 %v1612
    %2091 = vmatpush1.bf16.msra.mxu0 %v1611
    %2092 = vmatprep.subr.bf16.mxu0 %v1617
    %2093 = vmatpush1.bf16.msra.mxu0 %v1616
    %2094 = vmatprep.subr.bf16.mxu0 %v1622
    %2095 = vmatpush1.bf16.msra.mxu0 %v1621
    %2096 = vmatprep.subr.bf16.mxu0 %v1627
    %2097 = vmatpush1.bf16.msra.mxu0 %v1626
    %2098 = vmatprep.subr.bf16.mxu0 %v1632
    %2099 = vmatpush1.bf16.msra.mxu0 %v1631
    %2100 = vmatprep.subr.bf16.mxu0 %v1637
    %2101 = vmatpush1.bf16.msra.mxu0 %v1636
    %2102 = vmatprep.subr.bf16.mxu0 %v1642
    %2103 = vmatpush1.bf16.msra.mxu0 %v1641
    %2104 = vmatprep.subr.bf16.mxu0 %v1647
    %2105 = vmatpush1.bf16.msra.mxu0 %v1646
    %2106 = vmatprep.subr.bf16.mxu0 %v1652
    %2107 = vmatpush1.bf16.msra.mxu0 %v1651
    %2108 = vmatprep.subr.bf16.mxu0 %v1657
    %2109 = vmatpush1.bf16.msra.mxu0 %v1656
    %2110 = vmatprep.subr.bf16.mxu0 %v1662
    %2111 = vmatpush1.bf16.msra.mxu0 %v1661
    %2112 = vmatprep.subr.bf16.mxu0 %v1667
    %2113 = vmatpush1.bf16.msra.mxu0 %v1666
    %2114 = vmatprep.subr.bf16.mxu0 %v1672
    %2115 = vmatpush1.bf16.msra.mxu0 %v1671
    %2116 = vmatprep.subr.bf16.mxu0 %v1677
    %2117 = vmatpush1.bf16.msra.mxu0 %v1676
    %2118 = vmatprep.subr.bf16.mxu0 %v1682
    %2119 = vmatpush1.bf16.msra.mxu0 %v1681
    %2120 = vmatprep.mubr.bf16.mxu0 %v185
    %2121 = vmatmul.mubr.bf16.gmra.mrb[0].mxu0 %v184
    %v2122 = vpop.f32.mrb[0].mxu0
    %v2123 = vadd.f32 %v2082, %v2122
    %v2124 = vpop.f32.mrb[0].mxu0
    %v2125 = vadd.f32 %v2084, %v2124
    %v2126 = vpop.f32.mrb[0].mxu0
    %v2127 = vpop.f32.mrb[0].mxu0
    %2128 = vdwg.mxu0
    %2129 = vmatprep.subr.bf16.mxu0 %v1687
    %2130 = vmatpush1.bf16.msra.mxu0 %v1686
    %2131 = vmatprep.subr.bf16.mxu0 %v1692
    %2132 = vmatpush1.bf16.msra.mxu0 %v1691
    %2133 = vmatprep.subr.bf16.mxu0 %v1697
    %2134 = vmatpush1.bf16.msra.mxu0 %v1696
    %2135 = vmatprep.subr.bf16.mxu0 %v1702
    %2136 = vmatpush1.bf16.msra.mxu0 %v1701
    %2137 = vmatprep.subr.bf16.mxu0 %v1707
    %2138 = vmatpush1.bf16.msra.mxu0 %v1706
    %2139 = vmatprep.subr.bf16.mxu0 %v1712
    %2140 = vmatpush1.bf16.msra.mxu0 %v1711
    %2141 = vmatprep.subr.bf16.mxu0 %v1717
    %2142 = vmatpush1.bf16.msra.mxu0 %v1716
    %2143 = vmatprep.subr.bf16.mxu0 %v1722
    %2144 = vmatpush1.bf16.msra.mxu0 %v1721
    %2145 = vmatprep.subr.bf16.mxu0 0
    %2146 = vmatpush1.bf16.msra.mxu0 0
    %2147 = vmatprep.subr.bf16.mxu0 0
    %2148 = vmatpush1.bf16.msra.mxu0 0
    %2149 = vmatprep.subr.bf16.mxu0 0
    %2150 = vmatpush1.bf16.msra.mxu0 0
    %2151 = vmatprep.subr.bf16.mxu0 0
    %2152 = vmatpush1.bf16.msra.mxu0 0
    %2153 = vmatprep.subr.bf16.mxu0 0
    %2154 = vmatpush1.bf16.msra.mxu0 0
    %2155 = vmatprep.subr.bf16.mxu0 0
    %2156 = vmatpush1.bf16.msra.mxu0 0
    %2157 = vmatprep.subr.bf16.mxu0 0
    %2158 = vmatpush1.bf16.msra.mxu0 0
    %2159 = vmatprep.subr.bf16.mxu0 0
    %2160 = vmatpush1.bf16.msra.mxu0 0
    %2161 = vmatprep.mubr.bf16.mxu0 0
    %2162 = vmatmul.mubr.bf16.gmra.mrb[0].mxu0 %v186
    %v2163 = vpop.f32.mrb[0].mxu0
    %v2164 = vadd.f32 %v2123, %v2163
    %v2165 = vpop.f32.mrb[0].mxu0
    %v2166 = vadd.f32 %v2125, %v2165
    %v2167 = vpop.f32.mrb[0].mxu0
    %v2168 = vpop.f32.mrb[0].mxu0
    %2169 = vdwg.mxu0
    %2170 = vmatprep.subr.bf16.mxu0 %v1449
    %2171 = vmatpush1.bf16.msra.mxu0 %v1448
    %2172 = vmatprep.subr.bf16.mxu0 %v1454
    %2173 = vmatpush1.bf16.msra.mxu0 %v1453
    %2174 = vmatprep.subr.bf16.mxu0 %v1459
    %2175 = vmatpush1.bf16.msra.mxu0 %v1458
    %2176 = vmatprep.subr.bf16.mxu0 %v1464
    %2177 = vmatpush1.bf16.msra.mxu0 %v1463
    %2178 = vmatprep.subr.bf16.mxu0 %v1469
    %2179 = vmatpush1.bf16.msra.mxu0 %v1468
    %2180 = vmatprep.subr.bf16.mxu0 %v1474
    %2181 = vmatpush1.bf16.msra.mxu0 %v1473
    %2182 = vmatprep.subr.bf16.mxu0 %v1479
    %2183 = vmatpush1.bf16.msra.mxu0 %v1478
    %2184 = vmatprep.subr.bf16.mxu0 %v1484
    %2185 = vmatpush1.bf16.msra.mxu0 %v1483
    %2186 = vmatprep.subr.bf16.mxu0 %v1489
    %2187 = vmatpush1.bf16.msra.mxu0 %v1488
    %2188 = vmatprep.subr.bf16.mxu0 %v1494
    %2189 = vmatpush1.bf16.msra.mxu0 %v1493
    %2190 = vmatprep.subr.bf16.mxu0 %v1499
    %2191 = vmatpush1.bf16.msra.mxu0 %v1498
    %2192 = vmatprep.subr.bf16.mxu0 %v1504
    %2193 = vmatpush1.bf16.msra.mxu0 %v1503
    %2194 = vmatprep.subr.bf16.mxu0 %v1509
    %2195 = vmatpush1.bf16.msra.mxu0 %v1508
    %2196 = vmatprep.subr.bf16.mxu0 %v1514
    %2197 = vmatpush1.bf16.msra.mxu0 %v1513
    %2198 = vmatprep.subr.bf16.mxu0 %v1519
    %2199 = vmatpush1.bf16.msra.mxu0 %v1518
    %2200 = vmatprep.subr.bf16.mxu0 %v1524
    %2201 = vmatpush1.bf16.msra.mxu0 %v1523
    %2202 = vmatprep.mubr.bf16.mxu0 %v181
    %2203 = vmatmul.mubr.bf16.gmra.mrb[0].mxu0 %v180
    %v2204 = vpop.f32.mrb[0].mxu0
    %v2205 = vadd.f32 %v536, %v2204
    %v2206 = vpop.f32.mrb[0].mxu0
    %v2207 = vadd.f32 %v540, %v2206
    %v2208 = vpop.f32.mrb[0].mxu0
    %v2209 = vpop.f32.mrb[0].mxu0
    %2210 = vdwg.mxu0
    %2211 = vmatprep.subr.bf16.mxu0 %v1529
    %2212 = vmatpush1.bf16.msra.mxu0 %v1528
    %2213 = vmatprep.subr.bf16.mxu0 %v1534
    %2214 = vmatpush1.bf16.msra.mxu0 %v1533
    %2215 = vmatprep.subr.bf16.mxu0 %v1539
    %2216 = vmatpush1.bf16.msra.mxu0 %v1538
    %2217 = vmatprep.subr.bf16.mxu0 %v1544
    %2218 = vmatpush1.bf16.msra.mxu0 %v1543
    %2219 = vmatprep.subr.bf16.mxu0 %v1549
    %2220 = vmatpush1.bf16.msra.mxu0 %v1548
    %2221 = vmatprep.subr.bf16.mxu0 %v1554
    %2222 = vmatpush1.bf16.msra.mxu0 %v1553
    %2223 = vmatprep.subr.bf16.mxu0 %v1559
    %2224 = vmatpush1.bf16.msra.mxu0 %v1558
    %2225 = vmatprep.subr.bf16.mxu0 %v1564
    %2226 = vmatpush1.bf16.msra.mxu0 %v1563
    %2227 = vmatprep.subr.bf16.mxu0 %v1569
    %2228 = vmatpush1.bf16.msra.mxu0 %v1568
    %2229 = vmatprep.subr.bf16.mxu0 %v1574
    %2230 = vmatpush1.bf16.msra.mxu0 %v1573
    %2231 = vmatprep.subr.bf16.mxu0 %v1579
    %2232 = vmatpush1.bf16.msra.mxu0 %v1578
    %2233 = vmatprep.subr.bf16.mxu0 %v1584
    %2234 = vmatpush1.bf16.msra.mxu0 %v1583
    %2235 = vmatprep.subr.bf16.mxu0 %v1589
    %2236 = vmatpush1.bf16.msra.mxu0 %v1588
    %2237 = vmatprep.subr.bf16.mxu0 %v1594
    %2238 = vmatpush1.bf16.msra.mxu0 %v1593
    %2239 = vmatprep.subr.bf16.mxu0 %v1599
    %2240 = vmatpush1.bf16.msra.mxu0 %v1598
    %2241 = vmatprep.subr.bf16.mxu0 %v1604
    %2242 = vmatpush1.bf16.msra.mxu0 %v1603
    %2243 = vmatprep.mubr.bf16.mxu0 %v183
    %2244 = vmatmul.mubr.bf16.gmra.mrb[0].mxu0 %v182
    %v2245 = vpop.f32.mrb[0].mxu0
    %v2246 = vadd.f32 %v2205, %v2245
    %v2247 = vpop.f32.mrb[0].mxu0
    %v2248 = vadd.f32 %v2207, %v2247
    %v2249 = vpop.f32.mrb[0].mxu0
    %v2250 = vpop.f32.mrb[0].mxu0
    %2251 = vdwg.mxu0
    %2252 = vmatprep.subr.bf16.mxu0 %v1609
    %2253 = vmatpush1.bf16.msra.mxu0 %v1608
    %2254 = vmatprep.subr.bf16.mxu0 %v1614
    %2255 = vmatpush1.bf16.msra.mxu0 %v1613
    %2256 = vmatprep.subr.bf16.mxu0 %v1619
    %2257 = vmatpush1.bf16.msra.mxu0 %v1618
    %2258 = vmatprep.subr.bf16.mxu0 %v1624
    %2259 = vmatpush1.bf16.msra.mxu0 %v1623
    %2260 = vmatprep.subr.bf16.mxu0 %v1629
    %2261 = vmatpush1.bf16.msra.mxu0 %v1628
    %2262 = vmatprep.subr.bf16.mxu0 %v1634
    %2263 = vmatpush1.bf16.msra.mxu0 %v1633
    %2264 = vmatprep.subr.bf16.mxu0 %v1639
    %2265 = vmatpush1.bf16.msra.mxu0 %v1638
    %2266 = vmatprep.subr.bf16.mxu0 %v1644
    %2267 = vmatpush1.bf16.msra.mxu0 %v1643
    %2268 = vmatprep.subr.bf16.mxu0 %v1649
    %2269 = vmatpush1.bf16.msra.mxu0 %v1648
    %2270 = vmatprep.subr.bf16.mxu0 %v1654
    %2271 = vmatpush1.bf16.msra.mxu0 %v1653
    %2272 = vmatprep.subr.bf16.mxu0 %v1659
    %2273 = vmatpush1.bf16.msra.mxu0 %v1658
    %2274 = vmatprep.subr.bf16.mxu0 %v1664
    %2275 = vmatpush1.bf16.msra.mxu0 %v1663
    %2276 = vmatprep.subr.bf16.mxu0 %v1669
    %2277 = vmatpush1.bf16.msra.mxu0 %v1668
    %2278 = vmatprep.subr.bf16.mxu0 %v1674
    %2279 = vmatpush1.bf16.msra.mxu0 %v1673
    %2280 = vmatprep.subr.bf16.mxu0 %v1679
    %2281 = vmatpush1.bf16.msra.mxu0 %v1678
    %2282 = vmatprep.subr.bf16.mxu0 %v1684
    %2283 = vmatpush1.bf16.msra.mxu0 %v1683
    %2284 = vmatprep.mubr.bf16.mxu0 %v185
    %2285 = vmatmul.mubr.bf16.gmra.mrb[0].mxu0 %v184
    %v2286 = vpop.f32.mrb[0].mxu0
    %v2287 = vadd.f32 %v2246, %v2286
    %v2288 = vpop.f32.mrb[0].mxu0
    %v2289 = vadd.f32 %v2248, %v2288
    %v2290 = vpop.f32.mrb[0].mxu0
    %v2291 = vpop.f32.mrb[0].mxu0
    %2292 = vdwg.mxu0
    %2293 = vmatprep.subr.bf16.mxu0 %v1689
    %2294 = vmatpush1.bf16.msra.mxu0 %v1688
    %2295 = vmatprep.subr.bf16.mxu0 %v1694
    %2296 = vmatpush1.bf16.msra.mxu0 %v1693
    %2297 = vmatprep.subr.bf16.mxu0 %v1699
    %2298 = vmatpush1.bf16.msra.mxu0 %v1698
    %2299 = vmatprep.subr.bf16.mxu0 %v1704
    %2300 = vmatpush1.bf16.msra.mxu0 %v1703
    %2301 = vmatprep.subr.bf16.mxu0 %v1709
    %2302 = vmatpush1.bf16.msra.mxu0 %v1708
    %2303 = vmatprep.subr.bf16.mxu0 %v1714
    %2304 = vmatpush1.bf16.msra.mxu0 %v1713
    %2305 = vmatprep.subr.bf16.mxu0 %v1719
    %2306 = vmatpush1.bf16.msra.mxu0 %v1718
    %2307 = vmatprep.subr.bf16.mxu0 %v1724
    %2308 = vmatpush1.bf16.msra.mxu0 %v1723
    %2309 = vmatprep.subr.bf16.mxu0 0
    %2310 = vmatpush1.bf16.msra.mxu0 0
    %2311 = vmatprep.subr.bf16.mxu0 0
    %2312 = vmatpush1.bf16.msra.mxu0 0
    %2313 = vmatprep.subr.bf16.mxu0 0
    %2314 = vmatpush1.bf16.msra.mxu0 0
    %2315 = vmatprep.subr.bf16.mxu0 0
    %2316 = vmatpush1.bf16.msra.mxu0 0
    %2317 = vmatprep.subr.bf16.mxu0 0
    %2318 = vmatpush1.bf16.msra.mxu0 0
    %2319 = vmatprep.subr.bf16.mxu0 0
    %2320 = vmatpush1.bf16.msra.mxu0 0
    %2321 = vmatprep.subr.bf16.mxu0 0
    %2322 = vmatpush1.bf16.msra.mxu0 0
    %2323 = vmatprep.subr.bf16.mxu0 0
    %2324 = vmatpush1.bf16.msra.mxu0 0
    %2325 = vmatprep.mubr.bf16.mxu0 0
    %2326 = vmatmul.mubr.bf16.gmra.mrb[0].mxu0 %v186
    %v2327 = vpop.f32.mrb[0].mxu0
    %v2328 = vadd.f32 %v2287, %v2327
    %v2329 = vpop.f32.mrb[0].mxu0
    %v2330 = vadd.f32 %v2289, %v2329
    %v2331 = vpop.f32.mrb[0].mxu0
    %v2332 = vpop.f32.mrb[0].mxu0
    %2333 = vdwg.mxu0
    %2334 = vmatprep.subr.bf16.mxu0 0
    %2335 = vmatpush1.bf16.msra.mxu0 %v1450
    %2336 = vmatprep.subr.bf16.mxu0 0
    %2337 = vmatpush1.bf16.msra.mxu0 %v1455
    %2338 = vmatprep.subr.bf16.mxu0 0
    %2339 = vmatpush1.bf16.msra.mxu0 %v1460
    %2340 = vmatprep.subr.bf16.mxu0 0
    %2341 = vmatpush1.bf16.msra.mxu0 %v1465
    %2342 = vmatprep.subr.bf16.mxu0 0
    %2343 = vmatpush1.bf16.msra.mxu0 %v1470
    %2344 = vmatprep.subr.bf16.mxu0 0
    %2345 = vmatpush1.bf16.msra.mxu0 %v1475
    %2346 = vmatprep.subr.bf16.mxu0 0
    %2347 = vmatpush1.bf16.msra.mxu0 %v1480
    %2348 = vmatprep.subr.bf16.mxu0 0
    %2349 = vmatpush1.bf16.msra.mxu0 %v1485
    %2350 = vmatprep.subr.bf16.mxu0 0
    %2351 = vmatpush1.bf16.msra.mxu0 %v1490
    %2352 = vmatprep.subr.bf16.mxu0 0
    %2353 = vmatpush1.bf16.msra.mxu0 %v1495
    %2354 = vmatprep.subr.bf16.mxu0 0
    %2355 = vmatpush1.bf16.msra.mxu0 %v1500
    %2356 = vmatprep.subr.bf16.mxu0 0
    %2357 = vmatpush1.bf16.msra.mxu0 %v1505
    %2358 = vmatprep.subr.bf16.mxu0 0
    %2359 = vmatpush1.bf16.msra.mxu0 %v1510
    %2360 = vmatprep.subr.bf16.mxu0 0
    %2361 = vmatpush1.bf16.msra.mxu0 %v1515
    %2362 = vmatprep.subr.bf16.mxu0 0
    %2363 = vmatpush1.bf16.msra.mxu0 %v1520
    %2364 = vmatprep.subr.bf16.mxu0 0
    %2365 = vmatpush1.bf16.msra.mxu0 %v1525
    %2366 = vmatprep.mubr.bf16.mxu0 %v181
    %2367 = vmatmul.mubr.bf16.gmra.mrb[0].mxu0 %v180
    %v2368 = vpop.f32.mrb[0].mxu0
    %v2369 = vadd.f32 %v544, %v2368
    %v2370 = vpop.f32.mrb[0].mxu0
    %v2371 = vpop.f32.mrb[0].mxu0
    %v2372 = vpop.f32.mrb[0].mxu0
    %2373 = vdwg.mxu0
    %2374 = vmatprep.subr.bf16.mxu0 0
    %2375 = vmatpush1.bf16.msra.mxu0 %v1530
    %2376 = vmatprep.subr.bf16.mxu0 0
    %2377 = vmatpush1.bf16.msra.mxu0 %v1535
    %2378 = vmatprep.subr.bf16.mxu0 0
    %2379 = vmatpush1.bf16.msra.mxu0 %v1540
    %2380 = vmatprep.subr.bf16.mxu0 0
    %2381 = vmatpush1.bf16.msra.mxu0 %v1545
    %2382 = vmatprep.subr.bf16.mxu0 0
    %2383 = vmatpush1.bf16.msra.mxu0 %v1550
    %2384 = vmatprep.subr.bf16.mxu0 0
    %2385 = vmatpush1.bf16.msra.mxu0 %v1555
    %2386 = vmatprep.subr.bf16.mxu0 0
    %2387 = vmatpush1.bf16.msra.mxu0 %v1560
    %2388 = vmatprep.subr.bf16.mxu0 0
    %2389 = vmatpush1.bf16.msra.mxu0 %v1565
    %2390 = vmatprep.subr.bf16.mxu0 0
    %2391 = vmatpush1.bf16.msra.mxu0 %v1570
    %2392 = vmatprep.subr.bf16.mxu0 0
    %2393 = vmatpush1.bf16.msra.mxu0 %v1575
    %2394 = vmatprep.subr.bf16.mxu0 0
    %2395 = vmatpush1.bf16.msra.mxu0 %v1580
    %2396 = vmatprep.subr.bf16.mxu0 0
    %2397 = vmatpush1.bf16.msra.mxu0 %v1585
    %2398 = vmatprep.subr.bf16.mxu0 0
    %2399 = vmatpush1.bf16.msra.mxu0 %v1590
    %2400 = vmatprep.subr.bf16.mxu0 0
    %2401 = vmatpush1.bf16.msra.mxu0 %v1595
    %2402 = vmatprep.subr.bf16.mxu0 0
    %2403 = vmatpush1.bf16.msra.mxu0 %v1600
    %2404 = vmatprep.subr.bf16.mxu0 0
    %2405 = vmatpush1.bf16.msra.mxu0 %v1605
    %2406 = vmatprep.mubr.bf16.mxu0 %v183
    %2407 = vmatmul.mubr.bf16.gmra.mrb[0].mxu0 %v182
    %v2408 = vpop.f32.mrb[0].mxu0
    %v2409 = vadd.f32 %v2369, %v2408
    %v2410 = vpop.f32.mrb[0].mxu0
    %v2411 = vpop.f32.mrb[0].mxu0
    %v2412 = vpop.f32.mrb[0].mxu0
    %2413 = vdwg.mxu0
    %2414 = vmatprep.subr.bf16.mxu0 0
    %2415 = vmatpush1.bf16.msra.mxu0 %v1610
    %2416 = vmatprep.subr.bf16.mxu0 0
    %2417 = vmatpush1.bf16.msra.mxu0 %v1615
    %2418 = vmatprep.subr.bf16.mxu0 0
    %2419 = vmatpush1.bf16.msra.mxu0 %v1620
    %2420 = vmatprep.subr.bf16.mxu0 0
    %2421 = vmatpush1.bf16.msra.mxu0 %v1625
    %2422 = vmatprep.subr.bf16.mxu0 0
    %2423 = vmatpush1.bf16.msra.mxu0 %v1630
    %2424 = vmatprep.subr.bf16.mxu0 0
    %2425 = vmatpush1.bf16.msra.mxu0 %v1635
    %2426 = vmatprep.subr.bf16.mxu0 0
    %2427 = vmatpush1.bf16.msra.mxu0 %v1640
    %2428 = vmatprep.subr.bf16.mxu0 0
    %2429 = vmatpush1.bf16.msra.mxu0 %v1645
    %2430 = vmatprep.subr.bf16.mxu0 0
    %2431 = vmatpush1.bf16.msra.mxu0 %v1650
    %2432 = vmatprep.subr.bf16.mxu0 0
    %2433 = vmatpush1.bf16.msra.mxu0 %v1655
    %2434 = vmatprep.subr.bf16.mxu0 0
    %2435 = vmatpush1.bf16.msra.mxu0 %v1660
    %2436 = vmatprep.subr.bf16.mxu0 0
    %2437 = vmatpush1.bf16.msra.mxu0 %v1665
    %2438 = vmatprep.subr.bf16.mxu0 0
    %2439 = vmatpush1.bf16.msra.mxu0 %v1670
    %2440 = vmatprep.subr.bf16.mxu0 0
    %2441 = vmatpush1.bf16.msra.mxu0 %v1675
    %2442 = vmatprep.subr.bf16.mxu0 0
    %2443 = vmatpush1.bf16.msra.mxu0 %v1680
    %2444 = vmatprep.subr.bf16.mxu0 0
    %2445 = vmatpush1.bf16.msra.mxu0 %v1685
    %2446 = vmatprep.mubr.bf16.mxu0 %v185
    %2447 = vmatmul.mubr.bf16.gmra.mrb[0].mxu0 %v184
    %v2448 = vpop.f32.mrb[0].mxu0
    %v2449 = vadd.f32 %v2409, %v2448
    %v2450 = vpop.f32.mrb[0].mxu0
    %v2451 = vpop.f32.mrb[0].mxu0
    %v2452 = vpop.f32.mrb[0].mxu0
    %2453 = vdwg.mxu0
    %2454 = vmatprep.subr.bf16.mxu0 0
    %2455 = vmatpush1.bf16.msra.mxu0 %v1690
    %2456 = vmatprep.subr.bf16.mxu0 0
    %2457 = vmatpush1.bf16.msra.mxu0 %v1695
    %2458 = vmatprep.subr.bf16.mxu0 0
    %2459 = vmatpush1.bf16.msra.mxu0 %v1700
    %2460 = vmatprep.subr.bf16.mxu0 0
    %2461 = vmatpush1.bf16.msra.mxu0 %v1705
    %2462 = vmatprep.subr.bf16.mxu0 0
    %2463 = vmatpush1.bf16.msra.mxu0 %v1710
    %2464 = vmatprep.subr.bf16.mxu0 0
    %2465 = vmatpush1.bf16.msra.mxu0 %v1715
    %2466 = vmatprep.subr.bf16.mxu0 0
    %2467 = vmatpush1.bf16.msra.mxu0 %v1720
    %2468 = vmatprep.subr.bf16.mxu0 0
    %2469 = vmatpush1.bf16.msra.mxu0 %v1725
    %2470 = vmatprep.subr.bf16.mxu0 0
    %2471 = vmatpush1.bf16.msra.mxu0 0
    %2472 = vmatprep.subr.bf16.mxu0 0
    %2473 = vmatpush1.bf16.msra.mxu0 0
    %2474 = vmatprep.subr.bf16.mxu0 0
    %2475 = vmatpush1.bf16.msra.mxu0 0
    %2476 = vmatprep.subr.bf16.mxu0 0
    %2477 = vmatpush1.bf16.msra.mxu0 0
    %2478 = vmatprep.subr.bf16.mxu0 0
    %2479 = vmatpush1.bf16.msra.mxu0 0
    %2480 = vmatprep.subr.bf16.mxu0 0
    %2481 = vmatpush1.bf16.msra.mxu0 0
    %2482 = vmatprep.subr.bf16.mxu0 0
    %2483 = vmatpush1.bf16.msra.mxu0 0
    %2484 = vmatprep.subr.bf16.mxu0 0
    %2485 = vmatpush1.bf16.msra.mxu0 0
    %2486 = vmatprep.mubr.bf16.mxu0 0
    %2487 = vmatmul.mubr.bf16.gmra.mrb[0].mxu0 %v186
    %v2488 = vpop.f32.mrb[0].mxu0
    %v2489 = vadd.f32 %v2449, %v2488
    %v2490 = vpop.f32.mrb[0].mxu0
    %v2491 = vpop.f32.mrb[0].mxu0
    %v2492 = vpop.f32.mrb[0].mxu0
    %2493 = vdwg.mxu0
    %v2494 = vmax.f32 %v2164, 0.0
    %v2495 = vmax.f32 %v2166, 0.0
    %v2496 = vmax.f32 %v2328, 0.0
    %v2497 = vmax.f32 %v2330, 0.0
    %v2498 = vmax.f32 %v2489, 0.0
    %v2499 = vrot.slane %v2494, 4
    %v2500 = vadd.f32 %v2494, %v2499
    %v2501 = vrot.slane %v2500, 2
    %v2502 = vadd.f32 %v2500, %v2501
    %v2503 = vrot.slane %v2502, 1
    %v2504 = vadd.f32 %v2502, %v2503
    %v2505 = vrot.slane %v2495, 4
    %v2506 = vadd.f32 %v2495, %v2505
    %v2507 = vrot.slane %v2506, 2
    %v2508 = vadd.f32 %v2506, %v2507
    %v2509 = vrot.slane %v2508, 1
    %v2510 = vadd.f32 %v2508, %v2509
    %v2511 = vrot.slane %v2496, 4
    %v2512 = vadd.f32 %v2496, %v2511
    %v2513 = vrot.slane %v2512, 2
    %v2514 = vadd.f32 %v2512, %v2513
    %v2515 = vrot.slane %v2514, 1
    %v2516 = vadd.f32 %v2514, %v2515
    %v2517 = vrot.slane %v2497, 4
    %v2518 = vadd.f32 %v2497, %v2517
    %v2519 = vrot.slane %v2518, 2
    %v2520 = vadd.f32 %v2518, %v2519
    %v2521 = vrot.slane %v2520, 1
    %v2522 = vadd.f32 %v2520, %v2521
    %v2523 = vrot.slane %v2498, 4
    %v2524 = vadd.f32 %v2498, %v2523
    %v2525 = vrot.slane %v2524, 2
    %v2526 = vadd.f32 %v2524, %v2525
    %v2527 = vrot.slane %v2526, 1
    %v2528 = vadd.f32 %v2526, %v2527
    %v2529 = vmul.f32 %v2494, %v2494
    %v2530 = vmul.f32 %v2495, %v2495
    %v2531 = vmul.f32 %v2496, %v2496
    %v2532 = vmul.f32 %v2497, %v2497
    %v2533 = vmul.f32 %v2498, %v2498
    %v2534 = vrot.slane %v2529, 4
    %v2535 = vadd.f32 %v2529, %v2534
    %v2536 = vrot.slane %v2535, 2
    %v2537 = vadd.f32 %v2535, %v2536
    %v2538 = vrot.slane %v2537, 1
    %v2539 = vadd.f32 %v2537, %v2538
    %v2540 = vrot.slane %v2530, 4
    %v2541 = vadd.f32 %v2530, %v2540
    %v2542 = vrot.slane %v2541, 2
    %v2543 = vadd.f32 %v2541, %v2542
    %v2544 = vrot.slane %v2543, 1
    %v2545 = vadd.f32 %v2543, %v2544
    %v2546 = vrot.slane %v2531, 4
    %v2547 = vadd.f32 %v2531, %v2546
    %v2548 = vrot.slane %v2547, 2
    %v2549 = vadd.f32 %v2547, %v2548
    %v2550 = vrot.slane %v2549, 1
    %v2551 = vadd.f32 %v2549, %v2550
    %v2552 = vrot.slane %v2532, 4
    %v2553 = vadd.f32 %v2532, %v2552
    %v2554 = vrot.slane %v2553, 2
    %v2555 = vadd.f32 %v2553, %v2554
    %v2556 = vrot.slane %v2555, 1
    %v2557 = vadd.f32 %v2555, %v2556
    %v2558 = vrot.slane %v2533, 4
    %v2559 = vadd.f32 %v2533, %v2558
    %v2560 = vrot.slane %v2559, 2
    %v2561 = vadd.f32 %v2559, %v2560
    %v2562 = vrot.slane %v2561, 1
    %v2563 = vadd.f32 %v2561, %v2562
    %v2564 = vmul.f32 %v2504, 0.125
    %v2565 = vmul.f32 %v2510, 0.125
    %v2566 = vmul.f32 %v2516, 0.125
    %v2567 = vmul.f32 %v2522, 0.125
    %v2568 = vmul.f32 %v2528, 0.125
    %v2569 = vmul.f32 %v2539, 0.125
    %v2570 = vmul.f32 %v2545, 0.125
    %v2571 = vmul.f32 %v2551, 0.125
    %v2572 = vmul.f32 %v2557, 0.125
    %v2573 = vmul.f32 %v2563, 0.125
    %v2574 = vmul.f32 %v2564, %v2564
    %v2575 = vmul.f32 %v2565, %v2565
    %v2576 = vmul.f32 %v2566, %v2566
    %v2577 = vmul.f32 %v2567, %v2567
    %v2578 = vmul.f32 %v2568, %v2568
    %v2579 = vsub.f32 %v2569, %v2574
    %v2580 = vsub.f32 %v2570, %v2575
    %v2581 = vsub.f32 %v2571, %v2576
    %v2582 = vsub.f32 %v2572, %v2577
    %v2583 = vsub.f32 %v2573, %v2578
    %v2584 = vmax.f32 %v2579, 0.0
    %v2585 = vmax.f32 %v2580, 0.0
    %v2586 = vmax.f32 %v2581, 0.0
    %v2587 = vmax.f32 %v2582, 0.0
    %v2588 = vmax.f32 %v2583, 0.0
    %v2589 = vld [vmem:[#allocation8] sm:$0x1f]
    %v2590 = vsub.f32 %v2494, %v2564
    %v2591 = vsub.f32 %v2495, %v2565
    %v2592 = vsub.f32 %v2496, %v2566
    %v2593 = vsub.f32 %v2497, %v2567
    %v2594 = vsub.f32 %v2498, %v2568
    %v2596 = vlaneseq
    %v2597 = vshrl.u32 %v2596, 7
    %v2598 = vsub.s32 0, %v2597
    %v2599 = vrot.slane %v2589, %v2598
    %v2600 = vlaneseq
    %v2601 = vshrl.u32 %v2600, 7
    %v2602 = vsub.s32 1, %v2601
    %v2603 = vrot.slane %v2589, %v2602
    %v2604 = vlaneseq
    %v2605 = vshrl.u32 %v2604, 7
    %v2606 = vsub.s32 2, %v2605
    %v2607 = vrot.slane %v2589, %v2606
    %v2608 = vlaneseq
    %v2609 = vshrl.u32 %v2608, 7
    %v2610 = vsub.s32 3, %v2609
    %v2611 = vrot.slane %v2589, %v2610
    %v2612 = vlaneseq
    %v2613 = vshrl.u32 %v2612, 7
    %v2614 = vsub.s32 4, %v2613
    %v2615 = vrot.slane %v2589, %v2614
    %v2621 = vmul.f32 %v2599, %v2590
    %v2622 = vmul.f32 %v2603, %v2591
    %v2623 = vmul.f32 %v2607, %v2592
    %v2624 = vmul.f32 %v2611, %v2593
    %v2625 = vmul.f32 %v2615, %v2594
    %v2626 = vadd.f32 %v2584, 1e-05
    %v2627 = vadd.f32 %v2585, 1e-05
    %v2628 = vadd.f32 %v2586, 1e-05
    %v2629 = vadd.f32 %v2587, 1e-05
    %v2630 = vadd.f32 %v2588, 1e-05
    %v2631 = vrsqrt.pop %v2626
    %v2632 = vrsqrt.pop %v2627
    %v2633 = vrsqrt.pop %v2628
    %v2634 = vrsqrt.pop %v2629
    %v2635 = vrsqrt.pop %v2630
    %v2636 = vmul.f32 %v2621, %v2631
    %v2637 = vmul.f32 %v2622, %v2632
    %v2638 = vmul.f32 %v2623, %v2633
    %v2639 = vmul.f32 %v2624, %v2634
    %v2640 = vmul.f32 %v2625, %v2635
    %v2641 = vld [vmem:[#allocation10] sm:$0x1f]
    %v2643 = vlaneseq
    %v2644 = vshrl.u32 %v2643, 7
    %v2645 = vsub.s32 0, %v2644
    %v2646 = vrot.slane %v2641, %v2645
    %v2647 = vlaneseq
    %v2648 = vshrl.u32 %v2647, 7
    %v2649 = vsub.s32 1, %v2648
    %v2650 = vrot.slane %v2641, %v2649
    %v2651 = vlaneseq
    %v2652 = vshrl.u32 %v2651, 7
    %v2653 = vsub.s32 2, %v2652
    %v2654 = vrot.slane %v2641, %v2653
    %v2655 = vlaneseq
    %v2656 = vshrl.u32 %v2655, 7
    %v2657 = vsub.s32 3, %v2656
    %v2658 = vrot.slane %v2641, %v2657
    %v2659 = vlaneseq
    %v2660 = vshrl.u32 %v2659, 7
    %v2661 = vsub.s32 4, %v2660
    %v2662 = vrot.slane %v2641, %v2661
    %v2668 = vadd.f32 %v2636, %v2646
    %v2669 = vadd.f32 %v2637, %v2650
    %v2670 = vadd.f32 %v2638, %v2654
    %v2671 = vadd.f32 %v2639, %v2658
    %v2672 = vadd.f32 %v2640, %v2662
    %v2673 = vpack.c.bf16 %v2668, %v2668
    %v2674 = vpack.c.bf16 %v2669, %v2669
    %v2675 = vpack.c.bf16 %v2670, %v2670
    %v2676 = vpack.c.bf16 %v2671, %v2671
    %v2677 = vpack.c.bf16 %v2672, %v2672
    %v2678 = vld [vmem:[#allocation11] sm:$0xff]
    %v2679 = vld [vmem:[#allocation11 + $0x8] sm:$0xf]
    %v2680 = vld [vmem:[#allocation11 + $0xc] sm:$0xff]
    %v2681 = vld [vmem:[#allocation11 + $0x14] sm:$0xf]
    %v2682 = vld [vmem:[#allocation11 + $0x18] sm:$0xff]
    %v2683 = vld [vmem:[#allocation11 + $0x20] sm:$0xf]
    %v2684 = vld [vmem:[#allocation11 + $0x24] sm:$0xff]
    %v2685 = vld [vmem:[#allocation11 + $0x2c] sm:$0xf]
    %v2686 = vld [vmem:[#allocation11 + $0x30] sm:$0xff]
    %v2687 = vld [vmem:[#allocation11 + $0x38] sm:$0xf]
    %v2688 = vld [vmem:[#allocation11 + $0x3c] sm:$0xff]
    %v2689 = vld [vmem:[#allocation11 + $0x44] sm:$0xf]
    %v2690 = vld [vmem:[#allocation11 + $0x48] sm:$0xff]
    %v2691 = vld [vmem:[#allocation11 + $0x50] sm:$0xf]
    %v2692 = vld [vmem:[#allocation11 + $0x54] sm:$0xff]
    %v2693 = vld [vmem:[#allocation11 + $0x5c] sm:$0xf]
    %v2694 = vld [vmem:[#allocation11 + $0x60] sm:$0xff]
    %v2695 = vld [vmem:[#allocation11 + $0x68] sm:$0xf]
    %v2696 = vld [vmem:[#allocation11 + $0x6c] sm:$0xff]
    %v2697 = vld [vmem:[#allocation11 + $0x74] sm:$0xf]
    %v2698 = vld [vmem:[#allocation11 + $0x78] sm:$0xff]
    %v2699 = vld [vmem:[#allocation11 + $0x80] sm:$0xf]
    %v2700 = vld [vmem:[#allocation11 + $0x84] sm:$0xff]
    %v2701 = vld [vmem:[#allocation11 + $0x8c] sm:$0xf]
    %v2702 = vld [vmem:[#allocation11 + $0x90] sm:$0xff]
    %v2703 = vld [vmem:[#allocation11 + $0x98] sm:$0xf]
    %v2704 = vld [vmem:[#allocation11 + $0x9c] sm:$0xff]
    %v2705 = vld [vmem:[#allocation11 + $0xa4] sm:$0xf]
    %v2706 = vld [vmem:[#allocation11 + $0xa8] sm:$0xff]
    %v2707 = vld [vmem:[#allocation11 + $0xb0] sm:$0xf]
    %v2708 = vld [vmem:[#allocation11 + $0xb4] sm:$0xff]
    %v2709 = vld [vmem:[#allocation11 + $0xbc] sm:$0xf]
    %v2710 = vld [vmem:[#allocation11 + $0xc0] sm:$0xff]
    %v2711 = vld [vmem:[#allocation11 + $0xc8] sm:$0xf]
    %v2712 = vld [vmem:[#allocation11 + $0xcc] sm:$0xff]
    %v2713 = vld [vmem:[#allocation11 + $0xd4] sm:$0xf]
    %v2714 = vld [vmem:[#allocation11 + $0xd8] sm:$0xff]
    %v2715 = vld [vmem:[#allocation11 + $0xe0] sm:$0xf]
    %v2716 = vld [vmem:[#allocation11 + $0xe4] sm:$0xff]
    %v2717 = vld [vmem:[#allocation11 + $0xec] sm:$0xf]
    %v2718 = vld [vmem:[#allocation11 + $0xf0] sm:$0xff]
    %v2719 = vld [vmem:[#allocation11 + $0xf8] sm:$0xf]
    %v2720 = vld [vmem:[#allocation11 + $0xfc] sm:$0xff]
    %v2721 = vld [vmem:[#allocation11 + $0x104] sm:$0xf]
    %v2722 = vld [vmem:[#allocation11 + $0x108] sm:$0xff]
    %v2723 = vld [vmem:[#allocation11 + $0x110] sm:$0xf]
    %v2724 = vld [vmem:[#allocation11 + $0x114] sm:$0xff]
    %v2725 = vld [vmem:[#allocation11 + $0x11c] sm:$0xf]
    %v2726 = vld [vmem:[#allocation11 + $0x120] sm:$0xff]
    %v2727 = vld [vmem:[#allocation11 + $0x128] sm:$0xf]
    %v2728 = vld [vmem:[#allocation11 + $0x12c] sm:$0xff]
    %v2729 = vld [vmem:[#allocation11 + $0x134] sm:$0xf]
    %v2730 = vld [vmem:[#allocation11 + $0x138] sm:$0xff]
    %v2731 = vld [vmem:[#allocation11 + $0x140] sm:$0xf]
    %v2732 = vld [vmem:[#allocation11 + $0x144] sm:$0xff]
    %v2733 = vld [vmem:[#allocation11 + $0x14c] sm:$0xf]
    %v2734 = vld [vmem:[#allocation11 + $0x150] sm:$0xff]
    %v2735 = vld [vmem:[#allocation11 + $0x158] sm:$0xf]
    %v2736 = vld [vmem:[#allocation11 + $0x15c] sm:$0xff]
    %v2737 = vld [vmem:[#allocation11 + $0x164] sm:$0xf]
    %v2738 = vld [vmem:[#allocation11 + $0x168] sm:$0xff]
    %v2739 = vld [vmem:[#allocation11 + $0x170] sm:$0xf]
    %v2740 = vld [vmem:[#allocation11 + $0x174] sm:$0xff]
    %v2741 = vld [vmem:[#allocation11 + $0x17c] sm:$0xf]
    %v2742 = vld [vmem:[#allocation11 + $0x180] sm:$0xff]
    %v2743 = vld [vmem:[#allocation11 + $0x188] sm:$0xf]
    %v2744 = vld [vmem:[#allocation11 + $0x18c] sm:$0xff]
    %v2745 = vld [vmem:[#allocation11 + $0x194] sm:$0xf]
    %v2746 = vld [vmem:[#allocation11 + $0x198] sm:$0xff]
    %v2747 = vld [vmem:[#allocation11 + $0x1a0] sm:$0xf]
    %v2748 = vld [vmem:[#allocation11 + $0x1a4] sm:$0xff]
    %v2749 = vld [vmem:[#allocation11 + $0x1ac] sm:$0xf]
    %v2750 = vld [vmem:[#allocation11 + $0x1b0] sm:$0xff]
    %v2751 = vld [vmem:[#allocation11 + $0x1b8] sm:$0xf]
    %v2752 = vld [vmem:[#allocation11 + $0x1bc] sm:$0xff]
    %v2753 = vld [vmem:[#allocation11 + $0x1c4] sm:$0xf]
    %v2754 = vld [vmem:[#allocation11 + $0x1c8] sm:$0xff]
    %v2755 = vld [vmem:[#allocation11 + $0x1d0] sm:$0xf]
    %v2756 = vld [vmem:[#allocation11 + $0x1d4] sm:$0xff]
    %v2757 = vld [vmem:[#allocation11 + $0x1dc] sm:$0xf]
    %v2758 = vld [vmem:[#allocation11 + $0x1e0] sm:$0xff]
    %v2759 = vld [vmem:[#allocation11 + $0x1e8] sm:$0xf]
    %v2760 = vld [vmem:[#allocation11 + $0x1ec] sm:$0xff]
    %v2761 = vld [vmem:[#allocation11 + $0x1f4] sm:$0xf]
    %v2762 = vld [vmem:[#allocation11 + $0x1f8] sm:$0xff]
    %v2763 = vld [vmem:[#allocation11 + $0x200] sm:$0xf]
    %v2764 = vld [vmem:[#allocation11 + $0x204] sm:$0xff]
    %v2765 = vld [vmem:[#allocation11 + $0x20c] sm:$0xf]
    %v2766 = vld [vmem:[#allocation11 + $0x210] sm:$0xff]
    %v2767 = vld [vmem:[#allocation11 + $0x218] sm:$0xf]
    %v2768 = vld [vmem:[#allocation11 + $0x21c] sm:$0xff]
    %v2769 = vld [vmem:[#allocation11 + $0x224] sm:$0xf]
    %v2770 = vld [vmem:[#allocation11 + $0x228] sm:$0xff]
    %v2771 = vld [vmem:[#allocation11 + $0x230] sm:$0xf]
    %v2772 = vld [vmem:[#allocation11 + $0x234] sm:$0xff]
    %v2773 = vld [vmem:[#allocation11 + $0x23c] sm:$0xf]
    %v2774 = vld [vmem:[#allocation11 + $0x240] sm:$0xff]
    %v2775 = vld [vmem:[#allocation11 + $0x248] sm:$0xf]
    %v2776 = vld [vmem:[#allocation11 + $0x24c] sm:$0xff]
    %v2777 = vld [vmem:[#allocation11 + $0x254] sm:$0xf]
    %v2778 = vld [vmem:[#allocation11 + $0x258] sm:$0xff]
    %v2779 = vld [vmem:[#allocation11 + $0x260] sm:$0xf]
    %v2780 = vld [vmem:[#allocation11 + $0x264] sm:$0xff]
    %v2781 = vld [vmem:[#allocation11 + $0x26c] sm:$0xf]
    %v2782 = vld [vmem:[#allocation11 + $0x270] sm:$0xff]
    %v2783 = vld [vmem:[#allocation11 + $0x278] sm:$0xf]
    %v2784 = vld [vmem:[#allocation11 + $0x27c] sm:$0xff]
    %v2785 = vld [vmem:[#allocation11 + $0x284] sm:$0xf]
    %v2786 = vld [vmem:[#allocation11 + $0x288] sm:$0xff]
    %v2787 = vld [vmem:[#allocation11 + $0x290] sm:$0xf]
    %v2788 = vld [vmem:[#allocation11 + $0x294] sm:$0xff]
    %v2789 = vld [vmem:[#allocation11 + $0x29c] sm:$0xf]
    %v2790 = vld [vmem:[#allocation11 + $0x2a0] sm:$0xff]
    %v2791 = vld [vmem:[#allocation11 + $0x2a8] sm:$0xf]
    %v2792 = vld [vmem:[#allocation11 + $0x2ac] sm:$0xff]
    %v2793 = vld [vmem:[#allocation11 + $0x2b4] sm:$0xf]
    %v2794 = vld [vmem:[#allocation11 + $0x2b8] sm:$0xff]
    %v2795 = vld [vmem:[#allocation11 + $0x2c0] sm:$0xf]
    %v2796 = vld [vmem:[#allocation11 + $0x2c4] sm:$0xff]
    %v2797 = vld [vmem:[#allocation11 + $0x2cc] sm:$0xf]
    %v2798 = vld [vmem:[#allocation11 + $0x2d0] sm:$0xff]
    %v2799 = vld [vmem:[#allocation11 + $0x2d8] sm:$0xf]
    %v2800 = vld [vmem:[#allocation11 + $0x2dc] sm:$0xff]
    %v2801 = vld [vmem:[#allocation11 + $0x2e4] sm:$0xf]
    %v2802 = vld [vmem:[#allocation11 + $0x2e8] sm:$0xff]
    %v2803 = vld [vmem:[#allocation11 + $0x2f0] sm:$0xf]
    %v2804 = vld [vmem:[#allocation11 + $0x2f4] sm:$0xff]
    %v2805 = vld [vmem:[#allocation11 + $0x2fc] sm:$0xf]
    %v2806 = vld [vmem:[#allocation11 + $0x300] sm:$0xff]
    %v2807 = vld [vmem:[#allocation11 + $0x308] sm:$0xf]
    %v2808 = vld [vmem:[#allocation11 + $0x30c] sm:$0xff]
    %v2809 = vld [vmem:[#allocation11 + $0x314] sm:$0xf]
    %v2810 = vld [vmem:[#allocation11 + $0x318] sm:$0xff]
    %v2811 = vld [vmem:[#allocation11 + $0x320] sm:$0xf]
    %v2812 = vld [vmem:[#allocation11 + $0x324] sm:$0xff]
    %v2813 = vld [vmem:[#allocation11 + $0x32c] sm:$0xf]
    %v2814 = vld [vmem:[#allocation11 + $0x330] sm:$0xff]
    %v2815 = vld [vmem:[#allocation11 + $0x338] sm:$0xf]
    %v2816 = vld [vmem:[#allocation11 + $0x33c] sm:$0xff]
    %v2817 = vld [vmem:[#allocation11 + $0x344] sm:$0xf]
    %v2818 = vld [vmem:[#allocation11 + $0x348] sm:$0xff]
    %v2819 = vld [vmem:[#allocation11 + $0x350] sm:$0xf]
    %v2820 = vld [vmem:[#allocation11 + $0x354] sm:$0xff]
    %v2821 = vld [vmem:[#allocation11 + $0x35c] sm:$0xf]
    %v2822 = vld [vmem:[#allocation11 + $0x360] sm:$0xff]
    %v2823 = vld [vmem:[#allocation11 + $0x368] sm:$0xf]
    %v2824 = vld [vmem:[#allocation11 + $0x36c] sm:$0xff]
    %v2825 = vld [vmem:[#allocation11 + $0x374] sm:$0xf]
    %v2826 = vld [vmem:[#allocation11 + $0x378] sm:$0xff]
    %v2827 = vld [vmem:[#allocation11 + $0x380] sm:$0xf]
    %v2828 = vld [vmem:[#allocation11 + $0x384] sm:$0xff]
    %v2829 = vld [vmem:[#allocation11 + $0x38c] sm:$0xf]
    %v2830 = vld [vmem:[#allocation11 + $0x390] sm:$0xff]
    %v2831 = vld [vmem:[#allocation11 + $0x398] sm:$0xf]
    %v2832 = vld [vmem:[#allocation11 + $0x39c] sm:$0xff]
    %v2833 = vld [vmem:[#allocation11 + $0x3a4] sm:$0xf]
    %v2834 = vld [vmem:[#allocation11 + $0x3a8] sm:$0xff]
    %v2835 = vld [vmem:[#allocation11 + $0x3b0] sm:$0xf]
    %v2836 = vld [vmem:[#allocation11 + $0x3b4] sm:$0xff]
    %v2837 = vld [vmem:[#allocation11 + $0x3bc] sm:$0xf]
    %v2838 = vld [vmem:[#allocation13] sm:$0x7]
    %v2840 = vlaneseq
    %v2841 = vshrl.u32 %v2840, 7
    %v2842 = vsub.s32 0, %v2841
    %v2843 = vrot.slane %v2838, %v2842
    %v2844 = vlaneseq
    %v2845 = vshrl.u32 %v2844, 7
    %v2846 = vsub.s32 1, %v2845
    %v2847 = vrot.slane %v2838, %v2846
    %v2848 = vlaneseq
    %v2849 = vshrl.u32 %v2848, 7
    %v2850 = vsub.s32 2, %v2849
    %v2851 = vrot.slane %v2838, %v2850
    %v3015 = vunpack.c.l.b16 %v2678
    %v3016 = vunpack.c.h.b16 %v2678
    %v3017 = vunpack.c.l.b16 %v2679
    %v3018 = vunpack.c.l.b16 %v2680
    %v3019 = vunpack.c.h.b16 %v2680
    %v3020 = vunpack.c.l.b16 %v2681
    %v3021 = vunpack.c.l.b16 %v2682
    %v3022 = vunpack.c.h.b16 %v2682
    %v3023 = vunpack.c.l.b16 %v2683
    %v3024 = vunpack.c.l.b16 %v2684
    %v3025 = vunpack.c.h.b16 %v2684
    %v3026 = vunpack.c.l.b16 %v2685
    %v3027 = vunpack.c.l.b16 %v2686
    %v3028 = vunpack.c.h.b16 %v2686
    %v3029 = vunpack.c.l.b16 %v2687
    %v3030 = vunpack.c.l.b16 %v2688
    %v3031 = vunpack.c.h.b16 %v2688
    %v3032 = vunpack.c.l.b16 %v2689
    %v3033 = vunpack.c.l.b16 %v2690
    %v3034 = vunpack.c.h.b16 %v2690
    %v3035 = vunpack.c.l.b16 %v2691
    %v3036 = vunpack.c.l.b16 %v2692
    %v3037 = vunpack.c.h.b16 %v2692
    %v3038 = vunpack.c.l.b16 %v2693
    %v3039 = vunpack.c.l.b16 %v2694
    %v3040 = vunpack.c.h.b16 %v2694
    %v3041 = vunpack.c.l.b16 %v2695
    %v3042 = vunpack.c.l.b16 %v2696
    %v3043 = vunpack.c.h.b16 %v2696
    %v3044 = vunpack.c.l.b16 %v2697
    %v3045 = vunpack.c.l.b16 %v2698
    %v3046 = vunpack.c.h.b16 %v2698
    %v3047 = vunpack.c.l.b16 %v2699
    %v3048 = vunpack.c.l.b16 %v2700
    %v3049 = vunpack.c.h.b16 %v2700
    %v3050 = vunpack.c.l.b16 %v2701
    %v3051 = vunpack.c.l.b16 %v2702
    %v3052 = vunpack.c.h.b16 %v2702
    %v3053 = vunpack.c.l.b16 %v2703
    %v3054 = vunpack.c.l.b16 %v2704
    %v3055 = vunpack.c.h.b16 %v2704
    %v3056 = vunpack.c.l.b16 %v2705
    %v3057 = vunpack.c.l.b16 %v2706
    %v3058 = vunpack.c.h.b16 %v2706
    %v3059 = vunpack.c.l.b16 %v2707
    %v3060 = vunpack.c.l.b16 %v2708
    %v3061 = vunpack.c.h.b16 %v2708
    %v3062 = vunpack.c.l.b16 %v2709
    %v3063 = vunpack.c.l.b16 %v2710
    %v3064 = vunpack.c.h.b16 %v2710
    %v3065 = vunpack.c.l.b16 %v2711
    %v3066 = vunpack.c.l.b16 %v2712
    %v3067 = vunpack.c.h.b16 %v2712
    %v3068 = vunpack.c.l.b16 %v2713
    %v3069 = vunpack.c.l.b16 %v2714
    %v3070 = vunpack.c.h.b16 %v2714
    %v3071 = vunpack.c.l.b16 %v2715
    %v3072 = vunpack.c.l.b16 %v2716
    %v3073 = vunpack.c.h.b16 %v2716
    %v3074 = vunpack.c.l.b16 %v2717
    %v3075 = vunpack.c.l.b16 %v2718
    %v3076 = vunpack.c.h.b16 %v2718
    %v3077 = vunpack.c.l.b16 %v2719
    %v3078 = vunpack.c.l.b16 %v2720
    %v3079 = vunpack.c.h.b16 %v2720
    %v3080 = vunpack.c.l.b16 %v2721
    %v3081 = vunpack.c.l.b16 %v2722
    %v3082 = vunpack.c.h.b16 %v2722
    %v3083 = vunpack.c.l.b16 %v2723
    %v3084 = vunpack.c.l.b16 %v2724
    %v3085 = vunpack.c.h.b16 %v2724
    %v3086 = vunpack.c.l.b16 %v2725
    %v3087 = vunpack.c.l.b16 %v2726
    %v3088 = vunpack.c.h.b16 %v2726
    %v3089 = vunpack.c.l.b16 %v2727
    %v3090 = vunpack.c.l.b16 %v2728
    %v3091 = vunpack.c.h.b16 %v2728
    %v3092 = vunpack.c.l.b16 %v2729
    %v3093 = vunpack.c.l.b16 %v2730
    %v3094 = vunpack.c.h.b16 %v2730
    %v3095 = vunpack.c.l.b16 %v2731
    %v3096 = vunpack.c.l.b16 %v2732
    %v3097 = vunpack.c.h.b16 %v2732
    %v3098 = vunpack.c.l.b16 %v2733
    %v3099 = vunpack.c.l.b16 %v2734
    %v3100 = vunpack.c.h.b16 %v2734
    %v3101 = vunpack.c.l.b16 %v2735
    %v3102 = vunpack.c.l.b16 %v2736
    %v3103 = vunpack.c.h.b16 %v2736
    %v3104 = vunpack.c.l.b16 %v2737
    %v3105 = vunpack.c.l.b16 %v2738
    %v3106 = vunpack.c.h.b16 %v2738
    %v3107 = vunpack.c.l.b16 %v2739
    %v3108 = vunpack.c.l.b16 %v2740
    %v3109 = vunpack.c.h.b16 %v2740
    %v3110 = vunpack.c.l.b16 %v2741
    %v3111 = vunpack.c.l.b16 %v2742
    %v3112 = vunpack.c.h.b16 %v2742
    %v3113 = vunpack.c.l.b16 %v2743
    %v3114 = vunpack.c.l.b16 %v2744
    %v3115 = vunpack.c.h.b16 %v2744
    %v3116 = vunpack.c.l.b16 %v2745
    %v3117 = vunpack.c.l.b16 %v2746
    %v3118 = vunpack.c.h.b16 %v2746
    %v3119 = vunpack.c.l.b16 %v2747
    %v3120 = vunpack.c.l.b16 %v2748
    %v3121 = vunpack.c.h.b16 %v2748
    %v3122 = vunpack.c.l.b16 %v2749
    %v3123 = vunpack.c.l.b16 %v2750
    %v3124 = vunpack.c.h.b16 %v2750
    %v3125 = vunpack.c.l.b16 %v2751
    %v3126 = vunpack.c.l.b16 %v2752
    %v3127 = vunpack.c.h.b16 %v2752
    %v3128 = vunpack.c.l.b16 %v2753
    %v3129 = vunpack.c.l.b16 %v2754
    %v3130 = vunpack.c.h.b16 %v2754
    %v3131 = vunpack.c.l.b16 %v2755
    %v3132 = vunpack.c.l.b16 %v2756
    %v3133 = vunpack.c.h.b16 %v2756
    %v3134 = vunpack.c.l.b16 %v2757
    %v3135 = vunpack.c.l.b16 %v2758
    %v3136 = vunpack.c.h.b16 %v2758
    %v3137 = vunpack.c.l.b16 %v2759
    %v3138 = vunpack.c.l.b16 %v2760
    %v3139 = vunpack.c.h.b16 %v2760
    %v3140 = vunpack.c.l.b16 %v2761
    %v3141 = vunpack.c.l.b16 %v2762
    %v3142 = vunpack.c.h.b16 %v2762
    %v3143 = vunpack.c.l.b16 %v2763
    %v3144 = vunpack.c.l.b16 %v2764
    %v3145 = vunpack.c.h.b16 %v2764
    %v3146 = vunpack.c.l.b16 %v2765
    %v3147 = vunpack.c.l.b16 %v2766
    %v3148 = vunpack.c.h.b16 %v2766
    %v3149 = vunpack.c.l.b16 %v2767
    %v3150 = vunpack.c.l.b16 %v2768
    %v3151 = vunpack.c.h.b16 %v2768
    %v3152 = vunpack.c.l.b16 %v2769
    %v3153 = vunpack.c.l.b16 %v2770
    %v3154 = vunpack.c.h.b16 %v2770
    %v3155 = vunpack.c.l.b16 %v2771
    %v3156 = vunpack.c.l.b16 %v2772
    %v3157 = vunpack.c.h.b16 %v2772
    %v3158 = vunpack.c.l.b16 %v2773
    %v3159 = vunpack.c.l.b16 %v2774
    %v3160 = vunpack.c.h.b16 %v2774
    %v3161 = vunpack.c.l.b16 %v2775
    %v3162 = vunpack.c.l.b16 %v2776
    %v3163 = vunpack.c.h.b16 %v2776
    %v3164 = vunpack.c.l.b16 %v2777
    %v3165 = vunpack.c.l.b16 %v2778
    %v3166 = vunpack.c.h.b16 %v2778
    %v3167 = vunpack.c.l.b16 %v2779
    %v3168 = vunpack.c.l.b16 %v2780
    %v3169 = vunpack.c.h.b16 %v2780
    %v3170 = vunpack.c.l.b16 %v2781
    %v3171 = vunpack.c.l.b16 %v2782
    %v3172 = vunpack.c.h.b16 %v2782
    %v3173 = vunpack.c.l.b16 %v2783
    %v3174 = vunpack.c.l.b16 %v2784
    %v3175 = vunpack.c.h.b16 %v2784
    %v3176 = vunpack.c.l.b16 %v2785
    %v3177 = vunpack.c.l.b16 %v2786
    %v3178 = vunpack.c.h.b16 %v2786
    %v3179 = vunpack.c.l.b16 %v2787
    %v3180 = vunpack.c.l.b16 %v2788
    %v3181 = vunpack.c.h.b16 %v2788
    %v3182 = vunpack.c.l.b16 %v2789
    %v3183 = vunpack.c.l.b16 %v2790
    %v3184 = vunpack.c.h.b16 %v2790
    %v3185 = vunpack.c.l.b16 %v2791
    %v3186 = vunpack.c.l.b16 %v2792
    %v3187 = vunpack.c.h.b16 %v2792
    %v3188 = vunpack.c.l.b16 %v2793
    %v3189 = vunpack.c.l.b16 %v2794
    %v3190 = vunpack.c.h.b16 %v2794
    %v3191 = vunpack.c.l.b16 %v2795
    %v3192 = vunpack.c.l.b16 %v2796
    %v3193 = vunpack.c.h.b16 %v2796
    %v3194 = vunpack.c.l.b16 %v2797
    %v3195 = vunpack.c.l.b16 %v2798
    %v3196 = vunpack.c.h.b16 %v2798
    %v3197 = vunpack.c.l.b16 %v2799
    %v3198 = vunpack.c.l.b16 %v2800
    %v3199 = vunpack.c.h.b16 %v2800
    %v3200 = vunpack.c.l.b16 %v2801
    %v3201 = vunpack.c.l.b16 %v2802
    %v3202 = vunpack.c.h.b16 %v2802
    %v3203 = vunpack.c.l.b16 %v2803
    %v3204 = vunpack.c.l.b16 %v2804
    %v3205 = vunpack.c.h.b16 %v2804
    %v3206 = vunpack.c.l.b16 %v2805
    %v3207 = vunpack.c.l.b16 %v2806
    %v3208 = vunpack.c.h.b16 %v2806
    %v3209 = vunpack.c.l.b16 %v2807
    %v3210 = vunpack.c.l.b16 %v2808
    %v3211 = vunpack.c.h.b16 %v2808
    %v3212 = vunpack.c.l.b16 %v2809
    %v3213 = vunpack.c.l.b16 %v2810
    %v3214 = vunpack.c.h.b16 %v2810
    %v3215 = vunpack.c.l.b16 %v2811
    %v3216 = vunpack.c.l.b16 %v2812
    %v3217 = vunpack.c.h.b16 %v2812
    %v3218 = vunpack.c.l.b16 %v2813
    %v3219 = vunpack.c.l.b16 %v2814
    %v3220 = vunpack.c.h.b16 %v2814
    %v3221 = vunpack.c.l.b16 %v2815
    %v3222 = vunpack.c.l.b16 %v2816
    %v3223 = vunpack.c.h.b16 %v2816
    %v3224 = vunpack.c.l.b16 %v2817
    %v3225 = vunpack.c.l.b16 %v2818
    %v3226 = vunpack.c.h.b16 %v2818
    %v3227 = vunpack.c.l.b16 %v2819
    %v3228 = vunpack.c.l.b16 %v2820
    %v3229 = vunpack.c.h.b16 %v2820
    %v3230 = vunpack.c.l.b16 %v2821
    %v3231 = vunpack.c.l.b16 %v2822
    %v3232 = vunpack.c.h.b16 %v2822
    %v3233 = vunpack.c.l.b16 %v2823
    %v3234 = vunpack.c.l.b16 %v2824
    %v3235 = vunpack.c.h.b16 %v2824
    %v3236 = vunpack.c.l.b16 %v2825
    %v3237 = vunpack.c.l.b16 %v2826
    %v3238 = vunpack.c.h.b16 %v2826
    %v3239 = vunpack.c.l.b16 %v2827
    %v3240 = vunpack.c.l.b16 %v2828
    %v3241 = vunpack.c.h.b16 %v2828
    %v3242 = vunpack.c.l.b16 %v2829
    %v3243 = vunpack.c.l.b16 %v2830
    %v3244 = vunpack.c.h.b16 %v2830
    %v3245 = vunpack.c.l.b16 %v2831
    %v3246 = vunpack.c.l.b16 %v2832
    %v3247 = vunpack.c.h.b16 %v2832
    %v3248 = vunpack.c.l.b16 %v2833
    %v3249 = vunpack.c.l.b16 %v2834
    %v3250 = vunpack.c.h.b16 %v2834
    %v3251 = vunpack.c.l.b16 %v2835
    %v3252 = vunpack.c.l.b16 %v2836
    %v3253 = vunpack.c.h.b16 %v2836
    %v3254 = vunpack.c.l.b16 %v2837
    %v3255 = vpack.c.b16 %v3018, %v3015
    %v3256 = vpack.c.b16 %v3019, %v3016
    %v3257 = vpack.c.b16 %v3020, %v3017
    %v3258 = vpack.c.b16 %v3024, %v3021
    %v3259 = vpack.c.b16 %v3025, %v3022
    %v3260 = vpack.c.b16 %v3026, %v3023
    %v3261 = vpack.c.b16 %v3030, %v3027
    %v3262 = vpack.c.b16 %v3031, %v3028
    %v3263 = vpack.c.b16 %v3032, %v3029
    %v3264 = vpack.c.b16 %v3036, %v3033
    %v3265 = vpack.c.b16 %v3037, %v3034
    %v3266 = vpack.c.b16 %v3038, %v3035
    %v3267 = vpack.c.b16 %v3042, %v3039
    %v3268 = vpack.c.b16 %v3043, %v3040
    %v3269 = vpack.c.b16 %v3044, %v3041
    %v3270 = vpack.c.b16 %v3048, %v3045
    %v3271 = vpack.c.b16 %v3049, %v3046
    %v3272 = vpack.c.b16 %v3050, %v3047
    %v3273 = vpack.c.b16 %v3054, %v3051
    %v3274 = vpack.c.b16 %v3055, %v3052
    %v3275 = vpack.c.b16 %v3056, %v3053
    %v3276 = vpack.c.b16 %v3060, %v3057
    %v3277 = vpack.c.b16 %v3061, %v3058
    %v3278 = vpack.c.b16 %v3062, %v3059
    %v3279 = vpack.c.b16 %v3066, %v3063
    %v3280 = vpack.c.b16 %v3067, %v3064
    %v3281 = vpack.c.b16 %v3068, %v3065
    %v3282 = vpack.c.b16 %v3072, %v3069
    %v3283 = vpack.c.b16 %v3073, %v3070
    %v3284 = vpack.c.b16 %v3074, %v3071
    %v3285 = vpack.c.b16 %v3078, %v3075
    %v3286 = vpack.c.b16 %v3079, %v3076
    %v3287 = vpack.c.b16 %v3080, %v3077
    %v3288 = vpack.c.b16 %v3084, %v3081
    %v3289 = vpack.c.b16 %v3085, %v3082
    %v3290 = vpack.c.b16 %v3086, %v3083
    %v3291 = vpack.c.b16 %v3090, %v3087
    %v3292 = vpack.c.b16 %v3091, %v3088
    %v3293 = vpack.c.b16 %v3092, %v3089
    %v3294 = vpack.c.b16 %v3096, %v3093
    %v3295 = vpack.c.b16 %v3097, %v3094
    %v3296 = vpack.c.b16 %v3098, %v3095
    %v3297 = vpack.c.b16 %v3102, %v3099
    %v3298 = vpack.c.b16 %v3103, %v3100
    %v3299 = vpack.c.b16 %v3104, %v3101
    %v3300 = vpack.c.b16 %v3108, %v3105
    %v3301 = vpack.c.b16 %v3109, %v3106
    %v3302 = vpack.c.b16 %v3110, %v3107
    %v3303 = vpack.c.b16 %v3114, %v3111
    %v3304 = vpack.c.b16 %v3115, %v3112
    %v3305 = vpack.c.b16 %v3116, %v3113
    %v3306 = vpack.c.b16 %v3120, %v3117
    %v3307 = vpack.c.b16 %v3121, %v3118
    %v3308 = vpack.c.b16 %v3122, %v3119
    %v3309 = vpack.c.b16 %v3126, %v3123
    %v3310 = vpack.c.b16 %v3127, %v3124
    %v3311 = vpack.c.b16 %v3128, %v3125
    %v3312 = vpack.c.b16 %v3132, %v3129
    %v3313 = vpack.c.b16 %v3133, %v3130
    %v3314 = vpack.c.b16 %v3134, %v3131
    %v3315 = vpack.c.b16 %v3138, %v3135
    %v3316 = vpack.c.b16 %v3139, %v3136
    %v3317 = vpack.c.b16 %v3140, %v3137
    %v3318 = vpack.c.b16 %v3144, %v3141
    %v3319 = vpack.c.b16 %v3145, %v3142
    %v3320 = vpack.c.b16 %v3146, %v3143
    %v3321 = vpack.c.b16 %v3150, %v3147
    %v3322 = vpack.c.b16 %v3151, %v3148
    %v3323 = vpack.c.b16 %v3152, %v3149
    %v3324 = vpack.c.b16 %v3156, %v3153
    %v3325 = vpack.c.b16 %v3157, %v3154
    %v3326 = vpack.c.b16 %v3158, %v3155
    %v3327 = vpack.c.b16 %v3162, %v3159
    %v3328 = vpack.c.b16 %v3163, %v3160
    %v3329 = vpack.c.b16 %v3164, %v3161
    %v3330 = vpack.c.b16 %v3168, %v3165
    %v3331 = vpack.c.b16 %v3169, %v3166
    %v3332 = vpack.c.b16 %v3170, %v3167
    %v3333 = vpack.c.b16 %v3174, %v3171
    %v3334 = vpack.c.b16 %v3175, %v3172
    %v3335 = vpack.c.b16 %v3176, %v3173
    %v3336 = vpack.c.b16 %v3180, %v3177
    %v3337 = vpack.c.b16 %v3181, %v3178
    %v3338 = vpack.c.b16 %v3182, %v3179
    %v3339 = vpack.c.b16 %v3186, %v3183
    %v3340 = vpack.c.b16 %v3187, %v3184
    %v3341 = vpack.c.b16 %v3188, %v3185
    %v3342 = vpack.c.b16 %v3192, %v3189
    %v3343 = vpack.c.b16 %v3193, %v3190
    %v3344 = vpack.c.b16 %v3194, %v3191
    %v3345 = vpack.c.b16 %v3198, %v3195
    %v3346 = vpack.c.b16 %v3199, %v3196
    %v3347 = vpack.c.b16 %v3200, %v3197
    %v3348 = vpack.c.b16 %v3204, %v3201
    %v3349 = vpack.c.b16 %v3205, %v3202
    %v3350 = vpack.c.b16 %v3206, %v3203
    %v3351 = vpack.c.b16 %v3210, %v3207
    %v3352 = vpack.c.b16 %v3211, %v3208
    %v3353 = vpack.c.b16 %v3212, %v3209
    %v3354 = vpack.c.b16 %v3216, %v3213
    %v3355 = vpack.c.b16 %v3217, %v3214
    %v3356 = vpack.c.b16 %v3218, %v3215
    %v3357 = vpack.c.b16 %v3222, %v3219
    %v3358 = vpack.c.b16 %v3223, %v3220
    %v3359 = vpack.c.b16 %v3224, %v3221
    %v3360 = vpack.c.b16 %v3228, %v3225
    %v3361 = vpack.c.b16 %v3229, %v3226
    %v3362 = vpack.c.b16 %v3230, %v3227
    %v3363 = vpack.c.b16 %v3234, %v3231
    %v3364 = vpack.c.b16 %v3235, %v3232
    %v3365 = vpack.c.b16 %v3236, %v3233
    %v3366 = vpack.c.b16 %v3240, %v3237
    %v3367 = vpack.c.b16 %v3241, %v3238
    %v3368 = vpack.c.b16 %v3242, %v3239
    %v3369 = vpack.c.b16 %v3246, %v3243
    %v3370 = vpack.c.b16 %v3247, %v3244
    %v3371 = vpack.c.b16 %v3248, %v3245
    %v3372 = vpack.c.b16 %v3252, %v3249
    %v3373 = vpack.c.b16 %v3253, %v3250
    %v3374 = vpack.c.b16 %v3254, %v3251
    %3495 = vmatprep.subr.bf16.mxu0 %v3256
    %3496 = vmatpush1.bf16.msra.mxu0 %v3255
    %3497 = vmatprep.subr.bf16.mxu0 %v3259
    %3498 = vmatpush1.bf16.msra.mxu0 %v3258
    %3499 = vmatprep.subr.bf16.mxu0 %v3262
    %3500 = vmatpush1.bf16.msra.mxu0 %v3261
    %3501 = vmatprep.subr.bf16.mxu0 %v3265
    %3502 = vmatpush1.bf16.msra.mxu0 %v3264
    %3503 = vmatprep.subr.bf16.mxu0 %v3268
    %3504 = vmatpush1.bf16.msra.mxu0 %v3267
    %3505 = vmatprep.subr.bf16.mxu0 %v3271
    %3506 = vmatpush1.bf16.msra.mxu0 %v3270
    %3507 = vmatprep.subr.bf16.mxu0 %v3274
    %3508 = vmatpush1.bf16.msra.mxu0 %v3273
    %3509 = vmatprep.subr.bf16.mxu0 %v3277
    %3510 = vmatpush1.bf16.msra.mxu0 %v3276
    %3511 = vmatprep.subr.bf16.mxu0 %v3280
    %3512 = vmatpush1.bf16.msra.mxu0 %v3279
    %3513 = vmatprep.subr.bf16.mxu0 %v3283
    %3514 = vmatpush1.bf16.msra.mxu0 %v3282
    %3515 = vmatprep.subr.bf16.mxu0 %v3286
    %3516 = vmatpush1.bf16.msra.mxu0 %v3285
    %3517 = vmatprep.subr.bf16.mxu0 %v3289
    %3518 = vmatpush1.bf16.msra.mxu0 %v3288
    %3519 = vmatprep.subr.bf16.mxu0 %v3292
    %3520 = vmatpush1.bf16.msra.mxu0 %v3291
    %3521 = vmatprep.subr.bf16.mxu0 %v3295
    %3522 = vmatpush1.bf16.msra.mxu0 %v3294
    %3523 = vmatprep.subr.bf16.mxu0 %v3298
    %3524 = vmatpush1.bf16.msra.mxu0 %v3297
    %3525 = vmatprep.subr.bf16.mxu0 %v3301
    %3526 = vmatpush1.bf16.msra.mxu0 %v3300
    %3527 = vmatprep.mubr.bf16.mxu0 %v2674
    %3528 = vmatmul.mubr.bf16.gmra.mrb[0].mxu0 %v2673
    %v3529 = vpop.f32.mrb[0].mxu0
    %v3530 = vadd.f32 %v2843, %v3529
    %v3531 = vpop.f32.mrb[0].mxu0
    %v3532 = vadd.f32 %v2847, %v3531
    %v3533 = vpop.f32.mrb[0].mxu0
    %v3534 = vpop.f32.mrb[0].mxu0
    %3535 = vdwg.mxu0
    %3536 = vmatprep.subr.bf16.mxu0 %v3304
    %3537 = vmatpush1.bf16.msra.mxu0 %v3303
    %3538 = vmatprep.subr.bf16.mxu0 %v3307
    %3539 = vmatpush1.bf16.msra.mxu0 %v3306
    %3540 = vmatprep.subr.bf16.mxu0 %v3310
    %3541 = vmatpush1.bf16.msra.mxu0 %v3309
    %3542 = vmatprep.subr.bf16.mxu0 %v3313
    %3543 = vmatpush1.bf16.msra.mxu0 %v3312
    %3544 = vmatprep.subr.bf16.mxu0 %v3316
    %3545 = vmatpush1.bf16.msra.mxu0 %v3315
    %3546 = vmatprep.subr.bf16.mxu0 %v3319
    %3547 = vmatpush1.bf16.msra.mxu0 %v3318
    %3548 = vmatprep.subr.bf16.mxu0 %v3322
    %3549 = vmatpush1.bf16.msra.mxu0 %v3321
    %3550 = vmatprep.subr.bf16.mxu0 %v3325
    %3551 = vmatpush1.bf16.msra.mxu0 %v3324
    %3552 = vmatprep.subr.bf16.mxu0 %v3328
    %3553 = vmatpush1.bf16.msra.mxu0 %v3327
    %3554 = vmatprep.subr.bf16.mxu0 %v3331
    %3555 = vmatpush1.bf16.msra.mxu0 %v3330
    %3556 = vmatprep.subr.bf16.mxu0 %v3334
    %3557 = vmatpush1.bf16.msra.mxu0 %v3333
    %3558 = vmatprep.subr.bf16.mxu0 %v3337
    %3559 = vmatpush1.bf16.msra.mxu0 %v3336
    %3560 = vmatprep.subr.bf16.mxu0 %v3340
    %3561 = vmatpush1.bf16.msra.mxu0 %v3339
    %3562 = vmatprep.subr.bf16.mxu0 %v3343
    %3563 = vmatpush1.bf16.msra.mxu0 %v3342
    %3564 = vmatprep.subr.bf16.mxu0 %v3346
    %3565 = vmatpush1.bf16.msra.mxu0 %v3345
    %3566 = vmatprep.subr.bf16.mxu0 %v3349
    %3567 = vmatpush1.bf16.msra.mxu0 %v3348
    %3568 = vmatprep.mubr.bf16.mxu0 %v2676
    %3569 = vmatmul.mubr.bf16.gmra.mrb[0].mxu0 %v2675
    %v3570 = vpop.f32.mrb[0].mxu0
    %v3571 = vadd.f32 %v3530, %v3570
    %v3572 = vpop.f32.mrb[0].mxu0
    %v3573 = vadd.f32 %v3532, %v3572
    %v3574 = vpop.f32.mrb[0].mxu0
    %v3575 = vpop.f32.mrb[0].mxu0
    %3576 = vdwg.mxu0
    %3577 = vmatprep.subr.bf16.mxu0 %v3352
    %3578 = vmatpush1.bf16.msra.mxu0 %v3351
    %3579 = vmatprep.subr.bf16.mxu0 %v3355
    %3580 = vmatpush1.bf16.msra.mxu0 %v3354
    %3581 = vmatprep.subr.bf16.mxu0 %v3358
    %3582 = vmatpush1.bf16.msra.mxu0 %v3357
    %3583 = vmatprep.subr.bf16.mxu0 %v3361
    %3584 = vmatpush1.bf16.msra.mxu0 %v3360
    %3585 = vmatprep.subr.bf16.mxu0 %v3364
    %3586 = vmatpush1.bf16.msra.mxu0 %v3363
    %3587 = vmatprep.subr.bf16.mxu0 %v3367
    %3588 = vmatpush1.bf16.msra.mxu0 %v3366
    %3589 = vmatprep.subr.bf16.mxu0 %v3370
    %3590 = vmatpush1.bf16.msra.mxu0 %v3369
    %3591 = vmatprep.subr.bf16.mxu0 %v3373
    %3592 = vmatpush1.bf16.msra.mxu0 %v3372
    %3593 = vmatprep.subr.bf16.mxu0 0
    %3594 = vmatpush1.bf16.msra.mxu0 0
    %3595 = vmatprep.subr.bf16.mxu0 0
    %3596 = vmatpush1.bf16.msra.mxu0 0
    %3597 = vmatprep.subr.bf16.mxu0 0
    %3598 = vmatpush1.bf16.msra.mxu0 0
    %3599 = vmatprep.subr.bf16.mxu0 0
    %3600 = vmatpush1.bf16.msra.mxu0 0
    %3601 = vmatprep.subr.bf16.mxu0 0
    %3602 = vmatpush1.bf16.msra.mxu0 0
    %3603 = vmatprep.subr.bf16.mxu0 0
    %3604 = vmatpush1.bf16.msra.mxu0 0
    %3605 = vmatprep.subr.bf16.mxu0 0
    %3606 = vmatpush1.bf16.msra.mxu0 0
    %3607 = vmatprep.subr.bf16.mxu0 0
    %3608 = vmatpush1.bf16.msra.mxu0 0
    %3609 = vmatprep.mubr.bf16.mxu0 0
    %3610 = vmatmul.mubr.bf16.gmra.mrb[0].mxu0 %v2677
    %v3611 = vpop.f32.mrb[0].mxu0
    %v3612 = vadd.f32 %v3571, %v3611
    %v3613 = vpop.f32.mrb[0].mxu0
    %v3614 = vadd.f32 %v3573, %v3613
    %v3615 = vpop.f32.mrb[0].mxu0
    %v3616 = vpop.f32.mrb[0].mxu0
    %3617 = vdwg.mxu0
    %3618 = vmatprep.subr.bf16.mxu0 0
    %3619 = vmatpush1.bf16.msra.mxu0 %v3257
    %3620 = vmatprep.subr.bf16.mxu0 0
    %3621 = vmatpush1.bf16.msra.mxu0 %v3260
    %3622 = vmatprep.subr.bf16.mxu0 0
    %3623 = vmatpush1.bf16.msra.mxu0 %v3263
    %3624 = vmatprep.subr.bf16.mxu0 0
    %3625 = vmatpush1.bf16.msra.mxu0 %v3266
    %3626 = vmatprep.subr.bf16.mxu0 0
    %3627 = vmatpush1.bf16.msra.mxu0 %v3269
    %3628 = vmatprep.subr.bf16.mxu0 0
    %3629 = vmatpush1.bf16.msra.mxu0 %v3272
    %3630 = vmatprep.subr.bf16.mxu0 0
    %3631 = vmatpush1.bf16.msra.mxu0 %v3275
    %3632 = vmatprep.subr.bf16.mxu0 0
    %3633 = vmatpush1.bf16.msra.mxu0 %v3278
    %3634 = vmatprep.subr.bf16.mxu0 0
    %3635 = vmatpush1.bf16.msra.mxu0 %v3281
    %3636 = vmatprep.subr.bf16.mxu0 0
    %3637 = vmatpush1.bf16.msra.mxu0 %v3284
    %3638 = vmatprep.subr.bf16.mxu0 0
    %3639 = vmatpush1.bf16.msra.mxu0 %v3287
    %3640 = vmatprep.subr.bf16.mxu0 0
    %3641 = vmatpush1.bf16.msra.mxu0 %v3290
    %3642 = vmatprep.subr.bf16.mxu0 0
    %3643 = vmatpush1.bf16.msra.mxu0 %v3293
    %3644 = vmatprep.subr.bf16.mxu0 0
    %3645 = vmatpush1.bf16.msra.mxu0 %v3296
    %3646 = vmatprep.subr.bf16.mxu0 0
    %3647 = vmatpush1.bf16.msra.mxu0 %v3299
    %3648 = vmatprep.subr.bf16.mxu0 0
    %3649 = vmatpush1.bf16.msra.mxu0 %v3302
    %3650 = vmatprep.mubr.bf16.mxu0 %v2674
    %3651 = vmatmul.mubr.bf16.gmra.mrb[0].mxu0 %v2673
    %v3652 = vpop.f32.mrb[0].mxu0
    %v3653 = vadd.f32 %v2851, %v3652
    %v3654 = vpop.f32.mrb[0].mxu0
    %v3655 = vpop.f32.mrb[0].mxu0
    %v3656 = vpop.f32.mrb[0].mxu0
    %3657 = vdwg.mxu0
    %3658 = vmatprep.subr.bf16.mxu0 0
    %3659 = vmatpush1.bf16.msra.mxu0 %v3305
    %3660 = vmatprep.subr.bf16.mxu0 0
    %3661 = vmatpush1.bf16.msra.mxu0 %v3308
    %3662 = vmatprep.subr.bf16.mxu0 0
    %3663 = vmatpush1.bf16.msra.mxu0 %v3311
    %3664 = vmatprep.subr.bf16.mxu0 0
    %3665 = vmatpush1.bf16.msra.mxu0 %v3314
    %3666 = vmatprep.subr.bf16.mxu0 0
    %3667 = vmatpush1.bf16.msra.mxu0 %v3317
    %3668 = vmatprep.subr.bf16.mxu0 0
    %3669 = vmatpush1.bf16.msra.mxu0 %v3320
    %3670 = vmatprep.subr.bf16.mxu0 0
    %3671 = vmatpush1.bf16.msra.mxu0 %v3323
    %3672 = vmatprep.subr.bf16.mxu0 0
    %3673 = vmatpush1.bf16.msra.mxu0 %v3326
    %3674 = vmatprep.subr.bf16.mxu0 0
    %3675 = vmatpush1.bf16.msra.mxu0 %v3329
    %3676 = vmatprep.subr.bf16.mxu0 0
    %3677 = vmatpush1.bf16.msra.mxu0 %v3332
    %3678 = vmatprep.subr.bf16.mxu0 0
    %3679 = vmatpush1.bf16.msra.mxu0 %v3335
    %3680 = vmatprep.subr.bf16.mxu0 0
    %3681 = vmatpush1.bf16.msra.mxu0 %v3338
    %3682 = vmatprep.subr.bf16.mxu0 0
    %3683 = vmatpush1.bf16.msra.mxu0 %v3341
    %3684 = vmatprep.subr.bf16.mxu0 0
    %3685 = vmatpush1.bf16.msra.mxu0 %v3344
    %3686 = vmatprep.subr.bf16.mxu0 0
    %3687 = vmatpush1.bf16.msra.mxu0 %v3347
    %3688 = vmatprep.subr.bf16.mxu0 0
    %3689 = vmatpush1.bf16.msra.mxu0 %v3350
    %3690 = vmatprep.mubr.bf16.mxu0 %v2676
    %3691 = vmatmul.mubr.bf16.gmra.mrb[0].mxu0 %v2675
    %v3692 = vpop.f32.mrb[0].mxu0
    %v3693 = vadd.f32 %v3653, %v3692
    %v3694 = vpop.f32.mrb[0].mxu0
    %v3695 = vpop.f32.mrb[0].mxu0
    %v3696 = vpop.f32.mrb[0].mxu0
    %3697 = vdwg.mxu0
    %3698 = vmatprep.subr.bf16.mxu0 0
    %3699 = vmatpush1.bf16.msra.mxu0 %v3353
    %3700 = vmatprep.subr.bf16.mxu0 0
    %3701 = vmatpush1.bf16.msra.mxu0 %v3356
    %3702 = vmatprep.subr.bf16.mxu0 0
    %3703 = vmatpush1.bf16.msra.mxu0 %v3359
    %3704 = vmatprep.subr.bf16.mxu0 0
    %3705 = vmatpush1.bf16.msra.mxu0 %v3362
    %3706 = vmatprep.subr.bf16.mxu0 0
    %3707 = vmatpush1.bf16.msra.mxu0 %v3365
    %3708 = vmatprep.subr.bf16.mxu0 0
    %3709 = vmatpush1.bf16.msra.mxu0 %v3368
    %3710 = vmatprep.subr.bf16.mxu0 0
    %3711 = vmatpush1.bf16.msra.mxu0 %v3371
    %3712 = vmatprep.subr.bf16.mxu0 0
    %3713 = vmatpush1.bf16.msra.mxu0 %v3374
    %3714 = vmatprep.subr.bf16.mxu0 0
    %3715 = vmatpush1.bf16.msra.mxu0 0
    %3716 = vmatprep.subr.bf16.mxu0 0
    %3717 = vmatpush1.bf16.msra.mxu0 0
    %3718 = vmatprep.subr.bf16.mxu0 0
    %3719 = vmatpush1.bf16.msra.mxu0 0
    %3720 = vmatprep.subr.bf16.mxu0 0
    %3721 = vmatpush1.bf16.msra.mxu0 0
    %3722 = vmatprep.subr.bf16.mxu0 0
    %3723 = vmatpush1.bf16.msra.mxu0 0
    %3724 = vmatprep.subr.bf16.mxu0 0
    %3725 = vmatpush1.bf16.msra.mxu0 0
    %3726 = vmatprep.subr.bf16.mxu0 0
    %3727 = vmatpush1.bf16.msra.mxu0 0
    %3728 = vmatprep.subr.bf16.mxu0 0
    %3729 = vmatpush1.bf16.msra.mxu0 0
    %3730 = vmatprep.mubr.bf16.mxu0 0
    %3731 = vmatmul.mubr.bf16.gmra.mrb[0].mxu0 %v2677
    %v3732 = vpop.f32.mrb[0].mxu0
    %v3733 = vadd.f32 %v3693, %v3732
    %v3734 = vpop.f32.mrb[0].mxu0
    %v3735 = vpop.f32.mrb[0].mxu0
    %v3736 = vpop.f32.mrb[0].mxu0
    %3737 = vdwg.mxu0
    %v3738 = vmax.f32 %v3612, 0.0
    %v3739 = vmax.f32 %v3614, 0.0
    %v3740 = vmax.f32 %v3733, 0.0
    %v3741 = vrot.slane %v3738, 4
    %v3742 = vadd.f32 %v3738, %v3741
    %v3743 = vrot.slane %v3742, 2
    %v3744 = vadd.f32 %v3742, %v3743
    %v3745 = vrot.slane %v3744, 1
    %v3746 = vadd.f32 %v3744, %v3745
    %v3747 = vrot.slane %v3739, 4
    %v3748 = vadd.f32 %v3739, %v3747
    %v3749 = vrot.slane %v3748, 2
    %v3750 = vadd.f32 %v3748, %v3749
    %v3751 = vrot.slane %v3750, 1
    %v3752 = vadd.f32 %v3750, %v3751
    %v3753 = vrot.slane %v3740, 4
    %v3754 = vadd.f32 %v3740, %v3753
    %v3755 = vrot.slane %v3754, 2
    %v3756 = vadd.f32 %v3754, %v3755
    %v3757 = vrot.slane %v3756, 1
    %v3758 = vadd.f32 %v3756, %v3757
    %v3759 = vmul.f32 %v3738, %v3738
    %v3760 = vmul.f32 %v3739, %v3739
    %v3761 = vmul.f32 %v3740, %v3740
    %v3762 = vrot.slane %v3759, 4
    %v3763 = vadd.f32 %v3759, %v3762
    %v3764 = vrot.slane %v3763, 2
    %v3765 = vadd.f32 %v3763, %v3764
    %v3766 = vrot.slane %v3765, 1
    %v3767 = vadd.f32 %v3765, %v3766
    %v3768 = vrot.slane %v3760, 4
    %v3769 = vadd.f32 %v3760, %v3768
    %v3770 = vrot.slane %v3769, 2
    %v3771 = vadd.f32 %v3769, %v3770
    %v3772 = vrot.slane %v3771, 1
    %v3773 = vadd.f32 %v3771, %v3772
    %v3774 = vrot.slane %v3761, 4
    %v3775 = vadd.f32 %v3761, %v3774
    %v3776 = vrot.slane %v3775, 2
    %v3777 = vadd.f32 %v3775, %v3776
    %v3778 = vrot.slane %v3777, 1
    %v3779 = vadd.f32 %v3777, %v3778
    %v3780 = vmul.f32 %v3746, 0.125
    %v3781 = vmul.f32 %v3752, 0.125
    %v3782 = vmul.f32 %v3758, 0.125
    %v3783 = vmul.f32 %v3767, 0.125
    %v3784 = vmul.f32 %v3773, 0.125
    %v3785 = vmul.f32 %v3779, 0.125
    %v3786 = vmul.f32 %v3780, %v3780
    %v3787 = vmul.f32 %v3781, %v3781
    %v3788 = vmul.f32 %v3782, %v3782
    %v3789 = vsub.f32 %v3783, %v3786
    %v3790 = vsub.f32 %v3784, %v3787
    %v3791 = vsub.f32 %v3785, %v3788
    %v3792 = vmax.f32 %v3789, 0.0
    %v3793 = vmax.f32 %v3790, 0.0
    %v3794 = vmax.f32 %v3791, 0.0
    %v3795 = vld [vmem:[#allocation14] sm:$0x7]
    %v3796 = vsub.f32 %v3738, %v3780
    %v3797 = vsub.f32 %v3739, %v3781
    %v3798 = vsub.f32 %v3740, %v3782
    %v3800 = vlaneseq
    %v3801 = vshrl.u32 %v3800, 7
    %v3802 = vsub.s32 0, %v3801
    %v3803 = vrot.slane %v3795, %v3802
    %v3804 = vlaneseq
    %v3805 = vshrl.u32 %v3804, 7
    %v3806 = vsub.s32 1, %v3805
    %v3807 = vrot.slane %v3795, %v3806
    %v3808 = vlaneseq
    %v3809 = vshrl.u32 %v3808, 7
    %v3810 = vsub.s32 2, %v3809
    %v3811 = vrot.slane %v3795, %v3810
    %v3815 = vmul.f32 %v3803, %v3796
    %v3816 = vmul.f32 %v3807, %v3797
    %v3817 = vmul.f32 %v3811, %v3798
    %v3818 = vadd.f32 %v3792, 1e-05
    %v3819 = vadd.f32 %v3793, 1e-05
    %v3820 = vadd.f32 %v3794, 1e-05
    %v3821 = vrsqrt.pop %v3818
    %v3822 = vrsqrt.pop %v3819
    %v3823 = vrsqrt.pop %v3820
    %v3824 = vmul.f32 %v3815, %v3821
    %v3825 = vmul.f32 %v3816, %v3822
    %v3826 = vmul.f32 %v3817, %v3823
    %v3827 = vld [vmem:[#allocation16] sm:$0x7]
    %v3829 = vlaneseq
    %v3830 = vshrl.u32 %v3829, 7
    %v3831 = vsub.s32 0, %v3830
    %v3832 = vrot.slane %v3827, %v3831
    %v3833 = vlaneseq
    %v3834 = vshrl.u32 %v3833, 7
    %v3835 = vsub.s32 1, %v3834
    %v3836 = vrot.slane %v3827, %v3835
    %v3837 = vlaneseq
    %v3838 = vshrl.u32 %v3837, 7
    %v3839 = vsub.s32 2, %v3838
    %v3840 = vrot.slane %v3827, %v3839
    %v3844 = vadd.f32 %v3824, %v3832
    %v3845 = vadd.f32 %v3825, %v3836
    %v3846 = vadd.f32 %v3826, %v3840
    %v3847 = vpack.c.bf16 %v3844, %v3844
    %v3848 = vpack.c.bf16 %v3845, %v3845
    %v3849 = vpack.c.bf16 %v3846, %v3846
    %v3850 = vld [vmem:[#allocation17] sm:$0xff]
    %v3851 = vld [vmem:[#allocation17 + $0x8] sm:$0xff]
    %v3852 = vld [vmem:[#allocation17 + $0x10] sm:$0xff]
    %v3853 = vld [vmem:[#allocation17 + $0x18] sm:$0xff]
    %v3854 = vld [vmem:[#allocation17 + $0x20] sm:$0xff]
    %v3855 = vld [vmem:[#allocation17 + $0x28] sm:$0xff]
    %v3856 = vld [vmem:[#allocation17 + $0x30] sm:$0xff]
    %v3857 = vld [vmem:[#allocation17 + $0x38] sm:$0xff]
    %v3858 = vld [vmem:[#allocation17 + $0x40] sm:$0xff]
    %v3859 = vld [vmem:[#allocation17 + $0x48] sm:$0xff]
    %v3860 = vld [vmem:[#allocation17 + $0x50] sm:$0xff]
    %v3861 = vld [vmem:[#allocation17 + $0x58] sm:$0xff]
    %v3862 = vld [vmem:[#allocation17 + $0x60] sm:$0xff]
    %v3863 = vld [vmem:[#allocation17 + $0x68] sm:$0xff]
    %v3864 = vld [vmem:[#allocation17 + $0x70] sm:$0xff]
    %v3865 = vld [vmem:[#allocation17 + $0x78] sm:$0xff]
    %v3866 = vld [vmem:[#allocation17 + $0x80] sm:$0xff]
    %v3867 = vld [vmem:[#allocation17 + $0x88] sm:$0xff]
    %v3868 = vld [vmem:[#allocation17 + $0x90] sm:$0xff]
    %v3869 = vld [vmem:[#allocation17 + $0x98] sm:$0xff]
    %v3870 = vld [vmem:[#allocation17 + $0xa0] sm:$0xff]
    %v3871 = vld [vmem:[#allocation17 + $0xa8] sm:$0xff]
    %v3872 = vld [vmem:[#allocation17 + $0xb0] sm:$0xff]
    %v3873 = vld [vmem:[#allocation17 + $0xb8] sm:$0xff]
    %v3874 = vld [vmem:[#allocation17 + $0xc0] sm:$0xff]
    %v3875 = vld [vmem:[#allocation17 + $0xc8] sm:$0xff]
    %v3876 = vld [vmem:[#allocation17 + $0xd0] sm:$0xff]
    %v3877 = vld [vmem:[#allocation17 + $0xd8] sm:$0xff]
    %v3878 = vld [vmem:[#allocation17 + $0xe0] sm:$0xff]
    %v3879 = vld [vmem:[#allocation17 + $0xe8] sm:$0xff]
    %v3880 = vld [vmem:[#allocation17 + $0xf0] sm:$0xff]
    %v3881 = vld [vmem:[#allocation17 + $0xf8] sm:$0xff]
    %v3882 = vld [vmem:[#allocation17 + $0x100] sm:$0xff]
    %v3883 = vld [vmem:[#allocation17 + $0x108] sm:$0xff]
    %v3884 = vld [vmem:[#allocation17 + $0x110] sm:$0xff]
    %v3885 = vld [vmem:[#allocation17 + $0x118] sm:$0xff]
    %v3886 = vld [vmem:[#allocation17 + $0x120] sm:$0xff]
    %v3887 = vld [vmem:[#allocation17 + $0x128] sm:$0xff]
    %v3888 = vld [vmem:[#allocation17 + $0x130] sm:$0xff]
    %v3889 = vld [vmem:[#allocation17 + $0x138] sm:$0xff]
    %v3890 = vld [vmem:[#allocation17 + $0x140] sm:$0xff]
    %v3891 = vld [vmem:[#allocation17 + $0x148] sm:$0xff]
    %v3892 = vld [vmem:[#allocation17 + $0x150] sm:$0xff]
    %v3893 = vld [vmem:[#allocation17 + $0x158] sm:$0xff]
    %v3894 = vld [vmem:[#allocation17 + $0x160] sm:$0xff]
    %v3895 = vld [vmem:[#allocation17 + $0x168] sm:$0xff]
    %v3896 = vld [vmem:[#allocation17 + $0x170] sm:$0xff]
    %v3897 = vld [vmem:[#allocation17 + $0x178] sm:$0xff]
    %v3898 = vld [vmem:[#allocation19] sm:$0x3]
    %v3900 = vlaneseq
    %v3901 = vshrl.u32 %v3900, 7
    %v3902 = vsub.s32 0, %v3901
    %v3903 = vrot.slane %v3898, %v3902
    %v3904 = vlaneseq
    %v3905 = vshrl.u32 %v3904, 7
    %v3906 = vsub.s32 1, %v3905
    %v3907 = vrot.slane %v3898, %v3906
    %v3958 = vunpack.c.l.b16 %v3850
    %v3959 = vunpack.c.h.b16 %v3850
    %v3960 = vunpack.c.l.b16 %v3851
    %v3961 = vunpack.c.h.b16 %v3851
    %v3962 = vunpack.c.l.b16 %v3852
    %v3963 = vunpack.c.h.b16 %v3852
    %v3964 = vunpack.c.l.b16 %v3853
    %v3965 = vunpack.c.h.b16 %v3853
    %v3966 = vunpack.c.l.b16 %v3854
    %v3967 = vunpack.c.h.b16 %v3854
    %v3968 = vunpack.c.l.b16 %v3855
    %v3969 = vunpack.c.h.b16 %v3855
    %v3970 = vunpack.c.l.b16 %v3856
    %v3971 = vunpack.c.h.b16 %v3856
    %v3972 = vunpack.c.l.b16 %v3857
    %v3973 = vunpack.c.h.b16 %v3857
    %v3974 = vunpack.c.l.b16 %v3858
    %v3975 = vunpack.c.h.b16 %v3858
    %v3976 = vunpack.c.l.b16 %v3859
    %v3977 = vunpack.c.h.b16 %v3859
    %v3978 = vunpack.c.l.b16 %v3860
    %v3979 = vunpack.c.h.b16 %v3860
    %v3980 = vunpack.c.l.b16 %v3861
    %v3981 = vunpack.c.h.b16 %v3861
    %v3982 = vunpack.c.l.b16 %v3862
    %v3983 = vunpack.c.h.b16 %v3862
    %v3984 = vunpack.c.l.b16 %v3863
    %v3985 = vunpack.c.h.b16 %v3863
    %v3986 = vunpack.c.l.b16 %v3864
    %v3987 = vunpack.c.h.b16 %v3864
    %v3988 = vunpack.c.l.b16 %v3865
    %v3989 = vunpack.c.h.b16 %v3865
    %v3990 = vunpack.c.l.b16 %v3866
    %v3991 = vunpack.c.h.b16 %v3866
    %v3992 = vunpack.c.l.b16 %v3867
    %v3993 = vunpack.c.h.b16 %v3867
    %v3994 = vunpack.c.l.b16 %v3868
    %v3995 = vunpack.c.h.b16 %v3868
    %v3996 = vunpack.c.l.b16 %v3869
    %v3997 = vunpack.c.h.b16 %v3869
    %v3998 = vunpack.c.l.b16 %v3870
    %v3999 = vunpack.c.h.b16 %v3870
    %v4000 = vunpack.c.l.b16 %v3871
    %v4001 = vunpack.c.h.b16 %v3871
    %v4002 = vunpack.c.l.b16 %v3872
    %v4003 = vunpack.c.h.b16 %v3872
    %v4004 = vunpack.c.l.b16 %v3873
    %v4005 = vunpack.c.h.b16 %v3873
    %v4006 = vunpack.c.l.b16 %v3874
    %v4007 = vunpack.c.h.b16 %v3874
    %v4008 = vunpack.c.l.b16 %v3875
    %v4009 = vunpack.c.h.b16 %v3875
    %v4010 = vunpack.c.l.b16 %v3876
    %v4011 = vunpack.c.h.b16 %v3876
    %v4012 = vunpack.c.l.b16 %v3877
    %v4013 = vunpack.c.h.b16 %v3877
    %v4014 = vunpack.c.l.b16 %v3878
    %v4015 = vunpack.c.h.b16 %v3878
    %v4016 = vunpack.c.l.b16 %v3879
    %v4017 = vunpack.c.h.b16 %v3879
    %v4018 = vunpack.c.l.b16 %v3880
    %v4019 = vunpack.c.h.b16 %v3880
    %v4020 = vunpack.c.l.b16 %v3881
    %v4021 = vunpack.c.h.b16 %v3881
    %v4022 = vunpack.c.l.b16 %v3882
    %v4023 = vunpack.c.h.b16 %v3882
    %v4024 = vunpack.c.l.b16 %v3883
    %v4025 = vunpack.c.h.b16 %v3883
    %v4026 = vunpack.c.l.b16 %v3884
    %v4027 = vunpack.c.h.b16 %v3884
    %v4028 = vunpack.c.l.b16 %v3885
    %v4029 = vunpack.c.h.b16 %v3885
    %v4030 = vunpack.c.l.b16 %v3886
    %v4031 = vunpack.c.h.b16 %v3886
    %v4032 = vunpack.c.l.b16 %v3887
    %v4033 = vunpack.c.h.b16 %v3887
    %v4034 = vunpack.c.l.b16 %v3888
    %v4035 = vunpack.c.h.b16 %v3888
    %v4036 = vunpack.c.l.b16 %v3889
    %v4037 = vunpack.c.h.b16 %v3889
    %v4038 = vunpack.c.l.b16 %v3890
    %v4039 = vunpack.c.h.b16 %v3890
    %v4040 = vunpack.c.l.b16 %v3891
    %v4041 = vunpack.c.h.b16 %v3891
    %v4042 = vunpack.c.l.b16 %v3892
    %v4043 = vunpack.c.h.b16 %v3892
    %v4044 = vunpack.c.l.b16 %v3893
    %v4045 = vunpack.c.h.b16 %v3893
    %v4046 = vunpack.c.l.b16 %v3894
    %v4047 = vunpack.c.h.b16 %v3894
    %v4048 = vunpack.c.l.b16 %v3895
    %v4049 = vunpack.c.h.b16 %v3895
    %v4050 = vunpack.c.l.b16 %v3896
    %v4051 = vunpack.c.h.b16 %v3896
    %v4052 = vunpack.c.l.b16 %v3897
    %v4053 = vunpack.c.h.b16 %v3897
    %v4054 = vpack.c.b16 %v3960, %v3958
    %v4055 = vpack.c.b16 %v3961, %v3959
    %v4056 = vpack.c.b16 %v3964, %v3962
    %v4057 = vpack.c.b16 %v3965, %v3963
    %v4058 = vpack.c.b16 %v3968, %v3966
    %v4059 = vpack.c.b16 %v3969, %v3967
    %v4060 = vpack.c.b16 %v3972, %v3970
    %v4061 = vpack.c.b16 %v3973, %v3971
    %v4062 = vpack.c.b16 %v3976, %v3974
    %v4063 = vpack.c.b16 %v3977, %v3975
    %v4064 = vpack.c.b16 %v3980, %v3978
    %v4065 = vpack.c.b16 %v3981, %v3979
    %v4066 = vpack.c.b16 %v3984, %v3982
    %v4067 = vpack.c.b16 %v3985, %v3983
    %v4068 = vpack.c.b16 %v3988, %v3986
    %v4069 = vpack.c.b16 %v3989, %v3987
    %v4070 = vpack.c.b16 %v3992, %v3990
    %v4071 = vpack.c.b16 %v3993, %v3991
    %v4072 = vpack.c.b16 %v3996, %v3994
    %v4073 = vpack.c.b16 %v3997, %v3995
    %v4074 = vpack.c.b16 %v4000, %v3998
    %v4075 = vpack.c.b16 %v4001, %v3999
    %v4076 = vpack.c.b16 %v4004, %v4002
    %v4077 = vpack.c.b16 %v4005, %v4003
    %v4078 = vpack.c.b16 %v4008, %v4006
    %v4079 = vpack.c.b16 %v4009, %v4007
    %v4080 = vpack.c.b16 %v4012, %v4010
    %v4081 = vpack.c.b16 %v4013, %v4011
    %v4082 = vpack.c.b16 %v4016, %v4014
    %v4083 = vpack.c.b16 %v4017, %v4015
    %v4084 = vpack.c.b16 %v4020, %v4018
    %v4085 = vpack.c.b16 %v4021, %v4019
    %v4086 = vpack.c.b16 %v4024, %v4022
    %v4087 = vpack.c.b16 %v4025, %v4023
    %v4088 = vpack.c.b16 %v4028, %v4026
    %v4089 = vpack.c.b16 %v4029, %v4027
    %v4090 = vpack.c.b16 %v4032, %v4030
    %v4091 = vpack.c.b16 %v4033, %v4031
    %v4092 = vpack.c.b16 %v4036, %v4034
    %v4093 = vpack.c.b16 %v4037, %v4035
    %v4094 = vpack.c.b16 %v4040, %v4038
    %v4095 = vpack.c.b16 %v4041, %v4039
    %v4096 = vpack.c.b16 %v4044, %v4042
    %v4097 = vpack.c.b16 %v4045, %v4043
    %v4098 = vpack.c.b16 %v4048, %v4046
    %v4099 = vpack.c.b16 %v4049, %v4047
    %v4100 = vpack.c.b16 %v4052, %v4050
    %v4101 = vpack.c.b16 %v4053, %v4051
    %4150 = vmatprep.subr.bf16.mxu0 %v4055
    %4151 = vmatpush1.bf16.msra.mxu0 %v4054
    %4152 = vmatprep.subr.bf16.mxu0 %v4057
    %4153 = vmatpush1.bf16.msra.mxu0 %v4056
    %4154 = vmatprep.subr.bf16.mxu0 %v4059
    %4155 = vmatpush1.bf16.msra.mxu0 %v4058
    %4156 = vmatprep.subr.bf16.mxu0 %v4061
    %4157 = vmatpush1.bf16.msra.mxu0 %v4060
    %4158 = vmatprep.subr.bf16.mxu0 %v4063
    %4159 = vmatpush1.bf16.msra.mxu0 %v4062
    %4160 = vmatprep.subr.bf16.mxu0 %v4065
    %4161 = vmatpush1.bf16.msra.mxu0 %v4064
    %4162 = vmatprep.subr.bf16.mxu0 %v4067
    %4163 = vmatpush1.bf16.msra.mxu0 %v4066
    %4164 = vmatprep.subr.bf16.mxu0 %v4069
    %4165 = vmatpush1.bf16.msra.mxu0 %v4068
    %4166 = vmatprep.subr.bf16.mxu0 %v4071
    %4167 = vmatpush1.bf16.msra.mxu0 %v4070
    %4168 = vmatprep.subr.bf16.mxu0 %v4073
    %4169 = vmatpush1.bf16.msra.mxu0 %v4072
    %4170 = vmatprep.subr.bf16.mxu0 %v4075
    %4171 = vmatpush1.bf16.msra.mxu0 %v4074
    %4172 = vmatprep.subr.bf16.mxu0 %v4077
    %4173 = vmatpush1.bf16.msra.mxu0 %v4076
    %4174 = vmatprep.subr.bf16.mxu0 %v4079
    %4175 = vmatpush1.bf16.msra.mxu0 %v4078
    %4176 = vmatprep.subr.bf16.mxu0 %v4081
    %4177 = vmatpush1.bf16.msra.mxu0 %v4080
    %4178 = vmatprep.subr.bf16.mxu0 %v4083
    %4179 = vmatpush1.bf16.msra.mxu0 %v4082
    %4180 = vmatprep.subr.bf16.mxu0 %v4085
    %4181 = vmatpush1.bf16.msra.mxu0 %v4084
    %4182 = vmatprep.mubr.bf16.mxu0 %v3848
    %4183 = vmatmul.mubr.bf16.gmra.mrb[0].mxu0 %v3847
    %v4184 = vpop.f32.mrb[0].mxu0
    %v4185 = vadd.f32 %v3903, %v4184
    %v4186 = vpop.f32.mrb[0].mxu0
    %v4187 = vadd.f32 %v3907, %v4186
    %v4188 = vpop.f32.mrb[0].mxu0
    %v4189 = vpop.f32.mrb[0].mxu0
    %4190 = vdwg.mxu0
    %4191 = vmatprep.subr.bf16.mxu0 %v4087
    %4192 = vmatpush1.bf16.msra.mxu0 %v4086
    %4193 = vmatprep.subr.bf16.mxu0 %v4089
    %4194 = vmatpush1.bf16.msra.mxu0 %v4088
    %4195 = vmatprep.subr.bf16.mxu0 %v4091
    %4196 = vmatpush1.bf16.msra.mxu0 %v4090
    %4197 = vmatprep.subr.bf16.mxu0 %v4093
    %4198 = vmatpush1.bf16.msra.mxu0 %v4092
    %4199 = vmatprep.subr.bf16.mxu0 %v4095
    %4200 = vmatpush1.bf16.msra.mxu0 %v4094
    %4201 = vmatprep.subr.bf16.mxu0 %v4097
    %4202 = vmatpush1.bf16.msra.mxu0 %v4096
    %4203 = vmatprep.subr.bf16.mxu0 %v4099
    %4204 = vmatpush1.bf16.msra.mxu0 %v4098
    %4205 = vmatprep.subr.bf16.mxu0 %v4101
    %4206 = vmatpush1.bf16.msra.mxu0 %v4100
    %4207 = vmatprep.subr.bf16.mxu0 0
    %4208 = vmatpush1.bf16.msra.mxu0 0
    %4209 = vmatprep.subr.bf16.mxu0 0
    %4210 = vmatpush1.bf16.msra.mxu0 0
    %4211 = vmatprep.subr.bf16.mxu0 0
    %4212 = vmatpush1.bf16.msra.mxu0 0
    %4213 = vmatprep.subr.bf16.mxu0 0
    %4214 = vmatpush1.bf16.msra.mxu0 0
    %4215 = vmatprep.subr.bf16.mxu0 0
    %4216 = vmatpush1.bf16.msra.mxu0 0
    %4217 = vmatprep.subr.bf16.mxu0 0
    %4218 = vmatpush1.bf16.msra.mxu0 0
    %4219 = vmatprep.subr.bf16.mxu0 0
    %4220 = vmatpush1.bf16.msra.mxu0 0
    %4221 = vmatprep.subr.bf16.mxu0 0
    %4222 = vmatpush1.bf16.msra.mxu0 0
    %4223 = vmatprep.mubr.bf16.mxu0 0
    %4224 = vmatmul.mubr.bf16.gmra.mrb[0].mxu0 %v3849
    %v4225 = vpop.f32.mrb[0].mxu0
    %v4226 = vadd.f32 %v4185, %v4225
    %v4227 = vpop.f32.mrb[0].mxu0
    %v4228 = vadd.f32 %v4187, %v4227
    %v4229 = vpop.f32.mrb[0].mxu0
    %v4230 = vpop.f32.mrb[0].mxu0
    %4231 = vdwg.mxu0
    %v4232 = vlaneseq
    %v4233 = vand.u32 %v4232, 127
    %v4234 = vadd.s32 %v4233, 128
    %vm4235 = vcmp.lt.s32.totalorder %v4233, 206
    %vm4236 = vcmp.lt.s32.totalorder %v4234, 206
    %v4237 = vsel %vm4235, %v4226, -1e+30
    %v4238 = vsel %vm4236, %v4228, -1e+30
    %v4239 = vmax.f32 %v4237, %v4238
    %4240 = vmax.xlane.f32.xlu0 %v4239
    %v4241 = vpop.xlane.xlu0 %4240
    %v4242 = vsub.f32 %v4237, %v4241
    %v4243 = vsub.f32 %v4238, %v4241
    %v4244 = vmul.f32 %v4242, 1.442695
    %v4245 = vpow.pop %v4244
    %v4246 = vmul.f32 %v4243, 1.442695
    %v4247 = vpow.pop %v4246
    %v4248 = vadd.f32 %v4245, %v4247
    %4249 = vadd.xlane.f32.xlu0 %v4248
    %v4250 = vpop.xlane.xlu0 %4249
    %v4251 = vrcp.pop %v4250
    %v4252 = vmul.f32 %v4245, %v4251
    %v4253 = vmul.f32 %v4247, %v4251
    %4254 = vst [vmem:[#allocation20] sm:$0xff] %v4252
    %4255 = vst [vmem:[#allocation20 + $0x8] sm:$0xff] %v4253
    // Predicated region
    $region90: #{tpu_custom_call.1} parent=1 // pred_check
      _
    $region91: #{tpu_custom_call.1} parent=1 // pred_check_branch
      %4257 = sbr.rel (0) target = $region93
    $region92: #{tpu_custom_call.1} parent=1 // pred_region
      %s4259 = ssub.s32 256, 256
      %4260 = vsyncadd [#allocation4], %s4259
      %s4262 = sshll.u32 [#allocation20], 4
      %s4263 = int_to_ptr.vmem [resolvable:$true] %s4262
      %4265 = dma.vmem_to_hbm [thread:$0]  %s4263, 256, %s11, [#allocation4]
    $region93: #{tpu_custom_call.1} parent=1 // pred_fallthru
      _
    // Predicated region
    $region94: #{tpu_custom_call.1} parent=1 // pred_check
      _
    $region95: #{tpu_custom_call.1} parent=1 // pred_check_branch
      %4267 = sbr.rel (0) target = $region97
    $region96: #{tpu_custom_call.1} parent=1 // pred_region
      %4268 = dma.done [#allocation4], 256
    $region97: #{tpu_custom_call.1} parent=1 // pred_fallthru
      _
    %4269 = vsyncpa [#allocation3], 1
    %4270 = vsyncpa [#allocation6], 1
    %4271 = vsyncpa [#allocation9], 1
    %4272 = vsyncpa [#allocation12], 1
    %4273 = vsyncpa [#allocation15], 1
    %4274 = vsyncpa [#allocation18], 1
    %4275 = vsyncpa [#allocation4], 1

</llo_original>
